<compile_context>
chip_gen: v7x
topology: tpu7x:2x2x1
jax: 0.10.0
libtpu: 0.0.40
codegen_flags: <defaults>
</compile_context>

<pallas_src>
import jax
import jax.numpy as jnp
from jax.experimental import pallas as pl
from jax.experimental.pallas import tpu as pltpu  # noqa: F401  (not required; kept for parity)

# ----------------------------- configuration --------------------------------
B = 2            # batch (per encoder input)
TWOB = 2 * B     # sentences_s and sentences_t stacked into one batch
S = 8            # sequence length
H = 32           # hidden size (bert-base would be 768)
NH = 2           # attention heads
HD = H // NH     # head dim
FF = 64          # intermediate size
LAYERS = 2       # transformer layers
VOCAB = 100      # vocab size
E = 4            # number of event token indices per example
Y_NUM = 3        # number of output classes
LN_EPS = 1e-12
R = TWOB * S     # total rows of the flattened [2B*S, H] activation
VW = 3 * H       # row width of the packed per-layer vector block


# ------------------------------ fused kernel ---------------------------------
def _forward_kernel(ids_ref, fblk_ref, emb_tab_ref, w_in_ref, w_out_ref,
                    lvecs_ref, fc_ref, o_ref):
    """Entire BertCoreflModel forward for the stacked 2B-batch in one call.

    Operand layout (all static slices):
      ids_ref     (R, 1)  int32   flattened token ids
      fblk_ref    (R+2B, R) f32   rows 0..R-1: block-diag+padding attn bias
                                  rows R..R+2B-1: event gather/mask/sum matrix
      emb_tab_ref (VOCAB+R+2, H)  word emb | pos+type emb (tiled) | ln_g | ln_b
      w_in_ref    (L, H, 4H+FF)   [Wq|Wk|Wv | Wo | W1] per layer
      w_out_ref   (L, FF, H)      W2 per layer
      lvecs_ref   (L, 8, 3H)      [bqkv, bo, ln1_g, ln1_b, b1, b2, ln2_g, ln2_b]
      fc_ref      (2H+1, Y_NUM)   fc weight rows 0..2H-1, fc bias row 2H
    """

    def layernorm(y, g, b):
        mu = jnp.mean(y, axis=-1, keepdims=True)
        var = jnp.mean((y - mu) ** 2, axis=-1, keepdims=True)
        return (y - mu) * jax.lax.rsqrt(var + LN_EPS) * g + b

    # --- embeddings: token lookup as a one-hot matmul on the MXU -------------
    ids = ids_ref[...]                                          # (R, 1) int32
    vocab_pos = jax.lax.broadcasted_iota(jnp.int32, (R, VOCAB), 1)
    onehot = (vocab_pos == ids).astype(jnp.float32)             # (R, VOCAB)
    emb = jnp.dot(onehot, emb_tab_ref[0:VOCAB, :],
                  preferred_element_type=jnp.float32)
    emb = emb + emb_tab_ref[VOCAB:VOCAB + R, :]                 # pos + type emb
    x = layernorm(emb,
                  emb_tab_ref[VOCAB + R:VOCAB + R + 1, :],
                  emb_tab_ref[VOCAB + R + 1:VOCAB + R + 2, :])  # (R, H)

    # full (R,R) block-diagonal + key-padding additive bias (hoisted, precomputed)
    bias = fblk_ref[0:R, :]                                     # (R, R)
    scale = 1.0 / (float(HD) ** 0.5)

    # --- transformer layers (static unroll, all weights VMEM-resident) -------
    for l in range(LAYERS):
        w_l = w_in_ref[l]                                       # (H, 4H+FF)
        lv = lvecs_ref[l]                                       # (8, 3H)

        # fused QKV projection for the whole 2B batch
        qkv = jnp.dot(x, w_l[:, 0:3 * H],
                      preferred_element_type=jnp.float32) + lv[0:1, :]   # (R, 3H)

        # batched attention: per head, all R query rows at once
        ctx_parts = []
        for h in range(NH):                                     # NH = 2, static
            c0 = h * HD
            qh = qkv[:, c0:c0 + HD]                             # (R, HD)
            kh = qkv[:, H + c0:H + c0 + HD]
            vh = qkv[:, 2 * H + c0:2 * H + c0 + HD]
            s = jax.lax.dot_general(
                qh, kh, (((1,), (1,)), ((), ())),
                preferred_element_type=jnp.float32) * scale + bias       # (R, R)
            s = s - jnp.max(s, axis=-1, keepdims=True)
            p = jnp.exp(s)
            p = p * pl.reciprocal(jnp.sum(p, axis=-1, keepdims=True),
                                  approx=True)
            ctx_parts.append(jnp.dot(p, vh,
                                     preferred_element_type=jnp.float32))
        ctx = jnp.concatenate(ctx_parts, axis=-1)               # (R, H)

        attn = jnp.dot(ctx, w_l[:, 3 * H:4 * H],
                       preferred_element_type=jnp.float32) + lv[1:2, 0:H]
        x = layernorm(attn + x, lv[2:3, 0:H], lv[3:4, 0:H])

        # BERT GELU (tanh approximation; lowers cleanly to the EUP).
        inter = jax.nn.gelu(
            jnp.dot(x, w_l[:, 4 * H:4 * H + FF],
                    preferred_element_type=jnp.float32) + lv[4:5, 0:FF],
            approximate=True)
        ffn = jnp.dot(inter, w_out_ref[l],
                      preferred_element_type=jnp.float32) + lv[5:6, 0:H]
        x = layernorm(ffn + x, lv[6:7, 0:H], lv[7:8, 0:H])

    # --- event gather/mask/sum (one matmul) + final FC ------------------------
    pool_w = fblk_ref[R:R + TWOB, :]                            # (2B, R)
    pooled = jnp.dot(pool_w, x, preferred_element_type=jnp.float32)  # (2B, H)
    pcat = jnp.concatenate([pooled[0:B, :], pooled[B:TWOB, :]], axis=-1)  # (B, 2H)

    # TODO(synk): nn.Dropout(p=0.8) is identity at inference; training-mode
    # RNG dropout is not implemented here.
    logits = (jnp.dot(pcat, fc_ref[0:2 * H, :],
                      preferred_element_type=jnp.float32)
              + fc_ref[2 * H:2 * H + 1, :])
    o_ref[...] = logits


# ------------------------------ model wrapper ---------------------------------
def bert_corefl_forward(packed, sentences_s, mask_s, sentences_t, mask_t,
                        event1, event1_mask, event2, event2_mask):
    # flattened token ids over the stacked 2B batch
    ids = jnp.concatenate([sentences_s, sentences_t], axis=0)
    ids = ids.astype(jnp.int32).reshape(R, 1)

    # (R,R) attention bias: -10000 for cross-sequence keys or padded keys
    mask = jnp.concatenate([mask_s, mask_t], axis=0).astype(jnp.float32)  # (2B, S)
    seq_id = jnp.arange(R, dtype=jnp.int32) // S
    same_seq = (seq_id[:, None] == seq_id[None, :]).astype(jnp.float32)   # (R, R)
    key_valid = mask.reshape(1, R)                                        # (1, R)
    attn_bias = (1.0 - same_seq * key_valid) * (-10000.0)                 # (R, R)

    # (2B,R) event gather/mask/sum weight matrix
    idx = jnp.concatenate([event1, event2], axis=0).astype(jnp.int32)     # (2B, E)
    msk = jnp.concatenate([event1_mask, event2_mask],
                          axis=0).astype(jnp.float32)                     # (2B, E)
    tgt = idx + (jnp.arange(TWOB, dtype=jnp.int32) * S)[:, None]          # (2B, E)
    col = jnp.arange(R, dtype=jnp.int32)[None, None, :]                   # (1, 1, R)
    pool_w = jnp.sum((col == tgt[:, :, None]).astype(jnp.float32)
                     * msk[:, :, None], axis=1)                           # (2B, R)

    fblk = jnp.concatenate([attn_bias, pool_w], axis=0)                   # (R+2B, R)

    return pl.pallas_call(
        _forward_kernel,
        out_shape=jax.ShapeDtypeStruct((B, Y_NUM), jnp.float32),
    )(ids, fblk,
      packed["emb_tab"], packed["w_in"], packed["w_out"],
      packed["lvecs"], packed["fc"])


# ------------------------------ parameter init --------------------------------
def init_params(key):
    def normal(k, shape, std=0.02):
        return std * jax.random.normal(k, shape, jnp.float32)

    keys = jax.random.split(key, 4 + LAYERS)
    params = {
        "word_emb": normal(keys[0], (VOCAB, H)),
        "pos_emb": normal(keys[1], (S, H)),
        "type_emb": normal(keys[2], (2, H)),
        "emb_ln_g": jnp.ones((H,), jnp.float32),
        "emb_ln_b": jnp.zeros((H,), jnp.float32),
        "fc_w": normal(keys[3], (2 * H, Y_NUM)),
        "fc_b": jnp.zeros((Y_NUM,), jnp.float32),
        "layers": [],
    }
    for li in range(LAYERS):
        lk = jax.random.split(keys[4 + li], 6)
        params["layers"].append({
            "wq": normal(lk[0], (H, H)), "bq": jnp.zeros((H,), jnp.float32),
            "wk": normal(lk[1], (H, H)), "bk": jnp.zeros((H,), jnp.float32),
            "wv": normal(lk[2], (H, H)), "bv": jnp.zeros((H,), jnp.float32),
            "wo": normal(lk[3], (H, H)), "bo": jnp.zeros((H,), jnp.float32),
            "ln1_g": jnp.ones((H,), jnp.float32),
            "ln1_b": jnp.zeros((H,), jnp.float32),
            "w1": normal(lk[4], (H, FF)), "b1": jnp.zeros((FF,), jnp.float32),
            "w2": normal(lk[5], (FF, H)), "b2": jnp.zeros((H,), jnp.float32),
            "ln2_g": jnp.ones((H,), jnp.float32),
            "ln2_b": jnp.zeros((H,), jnp.float32),
        })
    return params


def pack_params(p):
    """One-time re-layout: fuse QKV, pack everything into 5 weight operands."""
    ls = p["layers"]

    def pad_row(v, width):
        v = v.reshape(1, -1)
        return jnp.pad(v, ((0, 0), (0, width - v.shape[1])))

    # embedding table block: word emb | tiled pos+type emb | emb LN gamma/beta
    pos_type = jnp.tile(p["pos_emb"] + p["type_emb"][0][None, :], (TWOB, 1))  # (R, H)
    emb_tab = jnp.concatenate(
        [p["word_emb"], pos_type,
         p["emb_ln_g"].reshape(1, H), p["emb_ln_b"].reshape(1, H)], axis=0)   # (VOCAB+R+2, H)

    # per-layer input-side matrices [Wq|Wk|Wv | Wo | W1]  -> (L, H, 4H+FF)
    w_in = jnp.stack([
        jnp.concatenate([lp["wq"], lp["wk"], lp["wv"], lp["wo"], lp["w1"]],
                        axis=1) for lp in ls])
    # per-layer output-side matrix W2 -> (L, FF, H)
    w_out = jnp.stack([lp["w2"] for lp in ls])

    # per-layer small vectors, padded to width 3H and stacked -> (L, 8, 3H)
    lvecs = jnp.stack([
        jnp.concatenate([
            pad_row(jnp.concatenate([lp["bq"], lp["bk"], lp["bv"]]), VW),
            pad_row(lp["bo"], VW), pad_row(lp["ln1_g"], VW),
            pad_row(lp["ln1_b"], VW), pad_row(lp["b1"], VW),
            pad_row(lp["b2"], VW), pad_row(lp["ln2_g"], VW),
            pad_row(lp["ln2_b"], VW)], axis=0)
        for lp in ls])

    # FC block: weight rows then bias row -> (2H+1, Y_NUM)
    fc = jnp.concatenate([p["fc_w"], p["fc_b"].reshape(1, Y_NUM)], axis=0)

    return {"emb_tab": emb_tab, "w_in": w_in, "w_out": w_out,
            "lvecs": lvecs, "fc": fc}


# ----------------------------------- main -------------------------------------
if __name__ == "__main__":
    key = jax.random.PRNGKey(0)
    kp, k1, k2, k3, k4 = jax.random.split(key, 5)

    packed = pack_params(init_params(kp))

    sentences_s = jax.random.randint(k1, (B, S), 0, VOCAB, jnp.int32)
    sentences_t = jax.random.randint(k2, (B, S), 0, VOCAB, jnp.int32)
    mask_s = jnp.ones((B, S), jnp.int32).at[1, S - 2:].set(0)
    mask_t = jnp.ones((B, S), jnp.int32).at[0, S - 1:].set(0)

    event1 = jax.random.randint(k3, (B, E), 0, S, jnp.int32)
    event2 = jax.random.randint(k4, (B, E), 0, S, jnp.int32)
    event1_mask = jnp.ones((B, E), jnp.int32).at[0, E - 1].set(0)
    event2_mask = jnp.ones((B, E), jnp.int32).at[1, E - 2:].set(0)

    fwd = jax.jit(bert_corefl_forward)
    out = fwd(packed, sentences_s, mask_s, sentences_t, mask_t,
              event1, event1_mask, event2, event2_mask)
    out = jax.block_until_ready(out)

    assert out.shape == (B, Y_NUM), out.shape
    assert bool(jnp.all(jnp.isfinite(out)))
    print("KERNEL_OK")
</pallas_src>

<mosaic_0001>
module attributes {stable_mosaic.version = 11 : i64} {
  func.func @_forward_kernel(%arg0: memref<32x1xi32, #tpu.memory_space<vmem>>, %arg1: memref<36x32xf32, #tpu.memory_space<vmem>>, %arg2: memref<134x32xf32, #tpu.memory_space<vmem>>, %arg3: memref<2x32x192xf32, #tpu.memory_space<vmem>>, %arg4: memref<2x64x32xf32, #tpu.memory_space<vmem>>, %arg5: memref<2x8x96xf32, #tpu.memory_space<vmem>>, %arg6: memref<65x3xf32, #tpu.memory_space<vmem>>, %arg7: memref<2x3xf32, #tpu.memory_space<vmem>>) attributes {dimension_semantics = [], scalar_prefetch = 0 : i64, scratch_operands = 0 : i64, tpu.core_type = #tpu.core_type<tc>} {
    %c0 = arith.constant 0 : index
    %c0_0 = arith.constant 0 : index
    %0 = vector.load %arg0[%c0, %c0_0] : memref<32x1xi32, #tpu.memory_space<vmem>>, vector<32x1xi32>
    %1 = tpu.iota {dimensions = array<i32: 1>} : vector<32x100xi32>
    %2 = vector.broadcast %0 : vector<32x1xi32> to vector<32x100xi32>
    %3 = arith.cmpi eq, %1, %2 : vector<32x100xi32>
    %4 = arith.extui %3 : vector<32x100xi1> to vector<32x100xi32>
    %5 = arith.sitofp %4 : vector<32x100xi32> to vector<32x100xf32>
    %c0_1 = arith.constant 0 : index
    %c0_2 = arith.constant 0 : index
    %6 = vector.load %arg2[%c0_1, %c0_2] : memref<134x32xf32, #tpu.memory_space<vmem>>, vector<100x32xf32>
    %cst = arith.constant dense<0.000000e+00> : vector<32x32xf32>
    %7 = tpu.matmul %5, %6, %cst {dimension_numbers = #tpu.dot_dimension_numbers<[1], [0], [0], [1], [0, 0, 1, 1], [], []>} : vector<32x100xf32>, vector<100x32xf32>, vector<32x32xf32> -> vector<32x32xf32>
    %c100 = arith.constant 100 : index
    %c0_3 = arith.constant 0 : index
    %8 = vector.load %arg2[%c100, %c0_3] : memref<134x32xf32, #tpu.memory_space<vmem>>, vector<32x32xf32>
    %9 = arith.addf %7, %8 : vector<32x32xf32>
    %c132 = arith.constant 132 : index
    %c0_4 = arith.constant 0 : index
    %10 = vector.load %arg2[%c132, %c0_4] : memref<134x32xf32, #tpu.memory_space<vmem>>, vector<1x32xf32>
    %c133 = arith.constant 133 : index
    %c0_5 = arith.constant 0 : index
    %11 = vector.load %arg2[%c133, %c0_5] : memref<134x32xf32, #tpu.memory_space<vmem>>, vector<1x32xf32>
    %cst_6 = arith.constant dense<0.000000e+00> : vector<32xf32>
    %12 = vector.multi_reduction <add>, %9, %cst_6 [1] : vector<32x32xf32> to vector<32xf32>
    %13 = vector.shape_cast %12 : vector<32xf32> to vector<32x1xf32>
    %cst_7 = arith.constant 3.200000e+01 : f32
    %14 = vector.broadcast %cst_7 : f32 to vector<32x1xf32>
    %15 = arith.divf %13, %14 : vector<32x1xf32>
    %16 = vector.broadcast %15 : vector<32x1xf32> to vector<32x32xf32>
    %17 = arith.subf %9, %16 : vector<32x32xf32>
    %18 = arith.mulf %17, %17 : vector<32x32xf32>
    %cst_8 = arith.constant dense<0.000000e+00> : vector<32xf32>
    %19 = vector.multi_reduction <add>, %18, %cst_8 [1] : vector<32x32xf32> to vector<32xf32>
    %20 = vector.shape_cast %19 : vector<32xf32> to vector<32x1xf32>
    %cst_9 = arith.constant 3.200000e+01 : f32
    %21 = vector.broadcast %cst_9 : f32 to vector<32x1xf32>
    %22 = arith.divf %20, %21 : vector<32x1xf32>
    %23 = vector.broadcast %15 : vector<32x1xf32> to vector<32x32xf32>
    %24 = arith.subf %9, %23 : vector<32x32xf32>
    %cst_10 = arith.constant 9.99999996E-13 : f32
    %25 = vector.broadcast %cst_10 : f32 to vector<32x1xf32>
    %26 = arith.addf %22, %25 : vector<32x1xf32>
    %27 = math.rsqrt %26 : vector<32x1xf32>
    %28 = vector.broadcast %27 : vector<32x1xf32> to vector<32x32xf32>
    %29 = arith.mulf %24, %28 : vector<32x32xf32>
    %30 = vector.broadcast %10 : vector<1x32xf32> to vector<32x32xf32>
    %31 = arith.mulf %29, %30 : vector<32x32xf32>
    %32 = vector.broadcast %11 : vector<1x32xf32> to vector<32x32xf32>
    %33 = arith.addf %31, %32 : vector<32x32xf32>
    %c0_11 = arith.constant 0 : index
    %c0_12 = arith.constant 0 : index
    %34 = vector.load %arg1[%c0_11, %c0_12] : memref<36x32xf32, #tpu.memory_space<vmem>>, vector<32x32xf32>
    %c0_13 = arith.constant 0 : index
    %c0_14 = arith.constant 0 : index
    %c0_15 = arith.constant 0 : index
    %35 = vector.load %arg3[%c0_13, %c0_14, %c0_15] : memref<2x32x192xf32, #tpu.memory_space<vmem>>, vector<1x32x192xf32>
    %36 = vector.shape_cast %35 : vector<1x32x192xf32> to vector<32x192xf32>
    %c0_16 = arith.constant 0 : index
    %c0_17 = arith.constant 0 : index
    %c0_18 = arith.constant 0 : index
    %37 = vector.load %arg5[%c0_16, %c0_17, %c0_18] : memref<2x8x96xf32, #tpu.memory_space<vmem>>, vector<1x8x96xf32>
    %38 = vector.shape_cast %37 : vector<1x8x96xf32> to vector<8x96xf32>
    %39 = vector.extract_strided_slice %36 {offsets = [0, 0], sizes = [32, 96], strides = [1, 1]} : vector<32x192xf32> to vector<32x96xf32>
    %cst_19 = arith.constant dense<0.000000e+00> : vector<32x96xf32>
    %40 = tpu.matmul %33, %39, %cst_19 {dimension_numbers = #tpu.dot_dimension_numbers<[1], [0], [0], [1], [0, 0, 1, 1], [], []>} : vector<32x32xf32>, vector<32x96xf32>, vector<32x96xf32> -> vector<32x96xf32>
    %41 = vector.extract_strided_slice %38 {offsets = [0, 0], sizes = [1, 96], strides = [1, 1]} : vector<8x96xf32> to vector<1x96xf32>
    %42 = vector.broadcast %41 : vector<1x96xf32> to vector<32x96xf32>
    %43 = arith.addf %40, %42 : vector<32x96xf32>
    %44 = vector.extract_strided_slice %43 {offsets = [0, 0], sizes = [32, 16], strides = [1, 1]} : vector<32x96xf32> to vector<32x16xf32>
    %45 = vector.extract_strided_slice %43 {offsets = [0, 32], sizes = [32, 16], strides = [1, 1]} : vector<32x96xf32> to vector<32x16xf32>
    %46 = vector.extract_strided_slice %43 {offsets = [0, 64], sizes = [32, 16], strides = [1, 1]} : vector<32x96xf32> to vector<32x16xf32>
    %cst_20 = arith.constant dense<0.000000e+00> : vector<32x32xf32>
    %47 = tpu.matmul %44, %45, %cst_20 {dimension_numbers = #tpu.dot_dimension_numbers<[1], [1], [0], [0], [0, 0, 1, 0], [], []>} : vector<32x16xf32>, vector<32x16xf32>, vector<32x32xf32> -> vector<32x32xf32>
    %cst_21 = arith.constant 2.500000e-01 : f32
    %48 = vector.broadcast %cst_21 : f32 to vector<32x32xf32>
    %49 = arith.mulf %47, %48 : vector<32x32xf32>
    %50 = arith.addf %49, %34 : vector<32x32xf32>
    %cst_22 = arith.constant dense<0xFF800000> : vector<32xf32>
    %51 = vector.multi_reduction <maximumf>, %50, %cst_22 [1] : vector<32x32xf32> to vector<32xf32>
    %52 = vector.shape_cast %51 : vector<32xf32> to vector<32x1xf32>
    %53 = vector.broadcast %52 : vector<32x1xf32> to vector<32x32xf32>
    %54 = arith.subf %50, %53 : vector<32x32xf32>
    %55 = math.exp %54 : vector<32x32xf32>
    %cst_23 = arith.constant dense<0.000000e+00> : vector<32xf32>
    %56 = vector.multi_reduction <add>, %55, %cst_23 [1] : vector<32x32xf32> to vector<32xf32>
    %57 = vector.shape_cast %56 : vector<32xf32> to vector<32x1xf32>
    %58 = tpu.reciprocal %57 {approx = true} : vector<32x1xf32> -> vector<32x1xf32>
    %59 = vector.broadcast %58 : vector<32x1xf32> to vector<32x32xf32>
    %60 = arith.mulf %55, %59 : vector<32x32xf32>
    %cst_24 = arith.constant dense<0.000000e+00> : vector<32x16xf32>
    %61 = tpu.matmul %60, %46, %cst_24 {dimension_numbers = #tpu.dot_dimension_numbers<[1], [0], [0], [1], [0, 0, 1, 1], [], []>} : vector<32x32xf32>, vector<32x16xf32>, vector<32x16xf32> -> vector<32x16xf32>
    %62 = vector.extract_strided_slice %43 {offsets = [0, 16], sizes = [32, 16], strides = [1, 1]} : vector<32x96xf32> to vector<32x16xf32>
    %63 = vector.extract_strided_slice %43 {offsets = [0, 48], sizes = [32, 16], strides = [1, 1]} : vector<32x96xf32> to vector<32x16xf32>
    %64 = vector.extract_strided_slice %43 {offsets = [0, 80], sizes = [32, 16], strides = [1, 1]} : vector<32x96xf32> to vector<32x16xf32>
    %cst_25 = arith.constant dense<0.000000e+00> : vector<32x32xf32>
    %65 = tpu.matmul %62, %63, %cst_25 {dimension_numbers = #tpu.dot_dimension_numbers<[1], [1], [0], [0], [0, 0, 1, 0], [], []>} : vector<32x16xf32>, vector<32x16xf32>, vector<32x32xf32> -> vector<32x32xf32>
    %cst_26 = arith.constant 2.500000e-01 : f32
    %66 = vector.broadcast %cst_26 : f32 to vector<32x32xf32>
    %67 = arith.mulf %65, %66 : vector<32x32xf32>
    %68 = arith.addf %67, %34 : vector<32x32xf32>
    %cst_27 = arith.constant dense<0xFF800000> : vector<32xf32>
    %69 = vector.multi_reduction <maximumf>, %68, %cst_27 [1] : vector<32x32xf32> to vector<32xf32>
    %70 = vector.shape_cast %69 : vector<32xf32> to vector<32x1xf32>
    %71 = vector.broadcast %70 : vector<32x1xf32> to vector<32x32xf32>
    %72 = arith.subf %68, %71 : vector<32x32xf32>
    %73 = math.exp %72 : vector<32x32xf32>
    %cst_28 = arith.constant dense<0.000000e+00> : vector<32xf32>
    %74 = vector.multi_reduction <add>, %73, %cst_28 [1] : vector<32x32xf32> to vector<32xf32>
    %75 = vector.shape_cast %74 : vector<32xf32> to vector<32x1xf32>
    %76 = tpu.reciprocal %75 {approx = true} : vector<32x1xf32> -> vector<32x1xf32>
    %77 = vector.broadcast %76 : vector<32x1xf32> to vector<32x32xf32>
    %78 = arith.mulf %73, %77 : vector<32x32xf32>
    %cst_29 = arith.constant dense<0.000000e+00> : vector<32x16xf32>
    %79 = tpu.matmul %78, %64, %cst_29 {dimension_numbers = #tpu.dot_dimension_numbers<[1], [0], [0], [1], [0, 0, 1, 1], [], []>} : vector<32x32xf32>, vector<32x16xf32>, vector<32x16xf32> -> vector<32x16xf32>
    %80 = tpu.concatenate %61, %79 in 1 : vector<32x16xf32>, vector<32x16xf32> -> vector<32x32xf32>
    %81 = vector.extract_strided_slice %36 {offsets = [0, 96], sizes = [32, 32], strides = [1, 1]} : vector<32x192xf32> to vector<32x32xf32>
    %cst_30 = arith.constant dense<0.000000e+00> : vector<32x32xf32>
    %82 = tpu.matmul %80, %81, %cst_30 {dimension_numbers = #tpu.dot_dimension_numbers<[1], [0], [0], [1], [0, 0, 1, 1], [], []>} : vector<32x32xf32>, vector<32x32xf32>, vector<32x32xf32> -> vector<32x32xf32>
    %83 = vector.extract_strided_slice %38 {offsets = [1, 0], sizes = [1, 32], strides = [1, 1]} : vector<8x96xf32> to vector<1x32xf32>
    %84 = vector.broadcast %83 : vector<1x32xf32> to vector<32x32xf32>
    %85 = arith.addf %82, %84 : vector<32x32xf32>
    %86 = arith.addf %85, %33 : vector<32x32xf32>
    %87 = vector.extract_strided_slice %38 {offsets = [2, 0], sizes = [1, 32], strides = [1, 1]} : vector<8x96xf32> to vector<1x32xf32>
    %88 = vector.extract_strided_slice %38 {offsets = [3, 0], sizes = [1, 32], strides = [1, 1]} : vector<8x96xf32> to vector<1x32xf32>
    %cst_31 = arith.constant dense<0.000000e+00> : vector<32xf32>
    %89 = vector.multi_reduction <add>, %86, %cst_31 [1] : vector<32x32xf32> to vector<32xf32>
    %90 = vector.shape_cast %89 : vector<32xf32> to vector<32x1xf32>
    %cst_32 = arith.constant 3.200000e+01 : f32
    %91 = vector.broadcast %cst_32 : f32 to vector<32x1xf32>
    %92 = arith.divf %90, %91 : vector<32x1xf32>
    %93 = vector.broadcast %92 : vector<32x1xf32> to vector<32x32xf32>
    %94 = arith.subf %86, %93 : vector<32x32xf32>
    %95 = arith.mulf %94, %94 : vector<32x32xf32>
    %cst_33 = arith.constant dense<0.000000e+00> : vector<32xf32>
    %96 = vector.multi_reduction <add>, %95, %cst_33 [1] : vector<32x32xf32> to vector<32xf32>
    %97 = vector.shape_cast %96 : vector<32xf32> to vector<32x1xf32>
    %cst_34 = arith.constant 3.200000e+01 : f32
    %98 = vector.broadcast %cst_34 : f32 to vector<32x1xf32>
    %99 = arith.divf %97, %98 : vector<32x1xf32>
    %100 = vector.broadcast %92 : vector<32x1xf32> to vector<32x32xf32>
    %101 = arith.subf %86, %100 : vector<32x32xf32>
    %cst_35 = arith.constant 9.99999996E-13 : f32
    %102 = vector.broadcast %cst_35 : f32 to vector<32x1xf32>
    %103 = arith.addf %99, %102 : vector<32x1xf32>
    %104 = math.rsqrt %103 : vector<32x1xf32>
    %105 = vector.broadcast %104 : vector<32x1xf32> to vector<32x32xf32>
    %106 = arith.mulf %101, %105 : vector<32x32xf32>
    %107 = vector.broadcast %87 : vector<1x32xf32> to vector<32x32xf32>
    %108 = arith.mulf %106, %107 : vector<32x32xf32>
    %109 = vector.broadcast %88 : vector<1x32xf32> to vector<32x32xf32>
    %110 = arith.addf %108, %109 : vector<32x32xf32>
    %111 = vector.extract_strided_slice %36 {offsets = [0, 128], sizes = [32, 64], strides = [1, 1]} : vector<32x192xf32> to vector<32x64xf32>
    %cst_36 = arith.constant dense<0.000000e+00> : vector<32x64xf32>
    %112 = tpu.matmul %110, %111, %cst_36 {dimension_numbers = #tpu.dot_dimension_numbers<[1], [0], [0], [1], [0, 0, 1, 1], [], []>} : vector<32x32xf32>, vector<32x64xf32>, vector<32x64xf32> -> vector<32x64xf32>
    %113 = vector.extract_strided_slice %38 {offsets = [4, 0], sizes = [1, 64], strides = [1, 1]} : vector<8x96xf32> to vector<1x64xf32>
    %114 = vector.broadcast %113 : vector<1x64xf32> to vector<32x64xf32>
    %115 = arith.addf %112, %114 : vector<32x64xf32>
    %116 = arith.mulf %115, %115 : vector<32x64xf32>
    %117 = arith.mulf %115, %116 : vector<32x64xf32>
    %cst_37 = arith.constant 4.471500e-02 : f32
    %118 = vector.broadcast %cst_37 : f32 to vector<32x64xf32>
    %119 = arith.mulf %118, %117 : vector<32x64xf32>
    %120 = arith.addf %115, %119 : vector<32x64xf32>
    %cst_38 = arith.constant 0.797884583 : f32
    %121 = vector.broadcast %cst_38 : f32 to vector<32x64xf32>
    %122 = arith.mulf %121, %120 : vector<32x64xf32>
    %123 = math.tanh %122 : vector<32x64xf32>
    %cst_39 = arith.constant 1.000000e+00 : f32
    %124 = vector.broadcast %cst_39 : f32 to vector<32x64xf32>
    %125 = arith.addf %124, %123 : vector<32x64xf32>
    %cst_40 = arith.constant 5.000000e-01 : f32
    %126 = vector.broadcast %cst_40 : f32 to vector<32x64xf32>
    %127 = arith.mulf %126, %125 : vector<32x64xf32>
    %128 = arith.mulf %115, %127 : vector<32x64xf32>
    %c0_41 = arith.constant 0 : index
    %c0_42 = arith.constant 0 : index
    %c0_43 = arith.constant 0 : index
    %129 = vector.load %arg4[%c0_41, %c0_42, %c0_43] : memref<2x64x32xf32, #tpu.memory_space<vmem>>, vector<1x64x32xf32>
    %130 = vector.shape_cast %129 : vector<1x64x32xf32> to vector<64x32xf32>
    %cst_44 = arith.constant dense<0.000000e+00> : vector<32x32xf32>
    %131 = tpu.matmul %128, %130, %cst_44 {dimension_numbers = #tpu.dot_dimension_numbers<[1], [0], [0], [1], [0, 0, 1, 1], [], []>} : vector<32x64xf32>, vector<64x32xf32>, vector<32x32xf32> -> vector<32x32xf32>
    %132 = vector.extract_strided_slice %38 {offsets = [5, 0], sizes = [1, 32], strides = [1, 1]} : vector<8x96xf32> to vector<1x32xf32>
    %133 = vector.broadcast %132 : vector<1x32xf32> to vector<32x32xf32>
    %134 = arith.addf %131, %133 : vector<32x32xf32>
    %135 = arith.addf %134, %110 : vector<32x32xf32>
    %136 = vector.extract_strided_slice %38 {offsets = [6, 0], sizes = [1, 32], strides = [1, 1]} : vector<8x96xf32> to vector<1x32xf32>
    %137 = vector.extract_strided_slice %38 {offsets = [7, 0], sizes = [1, 32], strides = [1, 1]} : vector<8x96xf32> to vector<1x32xf32>
    %cst_45 = arith.constant dense<0.000000e+00> : vector<32xf32>
    %138 = vector.multi_reduction <add>, %135, %cst_45 [1] : vector<32x32xf32> to vector<32xf32>
    %139 = vector.shape_cast %138 : vector<32xf32> to vector<32x1xf32>
    %cst_46 = arith.constant 3.200000e+01 : f32
    %140 = vector.broadcast %cst_46 : f32 to vector<32x1xf32>
    %141 = arith.divf %139, %140 : vector<32x1xf32>
    %142 = vector.broadcast %141 : vector<32x1xf32> to vector<32x32xf32>
    %143 = arith.subf %135, %142 : vector<32x32xf32>
    %144 = arith.mulf %143, %143 : vector<32x32xf32>
    %cst_47 = arith.constant dense<0.000000e+00> : vector<32xf32>
    %145 = vector.multi_reduction <add>, %144, %cst_47 [1] : vector<32x32xf32> to vector<32xf32>
    %146 = vector.shape_cast %145 : vector<32xf32> to vector<32x1xf32>
    %cst_48 = arith.constant 3.200000e+01 : f32
    %147 = vector.broadcast %cst_48 : f32 to vector<32x1xf32>
    %148 = arith.divf %146, %147 : vector<32x1xf32>
    %149 = vector.broadcast %141 : vector<32x1xf32> to vector<32x32xf32>
    %150 = arith.subf %135, %149 : vector<32x32xf32>
    %cst_49 = arith.constant 9.99999996E-13 : f32
    %151 = vector.broadcast %cst_49 : f32 to vector<32x1xf32>
    %152 = arith.addf %148, %151 : vector<32x1xf32>
    %153 = math.rsqrt %152 : vector<32x1xf32>
    %154 = vector.broadcast %153 : vector<32x1xf32> to vector<32x32xf32>
    %155 = arith.mulf %150, %154 : vector<32x32xf32>
    %156 = vector.broadcast %136 : vector<1x32xf32> to vector<32x32xf32>
    %157 = arith.mulf %155, %156 : vector<32x32xf32>
    %158 = vector.broadcast %137 : vector<1x32xf32> to vector<32x32xf32>
    %159 = arith.addf %157, %158 : vector<32x32xf32>
    %c1 = arith.constant 1 : index
    %c0_50 = arith.constant 0 : index
    %c0_51 = arith.constant 0 : index
    %160 = vector.load %arg3[%c1, %c0_50, %c0_51] : memref<2x32x192xf32, #tpu.memory_space<vmem>>, vector<1x32x192xf32>
    %161 = vector.shape_cast %160 : vector<1x32x192xf32> to vector<32x192xf32>
    %c1_52 = arith.constant 1 : index
    %c0_53 = arith.constant 0 : index
    %c0_54 = arith.constant 0 : index
    %162 = vector.load %arg5[%c1_52, %c0_53, %c0_54] : memref<2x8x96xf32, #tpu.memory_space<vmem>>, vector<1x8x96xf32>
    %163 = vector.shape_cast %162 : vector<1x8x96xf32> to vector<8x96xf32>
    %164 = vector.extract_strided_slice %161 {offsets = [0, 0], sizes = [32, 96], strides = [1, 1]} : vector<32x192xf32> to vector<32x96xf32>
    %cst_55 = arith.constant dense<0.000000e+00> : vector<32x96xf32>
    %165 = tpu.matmul %159, %164, %cst_55 {dimension_numbers = #tpu.dot_dimension_numbers<[1], [0], [0], [1], [0, 0, 1, 1], [], []>} : vector<32x32xf32>, vector<32x96xf32>, vector<32x96xf32> -> vector<32x96xf32>
    %166 = vector.extract_strided_slice %163 {offsets = [0, 0], sizes = [1, 96], strides = [1, 1]} : vector<8x96xf32> to vector<1x96xf32>
    %167 = vector.broadcast %166 : vector<1x96xf32> to vector<32x96xf32>
    %168 = arith.addf %165, %167 : vector<32x96xf32>
    %169 = vector.extract_strided_slice %168 {offsets = [0, 0], sizes = [32, 16], strides = [1, 1]} : vector<32x96xf32> to vector<32x16xf32>
    %170 = vector.extract_strided_slice %168 {offsets = [0, 32], sizes = [32, 16], strides = [1, 1]} : vector<32x96xf32> to vector<32x16xf32>
    %171 = vector.extract_strided_slice %168 {offsets = [0, 64], sizes = [32, 16], strides = [1, 1]} : vector<32x96xf32> to vector<32x16xf32>
    %cst_56 = arith.constant dense<0.000000e+00> : vector<32x32xf32>
    %172 = tpu.matmul %169, %170, %cst_56 {dimension_numbers = #tpu.dot_dimension_numbers<[1], [1], [0], [0], [0, 0, 1, 0], [], []>} : vector<32x16xf32>, vector<32x16xf32>, vector<32x32xf32> -> vector<32x32xf32>
    %cst_57 = arith.constant 2.500000e-01 : f32
    %173 = vector.broadcast %cst_57 : f32 to vector<32x32xf32>
    %174 = arith.mulf %172, %173 : vector<32x32xf32>
    %175 = arith.addf %174, %34 : vector<32x32xf32>
    %cst_58 = arith.constant dense<0xFF800000> : vector<32xf32>
    %176 = vector.multi_reduction <maximumf>, %175, %cst_58 [1] : vector<32x32xf32> to vector<32xf32>
    %177 = vector.shape_cast %176 : vector<32xf32> to vector<32x1xf32>
    %178 = vector.broadcast %177 : vector<32x1xf32> to vector<32x32xf32>
    %179 = arith.subf %175, %178 : vector<32x32xf32>
    %180 = math.exp %179 : vector<32x32xf32>
    %cst_59 = arith.constant dense<0.000000e+00> : vector<32xf32>
    %181 = vector.multi_reduction <add>, %180, %cst_59 [1] : vector<32x32xf32> to vector<32xf32>
    %182 = vector.shape_cast %181 : vector<32xf32> to vector<32x1xf32>
    %183 = tpu.reciprocal %182 {approx = true} : vector<32x1xf32> -> vector<32x1xf32>
    %184 = vector.broadcast %183 : vector<32x1xf32> to vector<32x32xf32>
    %185 = arith.mulf %180, %184 : vector<32x32xf32>
    %cst_60 = arith.constant dense<0.000000e+00> : vector<32x16xf32>
    %186 = tpu.matmul %185, %171, %cst_60 {dimension_numbers = #tpu.dot_dimension_numbers<[1], [0], [0], [1], [0, 0, 1, 1], [], []>} : vector<32x32xf32>, vector<32x16xf32>, vector<32x16xf32> -> vector<32x16xf32>
    %187 = vector.extract_strided_slice %168 {offsets = [0, 16], sizes = [32, 16], strides = [1, 1]} : vector<32x96xf32> to vector<32x16xf32>
    %188 = vector.extract_strided_slice %168 {offsets = [0, 48], sizes = [32, 16], strides = [1, 1]} : vector<32x96xf32> to vector<32x16xf32>
    %189 = vector.extract_strided_slice %168 {offsets = [0, 80], sizes = [32, 16], strides = [1, 1]} : vector<32x96xf32> to vector<32x16xf32>
    %cst_61 = arith.constant dense<0.000000e+00> : vector<32x32xf32>
    %190 = tpu.matmul %187, %188, %cst_61 {dimension_numbers = #tpu.dot_dimension_numbers<[1], [1], [0], [0], [0, 0, 1, 0], [], []>} : vector<32x16xf32>, vector<32x16xf32>, vector<32x32xf32> -> vector<32x32xf32>
    %cst_62 = arith.constant 2.500000e-01 : f32
    %191 = vector.broadcast %cst_62 : f32 to vector<32x32xf32>
    %192 = arith.mulf %190, %191 : vector<32x32xf32>
    %193 = arith.addf %192, %34 : vector<32x32xf32>
    %cst_63 = arith.constant dense<0xFF800000> : vector<32xf32>
    %194 = vector.multi_reduction <maximumf>, %193, %cst_63 [1] : vector<32x32xf32> to vector<32xf32>
    %195 = vector.shape_cast %194 : vector<32xf32> to vector<32x1xf32>
    %196 = vector.broadcast %195 : vector<32x1xf32> to vector<32x32xf32>
    %197 = arith.subf %193, %196 : vector<32x32xf32>
    %198 = math.exp %197 : vector<32x32xf32>
    %cst_64 = arith.constant dense<0.000000e+00> : vector<32xf32>
    %199 = vector.multi_reduction <add>, %198, %cst_64 [1] : vector<32x32xf32> to vector<32xf32>
    %200 = vector.shape_cast %199 : vector<32xf32> to vector<32x1xf32>
    %201 = tpu.reciprocal %200 {approx = true} : vector<32x1xf32> -> vector<32x1xf32>
    %202 = vector.broadcast %201 : vector<32x1xf32> to vector<32x32xf32>
    %203 = arith.mulf %198, %202 : vector<32x32xf32>
    %cst_65 = arith.constant dense<0.000000e+00> : vector<32x16xf32>
    %204 = tpu.matmul %203, %189, %cst_65 {dimension_numbers = #tpu.dot_dimension_numbers<[1], [0], [0], [1], [0, 0, 1, 1], [], []>} : vector<32x32xf32>, vector<32x16xf32>, vector<32x16xf32> -> vector<32x16xf32>
    %205 = tpu.concatenate %186, %204 in 1 : vector<32x16xf32>, vector<32x16xf32> -> vector<32x32xf32>
    %206 = vector.extract_strided_slice %161 {offsets = [0, 96], sizes = [32, 32], strides = [1, 1]} : vector<32x192xf32> to vector<32x32xf32>
    %cst_66 = arith.constant dense<0.000000e+00> : vector<32x32xf32>
    %207 = tpu.matmul %205, %206, %cst_66 {dimension_numbers = #tpu.dot_dimension_numbers<[1], [0], [0], [1], [0, 0, 1, 1], [], []>} : vector<32x32xf32>, vector<32x32xf32>, vector<32x32xf32> -> vector<32x32xf32>
    %208 = vector.extract_strided_slice %163 {offsets = [1, 0], sizes = [1, 32], strides = [1, 1]} : vector<8x96xf32> to vector<1x32xf32>
    %209 = vector.broadcast %208 : vector<1x32xf32> to vector<32x32xf32>
    %210 = arith.addf %207, %209 : vector<32x32xf32>
    %211 = arith.addf %210, %159 : vector<32x32xf32>
    %212 = vector.extract_strided_slice %163 {offsets = [2, 0], sizes = [1, 32], strides = [1, 1]} : vector<8x96xf32> to vector<1x32xf32>
    %213 = vector.extract_strided_slice %163 {offsets = [3, 0], sizes = [1, 32], strides = [1, 1]} : vector<8x96xf32> to vector<1x32xf32>
    %cst_67 = arith.constant dense<0.000000e+00> : vector<32xf32>
    %214 = vector.multi_reduction <add>, %211, %cst_67 [1] : vector<32x32xf32> to vector<32xf32>
    %215 = vector.shape_cast %214 : vector<32xf32> to vector<32x1xf32>
    %cst_68 = arith.constant 3.200000e+01 : f32
    %216 = vector.broadcast %cst_68 : f32 to vector<32x1xf32>
    %217 = arith.divf %215, %216 : vector<32x1xf32>
    %218 = vector.broadcast %217 : vector<32x1xf32> to vector<32x32xf32>
    %219 = arith.subf %211, %218 : vector<32x32xf32>
    %220 = arith.mulf %219, %219 : vector<32x32xf32>
    %cst_69 = arith.constant dense<0.000000e+00> : vector<32xf32>
    %221 = vector.multi_reduction <add>, %220, %cst_69 [1] : vector<32x32xf32> to vector<32xf32>
    %222 = vector.shape_cast %221 : vector<32xf32> to vector<32x1xf32>
    %cst_70 = arith.constant 3.200000e+01 : f32
    %223 = vector.broadcast %cst_70 : f32 to vector<32x1xf32>
    %224 = arith.divf %222, %223 : vector<32x1xf32>
    %225 = vector.broadcast %217 : vector<32x1xf32> to vector<32x32xf32>
    %226 = arith.subf %211, %225 : vector<32x32xf32>
    %cst_71 = arith.constant 9.99999996E-13 : f32
    %227 = vector.broadcast %cst_71 : f32 to vector<32x1xf32>
    %228 = arith.addf %224, %227 : vector<32x1xf32>
    %229 = math.rsqrt %228 : vector<32x1xf32>
    %230 = vector.broadcast %229 : vector<32x1xf32> to vector<32x32xf32>
    %231 = arith.mulf %226, %230 : vector<32x32xf32>
    %232 = vector.broadcast %212 : vector<1x32xf32> to vector<32x32xf32>
    %233 = arith.mulf %231, %232 : vector<32x32xf32>
    %234 = vector.broadcast %213 : vector<1x32xf32> to vector<32x32xf32>
    %235 = arith.addf %233, %234 : vector<32x32xf32>
    %236 = vector.extract_strided_slice %161 {offsets = [0, 128], sizes = [32, 64], strides = [1, 1]} : vector<32x192xf32> to vector<32x64xf32>
    %cst_72 = arith.constant dense<0.000000e+00> : vector<32x64xf32>
    %237 = tpu.matmul %235, %236, %cst_72 {dimension_numbers = #tpu.dot_dimension_numbers<[1], [0], [0], [1], [0, 0, 1, 1], [], []>} : vector<32x32xf32>, vector<32x64xf32>, vector<32x64xf32> -> vector<32x64xf32>
    %238 = vector.extract_strided_slice %163 {offsets = [4, 0], sizes = [1, 64], strides = [1, 1]} : vector<8x96xf32> to vector<1x64xf32>
    %239 = vector.broadcast %238 : vector<1x64xf32> to vector<32x64xf32>
    %240 = arith.addf %237, %239 : vector<32x64xf32>
    %241 = arith.mulf %240, %240 : vector<32x64xf32>
    %242 = arith.mulf %240, %241 : vector<32x64xf32>
    %cst_73 = arith.constant 4.471500e-02 : f32
    %243 = vector.broadcast %cst_73 : f32 to vector<32x64xf32>
    %244 = arith.mulf %243, %242 : vector<32x64xf32>
    %245 = arith.addf %240, %244 : vector<32x64xf32>
    %cst_74 = arith.constant 0.797884583 : f32
    %246 = vector.broadcast %cst_74 : f32 to vector<32x64xf32>
    %247 = arith.mulf %246, %245 : vector<32x64xf32>
    %248 = math.tanh %247 : vector<32x64xf32>
    %cst_75 = arith.constant 1.000000e+00 : f32
    %249 = vector.broadcast %cst_75 : f32 to vector<32x64xf32>
    %250 = arith.addf %249, %248 : vector<32x64xf32>
    %cst_76 = arith.constant 5.000000e-01 : f32
    %251 = vector.broadcast %cst_76 : f32 to vector<32x64xf32>
    %252 = arith.mulf %251, %250 : vector<32x64xf32>
    %253 = arith.mulf %240, %252 : vector<32x64xf32>
    %c1_77 = arith.constant 1 : index
    %c0_78 = arith.constant 0 : index
    %c0_79 = arith.constant 0 : index
    %254 = vector.load %arg4[%c1_77, %c0_78, %c0_79] : memref<2x64x32xf32, #tpu.memory_space<vmem>>, vector<1x64x32xf32>
    %255 = vector.shape_cast %254 : vector<1x64x32xf32> to vector<64x32xf32>
    %cst_80 = arith.constant dense<0.000000e+00> : vector<32x32xf32>
    %256 = tpu.matmul %253, %255, %cst_80 {dimension_numbers = #tpu.dot_dimension_numbers<[1], [0], [0], [1], [0, 0, 1, 1], [], []>} : vector<32x64xf32>, vector<64x32xf32>, vector<32x32xf32> -> vector<32x32xf32>
    %257 = vector.extract_strided_slice %163 {offsets = [5, 0], sizes = [1, 32], strides = [1, 1]} : vector<8x96xf32> to vector<1x32xf32>
    %258 = vector.broadcast %257 : vector<1x32xf32> to vector<32x32xf32>
    %259 = arith.addf %256, %258 : vector<32x32xf32>
    %260 = arith.addf %259, %235 : vector<32x32xf32>
    %261 = vector.extract_strided_slice %163 {offsets = [6, 0], sizes = [1, 32], strides = [1, 1]} : vector<8x96xf32> to vector<1x32xf32>
    %262 = vector.extract_strided_slice %163 {offsets = [7, 0], sizes = [1, 32], strides = [1, 1]} : vector<8x96xf32> to vector<1x32xf32>
    %cst_81 = arith.constant dense<0.000000e+00> : vector<32xf32>
    %263 = vector.multi_reduction <add>, %260, %cst_81 [1] : vector<32x32xf32> to vector<32xf32>
    %264 = vector.shape_cast %263 : vector<32xf32> to vector<32x1xf32>
    %cst_82 = arith.constant 3.200000e+01 : f32
    %265 = vector.broadcast %cst_82 : f32 to vector<32x1xf32>
    %266 = arith.divf %264, %265 : vector<32x1xf32>
    %267 = vector.broadcast %266 : vector<32x1xf32> to vector<32x32xf32>
    %268 = arith.subf %260, %267 : vector<32x32xf32>
    %269 = arith.mulf %268, %268 : vector<32x32xf32>
    %cst_83 = arith.constant dense<0.000000e+00> : vector<32xf32>
    %270 = vector.multi_reduction <add>, %269, %cst_83 [1] : vector<32x32xf32> to vector<32xf32>
    %271 = vector.shape_cast %270 : vector<32xf32> to vector<32x1xf32>
    %cst_84 = arith.constant 3.200000e+01 : f32
    %272 = vector.broadcast %cst_84 : f32 to vector<32x1xf32>
    %273 = arith.divf %271, %272 : vector<32x1xf32>
    %274 = vector.broadcast %266 : vector<32x1xf32> to vector<32x32xf32>
    %275 = arith.subf %260, %274 : vector<32x32xf32>
    %cst_85 = arith.constant 9.99999996E-13 : f32
    %276 = vector.broadcast %cst_85 : f32 to vector<32x1xf32>
    %277 = arith.addf %273, %276 : vector<32x1xf32>
    %278 = math.rsqrt %277 : vector<32x1xf32>
    %279 = vector.broadcast %278 : vector<32x1xf32> to vector<32x32xf32>
    %280 = arith.mulf %275, %279 : vector<32x32xf32>
    %281 = vector.broadcast %261 : vector<1x32xf32> to vector<32x32xf32>
    %282 = arith.mulf %280, %281 : vector<32x32xf32>
    %283 = vector.broadcast %262 : vector<1x32xf32> to vector<32x32xf32>
    %284 = arith.addf %282, %283 : vector<32x32xf32>
    %c32 = arith.constant 32 : index
    %c0_86 = arith.constant 0 : index
    %285 = vector.load %arg1[%c32, %c0_86] : memref<36x32xf32, #tpu.memory_space<vmem>>, vector<4x32xf32>
    %cst_87 = arith.constant dense<0.000000e+00> : vector<4x32xf32>
    %286 = tpu.matmul %285, %284, %cst_87 {dimension_numbers = #tpu.dot_dimension_numbers<[1], [0], [0], [1], [0, 0, 1, 1], [], []>} : vector<4x32xf32>, vector<32x32xf32>, vector<4x32xf32> -> vector<4x32xf32>
    %287 = vector.extract_strided_slice %286 {offsets = [0, 0], sizes = [2, 32], strides = [1, 1]} : vector<4x32xf32> to vector<2x32xf32>
    %288 = vector.extract_strided_slice %286 {offsets = [2, 0], sizes = [2, 32], strides = [1, 1]} : vector<4x32xf32> to vector<2x32xf32>
    %289 = tpu.concatenate %287, %288 in 1 : vector<2x32xf32>, vector<2x32xf32> -> vector<2x64xf32>
    %c0_88 = arith.constant 0 : index
    %c0_89 = arith.constant 0 : index
    %290 = vector.load %arg6[%c0_88, %c0_89] : memref<65x3xf32, #tpu.memory_space<vmem>>, vector<64x3xf32>
    %cst_90 = arith.constant dense<0.000000e+00> : vector<2x3xf32>
    %291 = tpu.matmul %289, %290, %cst_90 {dimension_numbers = #tpu.dot_dimension_numbers<[1], [0], [0], [1], [0, 0, 1, 1], [], []>} : vector<2x64xf32>, vector<64x3xf32>, vector<2x3xf32> -> vector<2x3xf32>
    %c64 = arith.constant 64 : index
    %c0_91 = arith.constant 0 : index
    %292 = vector.load %arg6[%c64, %c0_91] : memref<65x3xf32, #tpu.memory_space<vmem>>, vector<1x3xf32>
    %293 = vector.broadcast %292 : vector<1x3xf32> to vector<2x3xf32>
    %294 = arith.addf %291, %293 : vector<2x3xf32>
    %c0_92 = arith.constant 0 : index
    %c0_93 = arith.constant 0 : index
    %295 = vector.load %arg7[%c0_92, %c0_93] : memref<2x3xf32, #tpu.memory_space<vmem>>, vector<2x3xf32>
    tpu.vector_store %arg7[%c0_92, %c0_93], %294 {strides = array<i32>} : memref<2x3xf32, #tpu.memory_space<vmem>>, vector<2x3xf32>,
    return
  }
}

</mosaic_0001>

<llo_original>
// kernel: bert_corefl_forward.1
$region0: #{bert_corefl_forward.1}
  #allocation0 [shape = 'u32[]', space=smem, size = 0x4, offset = 0x4, fixed_abs, tag = 'smem constant byte address 0x4 - core index']
  #allocation1 [shape = 'u32[144,128]{1,0:T(1,128)}', space=vmem, size = 0x12000, scoped, tag = 'internal scratch']
  %s0 = inlined_call_operand.vmem [shape: s32[32,1], index: 0, kind: input, shape index: {}]
  %s1 = inlined_call_operand.vmem [shape: f32[36,32], index: 1, kind: input, shape index: {}]
  %s2 = inlined_call_operand.vmem [shape: f32[134,32], index: 2, kind: input, shape index: {}]
  %s3 = inlined_call_operand.vmem [shape: f32[2,32,192], index: 3, kind: input, shape index: {}]
  %s4 = inlined_call_operand.vmem [shape: f32[2,64,32], index: 4, kind: input, shape index: {}]
  %s5 = inlined_call_operand.vmem [shape: f32[2,8,96], index: 5, kind: input, shape index: {}]
  %s6 = inlined_call_operand.vmem [shape: f32[65,3], index: 6, kind: input, shape index: {}]
  %s7 = inlined_call_operand.hbm [shape: f32[2,3], index: 7, kind: output, shape index: {}]
  %s8 = sld [smem:[#allocation0]]
  $region38: #{bert_corefl_forward.1} parent=0
    _
  %s10 = ssub.s32 1, %s8
  %s11 = scalar_select 0, %s10, %s8
  $region1: #{bert_corefl_forward.1} parent=0
    #allocation2 [shape = 'u8[1024]{0}', space=vmem, size = 0x400, scoped, tag = 'output window, operand 0, single buffered']
    #allocation3 [shape = 's32[1]{0}', space=sflag, size = 0x4, scoped, tag = 'scoped memory for bert_corefl_forward.1']
    %12 = vsyncpa [#allocation3], 0
    // Predicated region
    $region2: #{bert_corefl_forward.1} parent=1 // pred_check
      _
    $region3: #{bert_corefl_forward.1} parent=1 // pred_check_branch
      %14 = sbr.rel (0) target = $region5
    $region4: #{bert_corefl_forward.1} parent=1 // pred_region
      _
    $region5: #{bert_corefl_forward.1} parent=1 // pred_fallthru
      _
    // Predicated region
    $region6: #{bert_corefl_forward.1} parent=1 // pred_check
      _
    $region7: #{bert_corefl_forward.1} parent=1 // pred_check_branch
      %16 = sbr.rel (0) target = $region9
    $region8: #{bert_corefl_forward.1} parent=1 // pred_region
      _
    $region9: #{bert_corefl_forward.1} parent=1 // pred_fallthru
      _
    // Predicated region
    $region10: #{bert_corefl_forward.1} parent=1 // pred_check
      _
    $region11: #{bert_corefl_forward.1} parent=1 // pred_check_branch
      %18 = sbr.rel (0) target = $region13
    $region12: #{bert_corefl_forward.1} parent=1 // pred_region
      _
    $region13: #{bert_corefl_forward.1} parent=1 // pred_fallthru
      _
    // Predicated region
    $region14: #{bert_corefl_forward.1} parent=1 // pred_check
      _
    $region15: #{bert_corefl_forward.1} parent=1 // pred_check_branch
      %20 = sbr.rel (0) target = $region17
    $region16: #{bert_corefl_forward.1} parent=1 // pred_region
      _
    $region17: #{bert_corefl_forward.1} parent=1 // pred_fallthru
      _
    // Predicated region
    $region18: #{bert_corefl_forward.1} parent=1 // pred_check
      _
    $region19: #{bert_corefl_forward.1} parent=1 // pred_check_branch
      %22 = sbr.rel (0) target = $region21
    $region20: #{bert_corefl_forward.1} parent=1 // pred_region
      _
    $region21: #{bert_corefl_forward.1} parent=1 // pred_fallthru
      _
    // Predicated region
    $region22: #{bert_corefl_forward.1} parent=1 // pred_check
      _
    $region23: #{bert_corefl_forward.1} parent=1 // pred_check_branch
      %24 = sbr.rel (0) target = $region25
    $region24: #{bert_corefl_forward.1} parent=1 // pred_region
      _
    $region25: #{bert_corefl_forward.1} parent=1 // pred_fallthru
      _
    // Predicated region
    $region26: #{bert_corefl_forward.1} parent=1 // pred_check
      _
    $region27: #{bert_corefl_forward.1} parent=1 // pred_check_branch
      %26 = sbr.rel (0) target = $region29
    $region28: #{bert_corefl_forward.1} parent=1 // pred_region
      _
    $region29: #{bert_corefl_forward.1} parent=1 // pred_fallthru
      _
    %v27 = vld [vmem:[%s0] sm:$0xff]
    %v28 = vld [vmem:[%s0 + $0x8] sm:$0xff]
    %v29 = vld [vmem:[%s0 + $0x10] sm:$0xff]
    %v30 = vld [vmem:[%s0 + $0x18] sm:$0xff]
    %v31 = vlaneseq
    %v32 = vand.u32 %v31, 127
    %33 = vset.pattern.permute.xlu0 0
    %34 = vperm.xlu0 %33, %v27
    %v35 = vpop.permute.xlu0 %34
    %36 = vset.pattern.permute.xlu0 0
    %37 = vperm.xlu0 %36, %v28
    %v38 = vpop.permute.xlu0 %37
    %39 = vset.pattern.permute.xlu0 0
    %40 = vperm.xlu0 %39, %v29
    %v41 = vpop.permute.xlu0 %40
    %42 = vset.pattern.permute.xlu0 0
    %43 = vperm.xlu0 %42, %v30
    %v44 = vpop.permute.xlu0 %43
    %vm45 = vcmp.eq.s32.totalorder %v32, %v35
    %vm46 = vcmp.eq.s32.totalorder %v32, %v38
    %vm47 = vcmp.eq.s32.totalorder %v32, %v41
    %vm48 = vcmp.eq.s32.totalorder %v32, %v44
    %v49 = vsel %vm45, 1, 0
    %v50 = vsel %vm46, 1, 0
    %v51 = vsel %vm47, 1, 0
    %v52 = vsel %vm48, 1, 0
    %v53 = vcvt.s32.f32 %v49
    %v54 = vcvt.s32.f32 %v50
    %v55 = vcvt.s32.f32 %v51
    %v56 = vcvt.s32.f32 %v52
    %v57 = vld [vmem:[%s2] sm:$0xff]
    %v58 = vld [vmem:[%s2 + $0x8] sm:$0xff]
    %v59 = vld [vmem:[%s2 + $0x10] sm:$0xff]
    %v60 = vld [vmem:[%s2 + $0x18] sm:$0xff]
    %v61 = vld [vmem:[%s2 + $0x20] sm:$0xff]
    %v62 = vld [vmem:[%s2 + $0x28] sm:$0xff]
    %v63 = vld [vmem:[%s2 + $0x30] sm:$0xff]
    %v64 = vld [vmem:[%s2 + $0x38] sm:$0xff]
    %v65 = vld [vmem:[%s2 + $0x40] sm:$0xff]
    %v66 = vld [vmem:[%s2 + $0x48] sm:$0xff]
    %v67 = vld [vmem:[%s2 + $0x50] sm:$0xff]
    %v68 = vld [vmem:[%s2 + $0x58] sm:$0xff]
    %v69 = vld [vmem:[%s2 + $0x60] sm:$0xf]
    %v70 = vld [vmem:[%s2 + $0x64] sm:$0xff]
    %v71 = vld [vmem:[%s2 + $0x6c] sm:$0xff]
    %v72 = vld [vmem:[%s2 + $0x74] sm:$0xff]
    %v73 = vld [vmem:[%s2 + $0x7c] sm:$0xff]
    %vm74 = vcmask 818176
    %v76 = vsel %vm74, %v53, 0
    %v79 = vsel %vm74, %v54, 0
    %v82 = vsel %vm74, %v55, 0
    %v85 = vsel %vm74, %v56, 0
    %vm87 = vcmask 1043456
    %v89 = vsel %vm87, %v69, 0
    %91 = vmatprep.subr.mxu0 0.0
    %92 = vmatpush1.msra.mxu0 %v57
    %93 = vmatprep.subr.mxu0 0.0
    %94 = vmatpush1.msra.mxu0 %v58
    %95 = vmatprep.subr.mxu0 0.0
    %96 = vmatpush1.msra.mxu0 %v59
    %97 = vmatprep.subr.mxu0 0.0
    %98 = vmatpush1.msra.mxu0 %v60
    %99 = vmatprep.subr.mxu0 0.0
    %100 = vmatpush1.msra.mxu0 %v61
    %101 = vmatprep.subr.mxu0 0.0
    %102 = vmatpush1.msra.mxu0 %v62
    %103 = vmatprep.subr.mxu0 0.0
    %104 = vmatpush1.msra.mxu0 %v63
    %105 = vmatprep.subr.mxu0 0.0
    %106 = vmatpush1.msra.mxu0 %v64
    %107 = vmatprep.subr.mxu0 0.0
    %108 = vmatpush1.msra.mxu0 %v65
    %109 = vmatprep.subr.mxu0 0.0
    %110 = vmatpush1.msra.mxu0 %v66
    %111 = vmatprep.subr.mxu0 0.0
    %112 = vmatpush1.msra.mxu0 %v67
    %113 = vmatprep.subr.mxu0 0.0
    %114 = vmatpush1.msra.mxu0 %v68
    %115 = vmatprep.subr.mxu0 0.0
    %116 = vmatpush1.msra.mxu0 %v89
    %117 = vmatprep.subr.mxu0 0.0
    %118 = vmatpush1.msra.mxu0 0.0
    %119 = vmatprep.subr.mxu0 0.0
    %120 = vmatpush1.msra.mxu0 0.0
    %121 = vmatprep.subr.mxu0 0.0
    %122 = vmatpush1.msra.mxu0 0.0
    %123 = vmatprep.subr.mxu0 0.0
    %124 = vmatpush1.msra.mxu0 0.0
    %125 = vmatprep.subr.mxu0 0.0
    %126 = vmatpush1.msra.mxu0 0.0
    %127 = vmatprep.subr.mxu0 0.0
    %128 = vmatpush1.msra.mxu0 0.0
    %129 = vmatprep.subr.mxu0 0.0
    %130 = vmatpush1.msra.mxu0 0.0
    %131 = vmatprep.subr.mxu0 0.0
    %132 = vmatpush1.msra.mxu0 0.0
    %133 = vmatprep.subr.mxu0 0.0
    %134 = vmatpush1.msra.mxu0 0.0
    %135 = vmatprep.subr.mxu0 0.0
    %136 = vmatpush1.msra.mxu0 0.0
    %137 = vmatprep.subr.mxu0 0.0
    %138 = vmatpush1.msra.mxu0 0.0
    %139 = vmatprep.subr.mxu0 0.0
    %140 = vmatpush1.msra.mxu0 0.0
    %141 = vmatprep.subr.mxu0 0.0
    %142 = vmatpush1.msra.mxu0 0.0
    %143 = vmatprep.subr.mxu0 0.0
    %144 = vmatpush1.msra.mxu0 0.0
    %145 = vmatprep.subr.mxu0 0.0
    %146 = vmatpush1.msra.mxu0 0.0
    %147 = vmatprep.subr.mxu0 0.0
    %148 = vmatpush1.msra.mxu0 0.0
    %149 = vmatprep.subr.mxu0 0.0
    %150 = vmatpush1.msra.mxu0 0.0
    %151 = vmatprep.subr.mxu0 0.0
    %152 = vmatpush1.msra.mxu0 0.0
    %153 = vmatprep.subr.mxu0 0.0
    %154 = vmatpush1.msra.mxu0 0.0
    %155 = vmatprep.mubr.f32.mxu0 0.0
    %156 = vmatmul.mubr.f32.gmra.mrb[0].mxu0 %v76
    %v157 = vpop.f32.mrb[0].mxu0
    %v158 = vadd.f32 %v70, %v157
    %v159 = vpop.f32.mrb[0].mxu0
    %160 = vmatprep.mubr.f32.mxu0 0.0
    %161 = vmatmul.mubr.f32.gmra.mrb[0].mxu0 %v79
    %v162 = vpop.f32.mrb[0].mxu0
    %v163 = vadd.f32 %v71, %v162
    %v164 = vpop.f32.mrb[0].mxu0
    %165 = vmatprep.mubr.f32.mxu0 0.0
    %166 = vmatmul.mubr.f32.gmra.mrb[0].mxu0 %v82
    %v167 = vpop.f32.mrb[0].mxu0
    %v168 = vadd.f32 %v72, %v167
    %v169 = vpop.f32.mrb[0].mxu0
    %170 = vmatprep.mubr.f32.mxu0 0.0
    %171 = vmatmul.mubr.f32.gmra.mrb[0].mxu0 %v85
    %v172 = vpop.f32.mrb[0].mxu0
    %v173 = vadd.f32 %v73, %v172
    %v174 = vpop.f32.mrb[0].mxu0
    %175 = vdwg.mxu0
    %v176 = vld [vmem:[%s2 + $0x84] sm:$0x1]
    %v177 = vld [vmem:[%s2 + $0x85] sm:$0x1]
    %vm178 = vcmask 261120
    %v179 = vsel %vm178, %v158, 0.0
    %180 = vadd.xlane.f32.xlu0 %v179
    %v181 = vpop.xlane.xlu0 %180
    %v182 = vsel %vm178, %v163, 0.0
    %183 = vadd.xlane.f32.xlu0 %v182
    %v184 = vpop.xlane.xlu0 %183
    %v185 = vsel %vm178, %v168, 0.0
    %186 = vadd.xlane.f32.xlu0 %v185
    %v187 = vpop.xlane.xlu0 %186
    %v188 = vsel %vm178, %v173, 0.0
    %189 = vadd.xlane.f32.xlu0 %v188
    %v190 = vpop.xlane.xlu0 %189
    %v191 = vrcp.pop 32.0
    %v192 = vmul.f32 %v181, %v191
    %v193 = vmul.f32 %v184, %v191
    %v194 = vmul.f32 %v187, %v191
    %v195 = vmul.f32 %v190, %v191
    %v196 = vsub.f32 %v158, %v192
    %v197 = vsub.f32 %v163, %v193
    %v198 = vsub.f32 %v168, %v194
    %v199 = vsub.f32 %v173, %v195
    %v200 = vmul.f32 %v196, %v196
    %v201 = vmul.f32 %v197, %v197
    %v202 = vmul.f32 %v198, %v198
    %v203 = vmul.f32 %v199, %v199
    %v204 = vsel %vm178, %v200, 0.0
    %205 = vadd.xlane.f32.xlu0 %v204
    %v206 = vpop.xlane.xlu0 %205
    %v207 = vsel %vm178, %v201, 0.0
    %208 = vadd.xlane.f32.xlu0 %v207
    %v209 = vpop.xlane.xlu0 %208
    %v210 = vsel %vm178, %v202, 0.0
    %211 = vadd.xlane.f32.xlu0 %v210
    %v212 = vpop.xlane.xlu0 %211
    %v213 = vsel %vm178, %v203, 0.0
    %214 = vadd.xlane.f32.xlu0 %v213
    %v215 = vpop.xlane.xlu0 %214
    %v216 = vmul.f32 %v206, %v191
    %v217 = vmul.f32 %v209, %v191
    %v218 = vmul.f32 %v212, %v191
    %v219 = vmul.f32 %v215, %v191
    %v220 = vadd.f32 %v216, 1e-12
    %v221 = vadd.f32 %v217, 1e-12
    %v222 = vadd.f32 %v218, 1e-12
    %v223 = vadd.f32 %v219, 1e-12
    %v224 = vrsqrt.pop %v220
    %v225 = vrsqrt.pop %v221
    %v226 = vrsqrt.pop %v222
    %v227 = vrsqrt.pop %v223
    %v228 = vmul.f32 %v196, %v224
    %v229 = vmul.f32 %v197, %v225
    %v230 = vmul.f32 %v198, %v226
    %v231 = vmul.f32 %v199, %v227
    %v232 = vlaneseq
    %v233 = vshrl.u32 %v232, 7
    %v234 = vsub.s32 0, %v233
    %v235 = vrot.slane %v176, %v234
    %v236 = vmul.f32 %v228, %v235
    %v237 = vmul.f32 %v229, %v235
    %v238 = vmul.f32 %v230, %v235
    %v239 = vmul.f32 %v231, %v235
    %v240 = vlaneseq
    %v241 = vshrl.u32 %v240, 7
    %v242 = vsub.s32 0, %v241
    %v243 = vrot.slane %v177, %v242
    %v244 = vadd.f32 %v236, %v243
    %v245 = vadd.f32 %v237, %v243
    %v246 = vadd.f32 %v238, %v243
    %v247 = vadd.f32 %v239, %v243
    %v248 = vld [vmem:[%s1] sm:$0xff]
    %v249 = vld [vmem:[%s1 + $0x8] sm:$0xff]
    %v250 = vld [vmem:[%s1 + $0x10] sm:$0xff]
    %v251 = vld [vmem:[%s1 + $0x18] sm:$0xff]
    %v252 = vld [vmem:[%s3] sm:$0xff]
    %v253 = vld [vmem:[%s3 + $0x8] sm:$0xff]
    %v254 = vld [vmem:[%s3 + $0x10] sm:$0xff]
    %v255 = vld [vmem:[%s3 + $0x18] sm:$0xff]
    %v256 = vld [vmem:[%s3 + $0x20] sm:$0xff]
    %v257 = vld [vmem:[%s3 + $0x28] sm:$0xff]
    %v258 = vld [vmem:[%s3 + $0x30] sm:$0xff]
    %v259 = vld [vmem:[%s3 + $0x38] sm:$0xff]
    %v260 = vld [vmem:[%s5] sm:$0xff]
    %v261 = vlaneseq
    %v262 = vshrl.u32 %v261, 7
    %v263 = vsub.s32 0, %v262
    %v264 = vrot.slane %v260, %v263
    %v266 = vsel %vm178, %v244, 0
    %v269 = vsel %vm178, %v245, 0
    %v272 = vsel %vm178, %v246, 0
    %v275 = vsel %vm178, %v247, 0
    %277 = vmatprep.subr.mxu0 0.0
    %278 = vmatpush1.msra.mxu0 %v252
    %279 = vmatprep.subr.mxu0 0.0
    %280 = vmatpush1.msra.mxu0 %v254
    %281 = vmatprep.subr.mxu0 0.0
    %282 = vmatpush1.msra.mxu0 %v256
    %283 = vmatprep.subr.mxu0 0.0
    %284 = vmatpush1.msra.mxu0 %v258
    %285 = vmatprep.subr.mxu0 0.0
    %286 = vmatpush1.msra.mxu0 0.0
    %287 = vmatprep.subr.mxu0 0.0
    %288 = vmatpush1.msra.mxu0 0.0
    %289 = vmatprep.subr.mxu0 0.0
    %290 = vmatpush1.msra.mxu0 0.0
    %291 = vmatprep.subr.mxu0 0.0
    %292 = vmatpush1.msra.mxu0 0.0
    %293 = vmatprep.subr.mxu0 0.0
    %294 = vmatpush1.msra.mxu0 0.0
    %295 = vmatprep.subr.mxu0 0.0
    %296 = vmatpush1.msra.mxu0 0.0
    %297 = vmatprep.subr.mxu0 0.0
    %298 = vmatpush1.msra.mxu0 0.0
    %299 = vmatprep.subr.mxu0 0.0
    %300 = vmatpush1.msra.mxu0 0.0
    %301 = vmatprep.subr.mxu0 0.0
    %302 = vmatpush1.msra.mxu0 0.0
    %303 = vmatprep.subr.mxu0 0.0
    %304 = vmatpush1.msra.mxu0 0.0
    %305 = vmatprep.subr.mxu0 0.0
    %306 = vmatpush1.msra.mxu0 0.0
    %307 = vmatprep.subr.mxu0 0.0
    %308 = vmatpush1.msra.mxu0 0.0
    %309 = vmatprep.subr.mxu0 0.0
    %310 = vmatpush1.msra.mxu0 0.0
    %311 = vmatprep.subr.mxu0 0.0
    %312 = vmatpush1.msra.mxu0 0.0
    %313 = vmatprep.subr.mxu0 0.0
    %314 = vmatpush1.msra.mxu0 0.0
    %315 = vmatprep.subr.mxu0 0.0
    %316 = vmatpush1.msra.mxu0 0.0
    %317 = vmatprep.subr.mxu0 0.0
    %318 = vmatpush1.msra.mxu0 0.0
    %319 = vmatprep.subr.mxu0 0.0
    %320 = vmatpush1.msra.mxu0 0.0
    %321 = vmatprep.subr.mxu0 0.0
    %322 = vmatpush1.msra.mxu0 0.0
    %323 = vmatprep.subr.mxu0 0.0
    %324 = vmatpush1.msra.mxu0 0.0
    %325 = vmatprep.subr.mxu0 0.0
    %326 = vmatpush1.msra.mxu0 0.0
    %327 = vmatprep.subr.mxu0 0.0
    %328 = vmatpush1.msra.mxu0 0.0
    %329 = vmatprep.subr.mxu0 0.0
    %330 = vmatpush1.msra.mxu0 0.0
    %331 = vmatprep.subr.mxu0 0.0
    %332 = vmatpush1.msra.mxu0 0.0
    %333 = vmatprep.subr.mxu0 0.0
    %334 = vmatpush1.msra.mxu0 0.0
    %335 = vmatprep.subr.mxu0 0.0
    %336 = vmatpush1.msra.mxu0 0.0
    %337 = vmatprep.subr.mxu0 0.0
    %338 = vmatpush1.msra.mxu0 0.0
    %339 = vmatprep.subr.mxu0 0.0
    %340 = vmatpush1.msra.mxu0 0.0
    %341 = vmatprep.mubr.f32.mxu0 0.0
    %342 = vmatmul.mubr.f32.gmra.mrb[0].mxu0 %v266
    %v343 = vpop.f32.mrb[0].mxu0
    %v344 = vadd.f32 %v264, %v343
    %v345 = vpop.f32.mrb[0].mxu0
    %346 = vmatprep.mubr.f32.mxu0 0.0
    %347 = vmatmul.mubr.f32.gmra.mrb[0].mxu0 %v269
    %v348 = vpop.f32.mrb[0].mxu0
    %v349 = vadd.f32 %v264, %v348
    %v350 = vpop.f32.mrb[0].mxu0
    %351 = vmatprep.mubr.f32.mxu0 0.0
    %352 = vmatmul.mubr.f32.gmra.mrb[0].mxu0 %v272
    %v353 = vpop.f32.mrb[0].mxu0
    %v354 = vadd.f32 %v264, %v353
    %v355 = vpop.f32.mrb[0].mxu0
    %356 = vmatprep.mubr.f32.mxu0 0.0
    %357 = vmatmul.mubr.f32.gmra.mrb[0].mxu0 %v275
    %v358 = vpop.f32.mrb[0].mxu0
    %v359 = vadd.f32 %v264, %v358
    %v360 = vpop.f32.mrb[0].mxu0
    %361 = vdwg.mxu0
    %366 = vrot.lane.b32.xlu0 %v344, 96
    %v367 = vpop.permute.xlu0 %366
    %368 = vrot.lane.b32.xlu0 %v349, 96
    %v369 = vpop.permute.xlu0 %368
    %370 = vrot.lane.b32.xlu0 %v354, 96
    %v371 = vpop.permute.xlu0 %370
    %372 = vrot.lane.b32.xlu0 %v359, 96
    %v373 = vpop.permute.xlu0 %372
    %vm374 = vcmask 130048
    %v375 = vsel %vm374, %v344, 0
    %v377 = vsel %vm374, %v349, 0
    %v379 = vsel %vm374, %v354, 0
    %v381 = vsel %vm374, %v359, 0
    %v383 = vsel %vm374, %v367, 0
    %v385 = vsel %vm374, %v369, 0
    %v387 = vsel %vm374, %v371, 0
    %v389 = vsel %vm374, %v373, 0
    %391 = vmatprep.subr.mxu0 0.0
    %392 = vmatpush1.xpose.msra.mxu0 %v383
    %393 = vmatprep.subr.mxu0 0.0
    %394 = vmatpush1.xpose.msra.mxu0 %v385
    %395 = vmatprep.subr.mxu0 0.0
    %396 = vmatpush1.xpose.msra.mxu0 %v387
    %397 = vmatprep.subr.mxu0 0.0
    %398 = vmatpush1.xpose.msra.mxu0 %v389
    %399 = vmatprep.subr.mxu0 0.0
    %400 = vmatpush1.xpose.msra.mxu0 0.0
    %401 = vmatprep.subr.mxu0 0.0
    %402 = vmatpush1.xpose.msra.mxu0 0.0
    %403 = vmatprep.subr.mxu0 0.0
    %404 = vmatpush1.xpose.msra.mxu0 0.0
    %405 = vmatprep.subr.mxu0 0.0
    %406 = vmatpush1.xpose.msra.mxu0 0.0
    %407 = vmatprep.subr.mxu0 0.0
    %408 = vmatpush1.xpose.msra.mxu0 0.0
    %409 = vmatprep.subr.mxu0 0.0
    %410 = vmatpush1.xpose.msra.mxu0 0.0
    %411 = vmatprep.subr.mxu0 0.0
    %412 = vmatpush1.xpose.msra.mxu0 0.0
    %413 = vmatprep.subr.mxu0 0.0
    %414 = vmatpush1.xpose.msra.mxu0 0.0
    %415 = vmatprep.subr.mxu0 0.0
    %416 = vmatpush1.xpose.msra.mxu0 0.0
    %417 = vmatprep.subr.mxu0 0.0
    %418 = vmatpush1.xpose.msra.mxu0 0.0
    %419 = vmatprep.subr.mxu0 0.0
    %420 = vmatpush1.xpose.msra.mxu0 0.0
    %421 = vmatprep.subr.mxu0 0.0
    %422 = vmatpush1.xpose.msra.mxu0 0.0
    %423 = vmatprep.subr.mxu0 0.0
    %424 = vmatpush1.xpose.msra.mxu0 0.0
    %425 = vmatprep.subr.mxu0 0.0
    %426 = vmatpush1.xpose.msra.mxu0 0.0
    %427 = vmatprep.subr.mxu0 0.0
    %428 = vmatpush1.xpose.msra.mxu0 0.0
    %429 = vmatprep.subr.mxu0 0.0
    %430 = vmatpush1.xpose.msra.mxu0 0.0
    %431 = vmatprep.subr.mxu0 0.0
    %432 = vmatpush1.xpose.msra.mxu0 0.0
    %433 = vmatprep.subr.mxu0 0.0
    %434 = vmatpush1.xpose.msra.mxu0 0.0
    %435 = vmatprep.subr.mxu0 0.0
    %436 = vmatpush1.xpose.msra.mxu0 0.0
    %437 = vmatprep.subr.mxu0 0.0
    %438 = vmatpush1.xpose.msra.mxu0 0.0
    %439 = vmatprep.subr.mxu0 0.0
    %440 = vmatpush1.xpose.msra.mxu0 0.0
    %441 = vmatprep.subr.mxu0 0.0
    %442 = vmatpush1.xpose.msra.mxu0 0.0
    %443 = vmatprep.subr.mxu0 0.0
    %444 = vmatpush1.xpose.msra.mxu0 0.0
    %445 = vmatprep.subr.mxu0 0.0
    %446 = vmatpush1.xpose.msra.mxu0 0.0
    %447 = vmatprep.subr.mxu0 0.0
    %448 = vmatpush1.xpose.msra.mxu0 0.0
    %449 = vmatprep.subr.mxu0 0.0
    %450 = vmatpush1.xpose.msra.mxu0 0.0
    %451 = vmatprep.subr.mxu0 0.0
    %452 = vmatpush1.xpose.msra.mxu0 0.0
    %453 = vmatprep.subr.mxu0 0.0
    %454 = vmatpush1.xpose.msra.mxu0 0.0
    %455 = vmatprep.mubr.f32.mxu0 0.0
    %456 = vmatmul.mubr.f32.gmra.mrb[0].mxu0 %v375
    %v457 = vpop.f32.mrb[0].mxu0
    %v458 = vadd.f32 0.0, %v457
    %v459 = vpop.f32.mrb[0].mxu0
    %460 = vmatprep.mubr.f32.mxu0 0.0
    %461 = vmatmul.mubr.f32.gmra.mrb[0].mxu0 %v377
    %v462 = vpop.f32.mrb[0].mxu0
    %v463 = vadd.f32 0.0, %v462
    %v464 = vpop.f32.mrb[0].mxu0
    %465 = vmatprep.mubr.f32.mxu0 0.0
    %466 = vmatmul.mubr.f32.gmra.mrb[0].mxu0 %v379
    %v467 = vpop.f32.mrb[0].mxu0
    %v468 = vadd.f32 0.0, %v467
    %v469 = vpop.f32.mrb[0].mxu0
    %470 = vmatprep.mubr.f32.mxu0 0.0
    %471 = vmatmul.mubr.f32.gmra.mrb[0].mxu0 %v381
    %v472 = vpop.f32.mrb[0].mxu0
    %v473 = vadd.f32 0.0, %v472
    %v474 = vpop.f32.mrb[0].mxu0
    %475 = vdwg.mxu0
    %v476 = vmul.f32 %v458, 0.25
    %v477 = vmul.f32 %v463, 0.25
    %v478 = vmul.f32 %v468, 0.25
    %v479 = vmul.f32 %v473, 0.25
    %v480 = vadd.f32 %v476, %v248
    %v481 = vadd.f32 %v477, %v249
    %v482 = vadd.f32 %v478, %v250
    %v483 = vadd.f32 %v479, %v251
    %v484 = vsel %vm178, %v480, -inf
    %485 = vmax.xlane.f32.xlu0 %v484
    %v486 = vpop.xlane.xlu0 %485
    %v487 = vsel %vm178, %v481, -inf
    %488 = vmax.xlane.f32.xlu0 %v487
    %v489 = vpop.xlane.xlu0 %488
    %v490 = vsel %vm178, %v482, -inf
    %491 = vmax.xlane.f32.xlu0 %v490
    %v492 = vpop.xlane.xlu0 %491
    %v493 = vsel %vm178, %v483, -inf
    %494 = vmax.xlane.f32.xlu0 %v493
    %v495 = vpop.xlane.xlu0 %494
    %v496 = vsub.f32 %v480, %v486
    %v497 = vsub.f32 %v481, %v489
    %v498 = vsub.f32 %v482, %v492
    %v499 = vsub.f32 %v483, %v495
    %v500 = vmul.f32 %v496, 1.442695
    %v501 = vpow.pop %v500
    %v502 = vmul.f32 %v497, 1.442695
    %v503 = vpow.pop %v502
    %v504 = vmul.f32 %v498, 1.442695
    %v505 = vpow.pop %v504
    %v506 = vmul.f32 %v499, 1.442695
    %v507 = vpow.pop %v506
    %v508 = vsel %vm178, %v501, 0.0
    %509 = vadd.xlane.f32.xlu0 %v508
    %v510 = vpop.xlane.xlu0 %509
    %v511 = vsel %vm178, %v503, 0.0
    %512 = vadd.xlane.f32.xlu0 %v511
    %v513 = vpop.xlane.xlu0 %512
    %v514 = vsel %vm178, %v505, 0.0
    %515 = vadd.xlane.f32.xlu0 %v514
    %v516 = vpop.xlane.xlu0 %515
    %v517 = vsel %vm178, %v507, 0.0
    %518 = vadd.xlane.f32.xlu0 %v517
    %v519 = vpop.xlane.xlu0 %518
    %v520 = vrcp.pop %v510
    %v521 = vrcp.pop %v513
    %v522 = vrcp.pop %v516
    %v523 = vrcp.pop %v519
    %v524 = vmul.f32 %v501, %v520
    %v525 = vmul.f32 %v503, %v521
    %v526 = vmul.f32 %v505, %v522
    %v527 = vmul.f32 %v507, %v523
    %528 = vrot.lane.b32.xlu0 %v344, 64
    %v529 = vpop.permute.xlu0 %528
    %530 = vrot.lane.b32.xlu0 %v349, 64
    %v531 = vpop.permute.xlu0 %530
    %532 = vrot.lane.b32.xlu0 %v354, 64
    %v533 = vpop.permute.xlu0 %532
    %534 = vrot.lane.b32.xlu0 %v359, 64
    %v535 = vpop.permute.xlu0 %534
    %v541 = vsel %vm178, %v524, 0
    %v544 = vsel %vm178, %v525, 0
    %v547 = vsel %vm178, %v526, 0
    %v550 = vsel %vm178, %v527, 0
    %552 = vmatprep.subr.mxu0 0.0
    %553 = vmatpush1.msra.mxu0 %v529
    %554 = vmatprep.subr.mxu0 0.0
    %555 = vmatpush1.msra.mxu0 %v531
    %556 = vmatprep.subr.mxu0 0.0
    %557 = vmatpush1.msra.mxu0 %v533
    %558 = vmatprep.subr.mxu0 0.0
    %559 = vmatpush1.msra.mxu0 %v535
    %560 = vmatprep.subr.mxu0 0.0
    %561 = vmatpush1.msra.mxu0 0.0
    %562 = vmatprep.subr.mxu0 0.0
    %563 = vmatpush1.msra.mxu0 0.0
    %564 = vmatprep.subr.mxu0 0.0
    %565 = vmatpush1.msra.mxu0 0.0
    %566 = vmatprep.subr.mxu0 0.0
    %567 = vmatpush1.msra.mxu0 0.0
    %568 = vmatprep.subr.mxu0 0.0
    %569 = vmatpush1.msra.mxu0 0.0
    %570 = vmatprep.subr.mxu0 0.0
    %571 = vmatpush1.msra.mxu0 0.0
    %572 = vmatprep.subr.mxu0 0.0
    %573 = vmatpush1.msra.mxu0 0.0
    %574 = vmatprep.subr.mxu0 0.0
    %575 = vmatpush1.msra.mxu0 0.0
    %576 = vmatprep.subr.mxu0 0.0
    %577 = vmatpush1.msra.mxu0 0.0
    %578 = vmatprep.subr.mxu0 0.0
    %579 = vmatpush1.msra.mxu0 0.0
    %580 = vmatprep.subr.mxu0 0.0
    %581 = vmatpush1.msra.mxu0 0.0
    %582 = vmatprep.subr.mxu0 0.0
    %583 = vmatpush1.msra.mxu0 0.0
    %584 = vmatprep.subr.mxu0 0.0
    %585 = vmatpush1.msra.mxu0 0.0
    %586 = vmatprep.subr.mxu0 0.0
    %587 = vmatpush1.msra.mxu0 0.0
    %588 = vmatprep.subr.mxu0 0.0
    %589 = vmatpush1.msra.mxu0 0.0
    %590 = vmatprep.subr.mxu0 0.0
    %591 = vmatpush1.msra.mxu0 0.0
    %592 = vmatprep.subr.mxu0 0.0
    %593 = vmatpush1.msra.mxu0 0.0
    %594 = vmatprep.subr.mxu0 0.0
    %595 = vmatpush1.msra.mxu0 0.0
    %596 = vmatprep.subr.mxu0 0.0
    %597 = vmatpush1.msra.mxu0 0.0
    %598 = vmatprep.subr.mxu0 0.0
    %599 = vmatpush1.msra.mxu0 0.0
    %600 = vmatprep.subr.mxu0 0.0
    %601 = vmatpush1.msra.mxu0 0.0
    %602 = vmatprep.subr.mxu0 0.0
    %603 = vmatpush1.msra.mxu0 0.0
    %604 = vmatprep.subr.mxu0 0.0
    %605 = vmatpush1.msra.mxu0 0.0
    %606 = vmatprep.subr.mxu0 0.0
    %607 = vmatpush1.msra.mxu0 0.0
    %608 = vmatprep.subr.mxu0 0.0
    %609 = vmatpush1.msra.mxu0 0.0
    %610 = vmatprep.subr.mxu0 0.0
    %611 = vmatpush1.msra.mxu0 0.0
    %612 = vmatprep.subr.mxu0 0.0
    %613 = vmatpush1.msra.mxu0 0.0
    %614 = vmatprep.subr.mxu0 0.0
    %615 = vmatpush1.msra.mxu0 0.0
    %616 = vmatprep.mubr.f32.mxu0 0.0
    %617 = vmatmul.mubr.f32.gmra.mrb[0].mxu0 %v541
    %v618 = vpop.f32.mrb[0].mxu0
    %v619 = vadd.f32 0.0, %v618
    %v620 = vpop.f32.mrb[0].mxu0
    %621 = vmatprep.mubr.f32.mxu0 0.0
    %622 = vmatmul.mubr.f32.gmra.mrb[0].mxu0 %v544
    %v623 = vpop.f32.mrb[0].mxu0
    %v624 = vadd.f32 0.0, %v623
    %v625 = vpop.f32.mrb[0].mxu0
    %626 = vmatprep.mubr.f32.mxu0 0.0
    %627 = vmatmul.mubr.f32.gmra.mrb[0].mxu0 %v547
    %v628 = vpop.f32.mrb[0].mxu0
    %v629 = vadd.f32 0.0, %v628
    %v630 = vpop.f32.mrb[0].mxu0
    %631 = vmatprep.mubr.f32.mxu0 0.0
    %632 = vmatmul.mubr.f32.gmra.mrb[0].mxu0 %v550
    %v633 = vpop.f32.mrb[0].mxu0
    %v634 = vadd.f32 0.0, %v633
    %v635 = vpop.f32.mrb[0].mxu0
    %636 = vdwg.mxu0
    %637 = vrot.lane.b32.xlu0 %v344, 112
    %v638 = vpop.permute.xlu0 %637
    %639 = vrot.lane.b32.xlu0 %v349, 112
    %v640 = vpop.permute.xlu0 %639
    %641 = vrot.lane.b32.xlu0 %v354, 112
    %v642 = vpop.permute.xlu0 %641
    %643 = vrot.lane.b32.xlu0 %v359, 112
    %v644 = vpop.permute.xlu0 %643
    %645 = vrot.lane.b32.xlu0 %v344, 80
    %v646 = vpop.permute.xlu0 %645
    %647 = vrot.lane.b32.xlu0 %v349, 80
    %v648 = vpop.permute.xlu0 %647
    %649 = vrot.lane.b32.xlu0 %v354, 80
    %v650 = vpop.permute.xlu0 %649
    %651 = vrot.lane.b32.xlu0 %v359, 80
    %v652 = vpop.permute.xlu0 %651
    %v653 = vsel %vm374, %v638, 0
    %v655 = vsel %vm374, %v640, 0
    %v657 = vsel %vm374, %v642, 0
    %v659 = vsel %vm374, %v644, 0
    %v661 = vsel %vm374, %v646, 0
    %v663 = vsel %vm374, %v648, 0
    %v665 = vsel %vm374, %v650, 0
    %v667 = vsel %vm374, %v652, 0
    %669 = vmatprep.subr.mxu0 0.0
    %670 = vmatpush1.xpose.msra.mxu0 %v661
    %671 = vmatprep.subr.mxu0 0.0
    %672 = vmatpush1.xpose.msra.mxu0 %v663
    %673 = vmatprep.subr.mxu0 0.0
    %674 = vmatpush1.xpose.msra.mxu0 %v665
    %675 = vmatprep.subr.mxu0 0.0
    %676 = vmatpush1.xpose.msra.mxu0 %v667
    %677 = vmatprep.subr.mxu0 0.0
    %678 = vmatpush1.xpose.msra.mxu0 0.0
    %679 = vmatprep.subr.mxu0 0.0
    %680 = vmatpush1.xpose.msra.mxu0 0.0
    %681 = vmatprep.subr.mxu0 0.0
    %682 = vmatpush1.xpose.msra.mxu0 0.0
    %683 = vmatprep.subr.mxu0 0.0
    %684 = vmatpush1.xpose.msra.mxu0 0.0
    %685 = vmatprep.subr.mxu0 0.0
    %686 = vmatpush1.xpose.msra.mxu0 0.0
    %687 = vmatprep.subr.mxu0 0.0
    %688 = vmatpush1.xpose.msra.mxu0 0.0
    %689 = vmatprep.subr.mxu0 0.0
    %690 = vmatpush1.xpose.msra.mxu0 0.0
    %691 = vmatprep.subr.mxu0 0.0
    %692 = vmatpush1.xpose.msra.mxu0 0.0
    %693 = vmatprep.subr.mxu0 0.0
    %694 = vmatpush1.xpose.msra.mxu0 0.0
    %695 = vmatprep.subr.mxu0 0.0
    %696 = vmatpush1.xpose.msra.mxu0 0.0
    %697 = vmatprep.subr.mxu0 0.0
    %698 = vmatpush1.xpose.msra.mxu0 0.0
    %699 = vmatprep.subr.mxu0 0.0
    %700 = vmatpush1.xpose.msra.mxu0 0.0
    %701 = vmatprep.subr.mxu0 0.0
    %702 = vmatpush1.xpose.msra.mxu0 0.0
    %703 = vmatprep.subr.mxu0 0.0
    %704 = vmatpush1.xpose.msra.mxu0 0.0
    %705 = vmatprep.subr.mxu0 0.0
    %706 = vmatpush1.xpose.msra.mxu0 0.0
    %707 = vmatprep.subr.mxu0 0.0
    %708 = vmatpush1.xpose.msra.mxu0 0.0
    %709 = vmatprep.subr.mxu0 0.0
    %710 = vmatpush1.xpose.msra.mxu0 0.0
    %711 = vmatprep.subr.mxu0 0.0
    %712 = vmatpush1.xpose.msra.mxu0 0.0
    %713 = vmatprep.subr.mxu0 0.0
    %714 = vmatpush1.xpose.msra.mxu0 0.0
    %715 = vmatprep.subr.mxu0 0.0
    %716 = vmatpush1.xpose.msra.mxu0 0.0
    %717 = vmatprep.subr.mxu0 0.0
    %718 = vmatpush1.xpose.msra.mxu0 0.0
    %719 = vmatprep.subr.mxu0 0.0
    %720 = vmatpush1.xpose.msra.mxu0 0.0
    %721 = vmatprep.subr.mxu0 0.0
    %722 = vmatpush1.xpose.msra.mxu0 0.0
    %723 = vmatprep.subr.mxu0 0.0
    %724 = vmatpush1.xpose.msra.mxu0 0.0
    %725 = vmatprep.subr.mxu0 0.0
    %726 = vmatpush1.xpose.msra.mxu0 0.0
    %727 = vmatprep.subr.mxu0 0.0
    %728 = vmatpush1.xpose.msra.mxu0 0.0
    %729 = vmatprep.subr.mxu0 0.0
    %730 = vmatpush1.xpose.msra.mxu0 0.0
    %731 = vmatprep.subr.mxu0 0.0
    %732 = vmatpush1.xpose.msra.mxu0 0.0
    %733 = vmatprep.mubr.f32.mxu0 0.0
    %734 = vmatmul.mubr.f32.gmra.mrb[0].mxu0 %v653
    %v735 = vpop.f32.mrb[0].mxu0
    %v736 = vadd.f32 0.0, %v735
    %v737 = vpop.f32.mrb[0].mxu0
    %738 = vmatprep.mubr.f32.mxu0 0.0
    %739 = vmatmul.mubr.f32.gmra.mrb[0].mxu0 %v655
    %v740 = vpop.f32.mrb[0].mxu0
    %v741 = vadd.f32 0.0, %v740
    %v742 = vpop.f32.mrb[0].mxu0
    %743 = vmatprep.mubr.f32.mxu0 0.0
    %744 = vmatmul.mubr.f32.gmra.mrb[0].mxu0 %v657
    %v745 = vpop.f32.mrb[0].mxu0
    %v746 = vadd.f32 0.0, %v745
    %v747 = vpop.f32.mrb[0].mxu0
    %748 = vmatprep.mubr.f32.mxu0 0.0
    %749 = vmatmul.mubr.f32.gmra.mrb[0].mxu0 %v659
    %v750 = vpop.f32.mrb[0].mxu0
    %v751 = vadd.f32 0.0, %v750
    %v752 = vpop.f32.mrb[0].mxu0
    %753 = vdwg.mxu0
    %v754 = vmul.f32 %v736, 0.25
    %v755 = vmul.f32 %v741, 0.25
    %v756 = vmul.f32 %v746, 0.25
    %v757 = vmul.f32 %v751, 0.25
    %v758 = vadd.f32 %v754, %v248
    %v759 = vadd.f32 %v755, %v249
    %v760 = vadd.f32 %v756, %v250
    %v761 = vadd.f32 %v757, %v251
    %v762 = vsel %vm178, %v758, -inf
    %763 = vmax.xlane.f32.xlu0 %v762
    %v764 = vpop.xlane.xlu0 %763
    %v765 = vsel %vm178, %v759, -inf
    %766 = vmax.xlane.f32.xlu0 %v765
    %v767 = vpop.xlane.xlu0 %766
    %v768 = vsel %vm178, %v760, -inf
    %769 = vmax.xlane.f32.xlu0 %v768
    %v770 = vpop.xlane.xlu0 %769
    %v771 = vsel %vm178, %v761, -inf
    %772 = vmax.xlane.f32.xlu0 %v771
    %v773 = vpop.xlane.xlu0 %772
    %v774 = vsub.f32 %v758, %v764
    %v775 = vsub.f32 %v759, %v767
    %v776 = vsub.f32 %v760, %v770
    %v777 = vsub.f32 %v761, %v773
    %v778 = vmul.f32 %v774, 1.442695
    %v779 = vpow.pop %v778
    %v780 = vmul.f32 %v775, 1.442695
    %v781 = vpow.pop %v780
    %v782 = vmul.f32 %v776, 1.442695
    %v783 = vpow.pop %v782
    %v784 = vmul.f32 %v777, 1.442695
    %v785 = vpow.pop %v784
    %v786 = vsel %vm178, %v779, 0.0
    %787 = vadd.xlane.f32.xlu0 %v786
    %v788 = vpop.xlane.xlu0 %787
    %v789 = vsel %vm178, %v781, 0.0
    %790 = vadd.xlane.f32.xlu0 %v789
    %v791 = vpop.xlane.xlu0 %790
    %v792 = vsel %vm178, %v783, 0.0
    %793 = vadd.xlane.f32.xlu0 %v792
    %v794 = vpop.xlane.xlu0 %793
    %v795 = vsel %vm178, %v785, 0.0
    %796 = vadd.xlane.f32.xlu0 %v795
    %v797 = vpop.xlane.xlu0 %796
    %v798 = vrcp.pop %v788
    %v799 = vrcp.pop %v791
    %v800 = vrcp.pop %v794
    %v801 = vrcp.pop %v797
    %v802 = vmul.f32 %v779, %v798
    %v803 = vmul.f32 %v781, %v799
    %v804 = vmul.f32 %v783, %v800
    %v805 = vmul.f32 %v785, %v801
    %806 = vrot.lane.b32.xlu0 %v344, 48
    %v807 = vpop.permute.xlu0 %806
    %808 = vrot.lane.b32.xlu0 %v349, 48
    %v809 = vpop.permute.xlu0 %808
    %810 = vrot.lane.b32.xlu0 %v354, 48
    %v811 = vpop.permute.xlu0 %810
    %812 = vrot.lane.b32.xlu0 %v359, 48
    %v813 = vpop.permute.xlu0 %812
    %v819 = vsel %vm178, %v802, 0
    %v822 = vsel %vm178, %v803, 0
    %v825 = vsel %vm178, %v804, 0
    %v828 = vsel %vm178, %v805, 0
    %830 = vmatprep.subr.mxu0 0.0
    %831 = vmatpush1.msra.mxu0 %v807
    %832 = vmatprep.subr.mxu0 0.0
    %833 = vmatpush1.msra.mxu0 %v809
    %834 = vmatprep.subr.mxu0 0.0
    %835 = vmatpush1.msra.mxu0 %v811
    %836 = vmatprep.subr.mxu0 0.0
    %837 = vmatpush1.msra.mxu0 %v813
    %838 = vmatprep.subr.mxu0 0.0
    %839 = vmatpush1.msra.mxu0 0.0
    %840 = vmatprep.subr.mxu0 0.0
    %841 = vmatpush1.msra.mxu0 0.0
    %842 = vmatprep.subr.mxu0 0.0
    %843 = vmatpush1.msra.mxu0 0.0
    %844 = vmatprep.subr.mxu0 0.0
    %845 = vmatpush1.msra.mxu0 0.0
    %846 = vmatprep.subr.mxu0 0.0
    %847 = vmatpush1.msra.mxu0 0.0
    %848 = vmatprep.subr.mxu0 0.0
    %849 = vmatpush1.msra.mxu0 0.0
    %850 = vmatprep.subr.mxu0 0.0
    %851 = vmatpush1.msra.mxu0 0.0
    %852 = vmatprep.subr.mxu0 0.0
    %853 = vmatpush1.msra.mxu0 0.0
    %854 = vmatprep.subr.mxu0 0.0
    %855 = vmatpush1.msra.mxu0 0.0
    %856 = vmatprep.subr.mxu0 0.0
    %857 = vmatpush1.msra.mxu0 0.0
    %858 = vmatprep.subr.mxu0 0.0
    %859 = vmatpush1.msra.mxu0 0.0
    %860 = vmatprep.subr.mxu0 0.0
    %861 = vmatpush1.msra.mxu0 0.0
    %862 = vmatprep.subr.mxu0 0.0
    %863 = vmatpush1.msra.mxu0 0.0
    %864 = vmatprep.subr.mxu0 0.0
    %865 = vmatpush1.msra.mxu0 0.0
    %866 = vmatprep.subr.mxu0 0.0
    %867 = vmatpush1.msra.mxu0 0.0
    %868 = vmatprep.subr.mxu0 0.0
    %869 = vmatpush1.msra.mxu0 0.0
    %870 = vmatprep.subr.mxu0 0.0
    %871 = vmatpush1.msra.mxu0 0.0
    %872 = vmatprep.subr.mxu0 0.0
    %873 = vmatpush1.msra.mxu0 0.0
    %874 = vmatprep.subr.mxu0 0.0
    %875 = vmatpush1.msra.mxu0 0.0
    %876 = vmatprep.subr.mxu0 0.0
    %877 = vmatpush1.msra.mxu0 0.0
    %878 = vmatprep.subr.mxu0 0.0
    %879 = vmatpush1.msra.mxu0 0.0
    %880 = vmatprep.subr.mxu0 0.0
    %881 = vmatpush1.msra.mxu0 0.0
    %882 = vmatprep.subr.mxu0 0.0
    %883 = vmatpush1.msra.mxu0 0.0
    %884 = vmatprep.subr.mxu0 0.0
    %885 = vmatpush1.msra.mxu0 0.0
    %886 = vmatprep.subr.mxu0 0.0
    %887 = vmatpush1.msra.mxu0 0.0
    %888 = vmatprep.subr.mxu0 0.0
    %889 = vmatpush1.msra.mxu0 0.0
    %890 = vmatprep.subr.mxu0 0.0
    %891 = vmatpush1.msra.mxu0 0.0
    %892 = vmatprep.subr.mxu0 0.0
    %893 = vmatpush1.msra.mxu0 0.0
    %894 = vmatprep.mubr.f32.mxu0 0.0
    %895 = vmatmul.mubr.f32.gmra.mrb[0].mxu0 %v819
    %v896 = vpop.f32.mrb[0].mxu0
    %v897 = vadd.f32 0.0, %v896
    %v898 = vpop.f32.mrb[0].mxu0
    %899 = vmatprep.mubr.f32.mxu0 0.0
    %900 = vmatmul.mubr.f32.gmra.mrb[0].mxu0 %v822
    %v901 = vpop.f32.mrb[0].mxu0
    %v902 = vadd.f32 0.0, %v901
    %v903 = vpop.f32.mrb[0].mxu0
    %904 = vmatprep.mubr.f32.mxu0 0.0
    %905 = vmatmul.mubr.f32.gmra.mrb[0].mxu0 %v825
    %v906 = vpop.f32.mrb[0].mxu0
    %v907 = vadd.f32 0.0, %v906
    %v908 = vpop.f32.mrb[0].mxu0
    %909 = vmatprep.mubr.f32.mxu0 0.0
    %910 = vmatmul.mubr.f32.gmra.mrb[0].mxu0 %v828
    %v911 = vpop.f32.mrb[0].mxu0
    %v912 = vadd.f32 0.0, %v911
    %v913 = vpop.f32.mrb[0].mxu0
    %914 = vdwg.mxu0
    %919 = vrot.lane.b32.xlu0 %v897, 16
    %v920 = vpop.permute.xlu0 %919
    %921 = vrot.lane.b32.xlu0 %v902, 16
    %v922 = vpop.permute.xlu0 %921
    %923 = vrot.lane.b32.xlu0 %v907, 16
    %v924 = vpop.permute.xlu0 %923
    %925 = vrot.lane.b32.xlu0 %v912, 16
    %v926 = vpop.permute.xlu0 %925
    %v931 = vsel %vm374, %v619, %v920
    %v932 = vsel %vm374, %v624, %v922
    %v933 = vsel %vm374, %v629, %v924
    %v934 = vsel %vm374, %v634, %v926
    %v935 = vlaneseq
    %v936 = vshrl.u32 %v935, 7
    %v937 = vsub.s32 1, %v936
    %v938 = vrot.slane %v260, %v937
    %943 = vrot.lane.b32.xlu0 %v252, 32
    %v944 = vpop.permute.xlu0 %943
    %945 = vrot.lane.b32.xlu0 %v254, 32
    %v946 = vpop.permute.xlu0 %945
    %947 = vrot.lane.b32.xlu0 %v256, 32
    %v948 = vpop.permute.xlu0 %947
    %949 = vrot.lane.b32.xlu0 %v258, 32
    %v950 = vpop.permute.xlu0 %949
    %v956 = vsel %vm178, %v931, 0
    %v959 = vsel %vm178, %v932, 0
    %v962 = vsel %vm178, %v933, 0
    %v965 = vsel %vm178, %v934, 0
    %967 = vmatprep.subr.mxu0 0.0
    %968 = vmatpush1.msra.mxu0 %v944
    %969 = vmatprep.subr.mxu0 0.0
    %970 = vmatpush1.msra.mxu0 %v946
    %971 = vmatprep.subr.mxu0 0.0
    %972 = vmatpush1.msra.mxu0 %v948
    %973 = vmatprep.subr.mxu0 0.0
    %974 = vmatpush1.msra.mxu0 %v950
    %975 = vmatprep.subr.mxu0 0.0
    %976 = vmatpush1.msra.mxu0 0.0
    %977 = vmatprep.subr.mxu0 0.0
    %978 = vmatpush1.msra.mxu0 0.0
    %979 = vmatprep.subr.mxu0 0.0
    %980 = vmatpush1.msra.mxu0 0.0
    %981 = vmatprep.subr.mxu0 0.0
    %982 = vmatpush1.msra.mxu0 0.0
    %983 = vmatprep.subr.mxu0 0.0
    %984 = vmatpush1.msra.mxu0 0.0
    %985 = vmatprep.subr.mxu0 0.0
    %986 = vmatpush1.msra.mxu0 0.0
    %987 = vmatprep.subr.mxu0 0.0
    %988 = vmatpush1.msra.mxu0 0.0
    %989 = vmatprep.subr.mxu0 0.0
    %990 = vmatpush1.msra.mxu0 0.0
    %991 = vmatprep.subr.mxu0 0.0
    %992 = vmatpush1.msra.mxu0 0.0
    %993 = vmatprep.subr.mxu0 0.0
    %994 = vmatpush1.msra.mxu0 0.0
    %995 = vmatprep.subr.mxu0 0.0
    %996 = vmatpush1.msra.mxu0 0.0
    %997 = vmatprep.subr.mxu0 0.0
    %998 = vmatpush1.msra.mxu0 0.0
    %999 = vmatprep.subr.mxu0 0.0
    %1000 = vmatpush1.msra.mxu0 0.0
    %1001 = vmatprep.subr.mxu0 0.0
    %1002 = vmatpush1.msra.mxu0 0.0
    %1003 = vmatprep.subr.mxu0 0.0
    %1004 = vmatpush1.msra.mxu0 0.0
    %1005 = vmatprep.subr.mxu0 0.0
    %1006 = vmatpush1.msra.mxu0 0.0
    %1007 = vmatprep.subr.mxu0 0.0
    %1008 = vmatpush1.msra.mxu0 0.0
    %1009 = vmatprep.subr.mxu0 0.0
    %1010 = vmatpush1.msra.mxu0 0.0
    %1011 = vmatprep.subr.mxu0 0.0
    %1012 = vmatpush1.msra.mxu0 0.0
    %1013 = vmatprep.subr.mxu0 0.0
    %1014 = vmatpush1.msra.mxu0 0.0
    %1015 = vmatprep.subr.mxu0 0.0
    %1016 = vmatpush1.msra.mxu0 0.0
    %1017 = vmatprep.subr.mxu0 0.0
    %1018 = vmatpush1.msra.mxu0 0.0
    %1019 = vmatprep.subr.mxu0 0.0
    %1020 = vmatpush1.msra.mxu0 0.0
    %1021 = vmatprep.subr.mxu0 0.0
    %1022 = vmatpush1.msra.mxu0 0.0
    %1023 = vmatprep.subr.mxu0 0.0
    %1024 = vmatpush1.msra.mxu0 0.0
    %1025 = vmatprep.subr.mxu0 0.0
    %1026 = vmatpush1.msra.mxu0 0.0
    %1027 = vmatprep.subr.mxu0 0.0
    %1028 = vmatpush1.msra.mxu0 0.0
    %1029 = vmatprep.subr.mxu0 0.0
    %1030 = vmatpush1.msra.mxu0 0.0
    %1031 = vmatprep.mubr.f32.mxu0 0.0
    %1032 = vmatmul.mubr.f32.gmra.mrb[0].mxu0 %v956
    %v1033 = vpop.f32.mrb[0].mxu0
    %v1034 = vadd.f32 %v938, %v1033
    %v1035 = vpop.f32.mrb[0].mxu0
    %1036 = vmatprep.mubr.f32.mxu0 0.0
    %1037 = vmatmul.mubr.f32.gmra.mrb[0].mxu0 %v959
    %v1038 = vpop.f32.mrb[0].mxu0
    %v1039 = vadd.f32 %v938, %v1038
    %v1040 = vpop.f32.mrb[0].mxu0
    %1041 = vmatprep.mubr.f32.mxu0 0.0
    %1042 = vmatmul.mubr.f32.gmra.mrb[0].mxu0 %v962
    %v1043 = vpop.f32.mrb[0].mxu0
    %v1044 = vadd.f32 %v938, %v1043
    %v1045 = vpop.f32.mrb[0].mxu0
    %1046 = vmatprep.mubr.f32.mxu0 0.0
    %1047 = vmatmul.mubr.f32.gmra.mrb[0].mxu0 %v965
    %v1048 = vpop.f32.mrb[0].mxu0
    %v1049 = vadd.f32 %v938, %v1048
    %v1050 = vpop.f32.mrb[0].mxu0
    %1051 = vdwg.mxu0
    %v1052 = vadd.f32 %v1034, %v244
    %v1053 = vadd.f32 %v1039, %v245
    %v1054 = vadd.f32 %v1044, %v246
    %v1055 = vadd.f32 %v1049, %v247
    %v1056 = vsel %vm178, %v1052, 0.0
    %1057 = vadd.xlane.f32.xlu0 %v1056
    %v1058 = vpop.xlane.xlu0 %1057
    %v1059 = vsel %vm178, %v1053, 0.0
    %1060 = vadd.xlane.f32.xlu0 %v1059
    %v1061 = vpop.xlane.xlu0 %1060
    %v1062 = vsel %vm178, %v1054, 0.0
    %1063 = vadd.xlane.f32.xlu0 %v1062
    %v1064 = vpop.xlane.xlu0 %1063
    %v1065 = vsel %vm178, %v1055, 0.0
    %1066 = vadd.xlane.f32.xlu0 %v1065
    %v1067 = vpop.xlane.xlu0 %1066
    %v1068 = vmul.f32 %v1058, %v191
    %v1069 = vmul.f32 %v1061, %v191
    %v1070 = vmul.f32 %v1064, %v191
    %v1071 = vmul.f32 %v1067, %v191
    %v1072 = vsub.f32 %v1052, %v1068
    %v1073 = vsub.f32 %v1053, %v1069
    %v1074 = vsub.f32 %v1054, %v1070
    %v1075 = vsub.f32 %v1055, %v1071
    %v1076 = vmul.f32 %v1072, %v1072
    %v1077 = vmul.f32 %v1073, %v1073
    %v1078 = vmul.f32 %v1074, %v1074
    %v1079 = vmul.f32 %v1075, %v1075
    %v1080 = vsel %vm178, %v1076, 0.0
    %1081 = vadd.xlane.f32.xlu0 %v1080
    %v1082 = vpop.xlane.xlu0 %1081
    %v1083 = vsel %vm178, %v1077, 0.0
    %1084 = vadd.xlane.f32.xlu0 %v1083
    %v1085 = vpop.xlane.xlu0 %1084
    %v1086 = vsel %vm178, %v1078, 0.0
    %1087 = vadd.xlane.f32.xlu0 %v1086
    %v1088 = vpop.xlane.xlu0 %1087
    %v1089 = vsel %vm178, %v1079, 0.0
    %1090 = vadd.xlane.f32.xlu0 %v1089
    %v1091 = vpop.xlane.xlu0 %1090
    %v1092 = vmul.f32 %v1082, %v191
    %v1093 = vmul.f32 %v1085, %v191
    %v1094 = vmul.f32 %v1088, %v191
    %v1095 = vmul.f32 %v1091, %v191
    %v1096 = vadd.f32 %v1092, 1e-12
    %v1097 = vadd.f32 %v1093, 1e-12
    %v1098 = vadd.f32 %v1094, 1e-12
    %v1099 = vadd.f32 %v1095, 1e-12
    %v1100 = vrsqrt.pop %v1096
    %v1101 = vrsqrt.pop %v1097
    %v1102 = vrsqrt.pop %v1098
    %v1103 = vrsqrt.pop %v1099
    %v1104 = vmul.f32 %v1072, %v1100
    %v1105 = vmul.f32 %v1073, %v1101
    %v1106 = vmul.f32 %v1074, %v1102
    %v1107 = vmul.f32 %v1075, %v1103
    %v1108 = vlaneseq
    %v1109 = vshrl.u32 %v1108, 7
    %v1110 = vsub.s32 2, %v1109
    %v1111 = vrot.slane %v260, %v1110
    %v1112 = vmul.f32 %v1104, %v1111
    %v1113 = vmul.f32 %v1105, %v1111
    %v1114 = vmul.f32 %v1106, %v1111
    %v1115 = vmul.f32 %v1107, %v1111
    %v1116 = vlaneseq
    %v1117 = vshrl.u32 %v1116, 7
    %v1118 = vsub.s32 3, %v1117
    %v1119 = vrot.slane %v260, %v1118
    %v1120 = vadd.f32 %v1112, %v1119
    %v1121 = vadd.f32 %v1113, %v1119
    %v1122 = vadd.f32 %v1114, %v1119
    %v1123 = vadd.f32 %v1115, %v1119
    %v1124 = vlaneseq
    %v1125 = vshrl.u32 %v1124, 7
    %v1126 = vsub.s32 4, %v1125
    %v1127 = vrot.slane %v260, %v1126
    %v1129 = vsel %vm178, %v1120, 0
    %v1132 = vsel %vm178, %v1121, 0
    %v1135 = vsel %vm178, %v1122, 0
    %v1138 = vsel %vm178, %v1123, 0
    %1140 = vmatprep.subr.mxu0 0.0
    %1141 = vmatpush1.msra.mxu0 %v253
    %1142 = vmatprep.subr.mxu0 0.0
    %1143 = vmatpush1.msra.mxu0 %v255
    %1144 = vmatprep.subr.mxu0 0.0
    %1145 = vmatpush1.msra.mxu0 %v257
    %1146 = vmatprep.subr.mxu0 0.0
    %1147 = vmatpush1.msra.mxu0 %v259
    %1148 = vmatprep.subr.mxu0 0.0
    %1149 = vmatpush1.msra.mxu0 0.0
    %1150 = vmatprep.subr.mxu0 0.0
    %1151 = vmatpush1.msra.mxu0 0.0
    %1152 = vmatprep.subr.mxu0 0.0
    %1153 = vmatpush1.msra.mxu0 0.0
    %1154 = vmatprep.subr.mxu0 0.0
    %1155 = vmatpush1.msra.mxu0 0.0
    %1156 = vmatprep.subr.mxu0 0.0
    %1157 = vmatpush1.msra.mxu0 0.0
    %1158 = vmatprep.subr.mxu0 0.0
    %1159 = vmatpush1.msra.mxu0 0.0
    %1160 = vmatprep.subr.mxu0 0.0
    %1161 = vmatpush1.msra.mxu0 0.0
    %1162 = vmatprep.subr.mxu0 0.0
    %1163 = vmatpush1.msra.mxu0 0.0
    %1164 = vmatprep.subr.mxu0 0.0
    %1165 = vmatpush1.msra.mxu0 0.0
    %1166 = vmatprep.subr.mxu0 0.0
    %1167 = vmatpush1.msra.mxu0 0.0
    %1168 = vmatprep.subr.mxu0 0.0
    %1169 = vmatpush1.msra.mxu0 0.0
    %1170 = vmatprep.subr.mxu0 0.0
    %1171 = vmatpush1.msra.mxu0 0.0
    %1172 = vmatprep.subr.mxu0 0.0
    %1173 = vmatpush1.msra.mxu0 0.0
    %1174 = vmatprep.subr.mxu0 0.0
    %1175 = vmatpush1.msra.mxu0 0.0
    %1176 = vmatprep.subr.mxu0 0.0
    %1177 = vmatpush1.msra.mxu0 0.0
    %1178 = vmatprep.subr.mxu0 0.0
    %1179 = vmatpush1.msra.mxu0 0.0
    %1180 = vmatprep.subr.mxu0 0.0
    %1181 = vmatpush1.msra.mxu0 0.0
    %1182 = vmatprep.subr.mxu0 0.0
    %1183 = vmatpush1.msra.mxu0 0.0
    %1184 = vmatprep.subr.mxu0 0.0
    %1185 = vmatpush1.msra.mxu0 0.0
    %1186 = vmatprep.subr.mxu0 0.0
    %1187 = vmatpush1.msra.mxu0 0.0
    %1188 = vmatprep.subr.mxu0 0.0
    %1189 = vmatpush1.msra.mxu0 0.0
    %1190 = vmatprep.subr.mxu0 0.0
    %1191 = vmatpush1.msra.mxu0 0.0
    %1192 = vmatprep.subr.mxu0 0.0
    %1193 = vmatpush1.msra.mxu0 0.0
    %1194 = vmatprep.subr.mxu0 0.0
    %1195 = vmatpush1.msra.mxu0 0.0
    %1196 = vmatprep.subr.mxu0 0.0
    %1197 = vmatpush1.msra.mxu0 0.0
    %1198 = vmatprep.subr.mxu0 0.0
    %1199 = vmatpush1.msra.mxu0 0.0
    %1200 = vmatprep.subr.mxu0 0.0
    %1201 = vmatpush1.msra.mxu0 0.0
    %1202 = vmatprep.subr.mxu0 0.0
    %1203 = vmatpush1.msra.mxu0 0.0
    %1204 = vmatprep.mubr.f32.mxu0 0.0
    %1205 = vmatmul.mubr.f32.gmra.mrb[0].mxu0 %v1129
    %v1206 = vpop.f32.mrb[0].mxu0
    %v1207 = vadd.f32 %v1127, %v1206
    %v1208 = vpop.f32.mrb[0].mxu0
    %1209 = vmatprep.mubr.f32.mxu0 0.0
    %1210 = vmatmul.mubr.f32.gmra.mrb[0].mxu0 %v1132
    %v1211 = vpop.f32.mrb[0].mxu0
    %v1212 = vadd.f32 %v1127, %v1211
    %v1213 = vpop.f32.mrb[0].mxu0
    %1214 = vmatprep.mubr.f32.mxu0 0.0
    %1215 = vmatmul.mubr.f32.gmra.mrb[0].mxu0 %v1135
    %v1216 = vpop.f32.mrb[0].mxu0
    %v1217 = vadd.f32 %v1127, %v1216
    %v1218 = vpop.f32.mrb[0].mxu0
    %1219 = vmatprep.mubr.f32.mxu0 0.0
    %1220 = vmatmul.mubr.f32.gmra.mrb[0].mxu0 %v1138
    %v1221 = vpop.f32.mrb[0].mxu0
    %v1222 = vadd.f32 %v1127, %v1221
    %v1223 = vpop.f32.mrb[0].mxu0
    %1224 = vdwg.mxu0
    %v1225 = vmul.f32 %v1207, %v1207
    %v1226 = vmul.f32 %v1212, %v1212
    %v1227 = vmul.f32 %v1217, %v1217
    %v1228 = vmul.f32 %v1222, %v1222
    %v1229 = vmul.f32 %v1207, %v1225
    %v1230 = vmul.f32 %v1212, %v1226
    %v1231 = vmul.f32 %v1217, %v1227
    %v1232 = vmul.f32 %v1222, %v1228
    %v1233 = vmul.f32 %v1229, 0.044715
    %v1234 = vmul.f32 %v1230, 0.044715
    %v1235 = vmul.f32 %v1231, 0.044715
    %v1236 = vmul.f32 %v1232, 0.044715
    %v1237 = vadd.f32 %v1207, %v1233
    %v1238 = vadd.f32 %v1212, %v1234
    %v1239 = vadd.f32 %v1217, %v1235
    %v1240 = vadd.f32 %v1222, %v1236
    %v1241 = vmul.f32 %v1237, 0.7978846
    %v1242 = vmul.f32 %v1238, 0.7978846
    %v1243 = vmul.f32 %v1239, 0.7978846
    %v1244 = vmul.f32 %v1240, 0.7978846
    %v1245 = vtanh.pop %v1241
    %v1246 = vtanh.pop %v1242
    %v1247 = vtanh.pop %v1243
    %v1248 = vtanh.pop %v1244
    %v1249 = vadd.f32 %v1245, 1.0
    %v1250 = vadd.f32 %v1246, 1.0
    %v1251 = vadd.f32 %v1247, 1.0
    %v1252 = vadd.f32 %v1248, 1.0
    %v1253 = vmul.f32 %v1249, 0.5
    %v1254 = vmul.f32 %v1250, 0.5
    %v1255 = vmul.f32 %v1251, 0.5
    %v1256 = vmul.f32 %v1252, 0.5
    %v1257 = vmul.f32 %v1207, %v1253
    %v1258 = vmul.f32 %v1212, %v1254
    %v1259 = vmul.f32 %v1217, %v1255
    %v1260 = vmul.f32 %v1222, %v1256
    %v1261 = vld [vmem:[%s4] sm:$0xff]
    %v1262 = vld [vmem:[%s4 + $0x8] sm:$0xff]
    %v1263 = vld [vmem:[%s4 + $0x10] sm:$0xff]
    %v1264 = vld [vmem:[%s4 + $0x18] sm:$0xff]
    %v1265 = vld [vmem:[%s4 + $0x20] sm:$0xff]
    %v1266 = vld [vmem:[%s4 + $0x28] sm:$0xff]
    %v1267 = vld [vmem:[%s4 + $0x30] sm:$0xff]
    %v1268 = vld [vmem:[%s4 + $0x38] sm:$0xff]
    %v1269 = vlaneseq
    %v1270 = vshrl.u32 %v1269, 7
    %v1271 = vsub.s32 5, %v1270
    %v1272 = vrot.slane %v260, %v1271
    %vm1273 = vcmask 523264
    %v1275 = vsel %vm1273, %v1257, 0
    %v1278 = vsel %vm1273, %v1258, 0
    %v1281 = vsel %vm1273, %v1259, 0
    %v1284 = vsel %vm1273, %v1260, 0
    %1286 = vmatprep.subr.mxu0 0.0
    %1287 = vmatpush1.msra.mxu0 %v1261
    %1288 = vmatprep.subr.mxu0 0.0
    %1289 = vmatpush1.msra.mxu0 %v1262
    %1290 = vmatprep.subr.mxu0 0.0
    %1291 = vmatpush1.msra.mxu0 %v1263
    %1292 = vmatprep.subr.mxu0 0.0
    %1293 = vmatpush1.msra.mxu0 %v1264
    %1294 = vmatprep.subr.mxu0 0.0
    %1295 = vmatpush1.msra.mxu0 %v1265
    %1296 = vmatprep.subr.mxu0 0.0
    %1297 = vmatpush1.msra.mxu0 %v1266
    %1298 = vmatprep.subr.mxu0 0.0
    %1299 = vmatpush1.msra.mxu0 %v1267
    %1300 = vmatprep.subr.mxu0 0.0
    %1301 = vmatpush1.msra.mxu0 %v1268
    %1302 = vmatprep.subr.mxu0 0.0
    %1303 = vmatpush1.msra.mxu0 0.0
    %1304 = vmatprep.subr.mxu0 0.0
    %1305 = vmatpush1.msra.mxu0 0.0
    %1306 = vmatprep.subr.mxu0 0.0
    %1307 = vmatpush1.msra.mxu0 0.0
    %1308 = vmatprep.subr.mxu0 0.0
    %1309 = vmatpush1.msra.mxu0 0.0
    %1310 = vmatprep.subr.mxu0 0.0
    %1311 = vmatpush1.msra.mxu0 0.0
    %1312 = vmatprep.subr.mxu0 0.0
    %1313 = vmatpush1.msra.mxu0 0.0
    %1314 = vmatprep.subr.mxu0 0.0
    %1315 = vmatpush1.msra.mxu0 0.0
    %1316 = vmatprep.subr.mxu0 0.0
    %1317 = vmatpush1.msra.mxu0 0.0
    %1318 = vmatprep.subr.mxu0 0.0
    %1319 = vmatpush1.msra.mxu0 0.0
    %1320 = vmatprep.subr.mxu0 0.0
    %1321 = vmatpush1.msra.mxu0 0.0
    %1322 = vmatprep.subr.mxu0 0.0
    %1323 = vmatpush1.msra.mxu0 0.0
    %1324 = vmatprep.subr.mxu0 0.0
    %1325 = vmatpush1.msra.mxu0 0.0
    %1326 = vmatprep.subr.mxu0 0.0
    %1327 = vmatpush1.msra.mxu0 0.0
    %1328 = vmatprep.subr.mxu0 0.0
    %1329 = vmatpush1.msra.mxu0 0.0
    %1330 = vmatprep.subr.mxu0 0.0
    %1331 = vmatpush1.msra.mxu0 0.0
    %1332 = vmatprep.subr.mxu0 0.0
    %1333 = vmatpush1.msra.mxu0 0.0
    %1334 = vmatprep.subr.mxu0 0.0
    %1335 = vmatpush1.msra.mxu0 0.0
    %1336 = vmatprep.subr.mxu0 0.0
    %1337 = vmatpush1.msra.mxu0 0.0
    %1338 = vmatprep.subr.mxu0 0.0
    %1339 = vmatpush1.msra.mxu0 0.0
    %1340 = vmatprep.subr.mxu0 0.0
    %1341 = vmatpush1.msra.mxu0 0.0
    %1342 = vmatprep.subr.mxu0 0.0
    %1343 = vmatpush1.msra.mxu0 0.0
    %1344 = vmatprep.subr.mxu0 0.0
    %1345 = vmatpush1.msra.mxu0 0.0
    %1346 = vmatprep.subr.mxu0 0.0
    %1347 = vmatpush1.msra.mxu0 0.0
    %1348 = vmatprep.subr.mxu0 0.0
    %1349 = vmatpush1.msra.mxu0 0.0
    %1350 = vmatprep.mubr.f32.mxu0 0.0
    %1351 = vmatmul.mubr.f32.gmra.mrb[0].mxu0 %v1275
    %v1352 = vpop.f32.mrb[0].mxu0
    %v1353 = vadd.f32 %v1272, %v1352
    %v1354 = vpop.f32.mrb[0].mxu0
    %1355 = vmatprep.mubr.f32.mxu0 0.0
    %1356 = vmatmul.mubr.f32.gmra.mrb[0].mxu0 %v1278
    %v1357 = vpop.f32.mrb[0].mxu0
    %v1358 = vadd.f32 %v1272, %v1357
    %v1359 = vpop.f32.mrb[0].mxu0
    %1360 = vmatprep.mubr.f32.mxu0 0.0
    %1361 = vmatmul.mubr.f32.gmra.mrb[0].mxu0 %v1281
    %v1362 = vpop.f32.mrb[0].mxu0
    %v1363 = vadd.f32 %v1272, %v1362
    %v1364 = vpop.f32.mrb[0].mxu0
    %1365 = vmatprep.mubr.f32.mxu0 0.0
    %1366 = vmatmul.mubr.f32.gmra.mrb[0].mxu0 %v1284
    %v1367 = vpop.f32.mrb[0].mxu0
    %v1368 = vadd.f32 %v1272, %v1367
    %v1369 = vpop.f32.mrb[0].mxu0
    %1370 = vdwg.mxu0
    %v1371 = vadd.f32 %v1353, %v1120
    %v1372 = vadd.f32 %v1358, %v1121
    %v1373 = vadd.f32 %v1363, %v1122
    %v1374 = vadd.f32 %v1368, %v1123
    %v1375 = vsel %vm178, %v1371, 0.0
    %1376 = vadd.xlane.f32.xlu0 %v1375
    %v1377 = vpop.xlane.xlu0 %1376
    %v1378 = vsel %vm178, %v1372, 0.0
    %1379 = vadd.xlane.f32.xlu0 %v1378
    %v1380 = vpop.xlane.xlu0 %1379
    %v1381 = vsel %vm178, %v1373, 0.0
    %1382 = vadd.xlane.f32.xlu0 %v1381
    %v1383 = vpop.xlane.xlu0 %1382
    %v1384 = vsel %vm178, %v1374, 0.0
    %1385 = vadd.xlane.f32.xlu0 %v1384
    %v1386 = vpop.xlane.xlu0 %1385
    %v1387 = vmul.f32 %v1377, %v191
    %v1388 = vmul.f32 %v1380, %v191
    %v1389 = vmul.f32 %v1383, %v191
    %v1390 = vmul.f32 %v1386, %v191
    %v1391 = vsub.f32 %v1371, %v1387
    %v1392 = vsub.f32 %v1372, %v1388
    %v1393 = vsub.f32 %v1373, %v1389
    %v1394 = vsub.f32 %v1374, %v1390
    %v1395 = vmul.f32 %v1391, %v1391
    %v1396 = vmul.f32 %v1392, %v1392
    %v1397 = vmul.f32 %v1393, %v1393
    %v1398 = vmul.f32 %v1394, %v1394
    %v1399 = vsel %vm178, %v1395, 0.0
    %1400 = vadd.xlane.f32.xlu0 %v1399
    %v1401 = vpop.xlane.xlu0 %1400
    %v1402 = vsel %vm178, %v1396, 0.0
    %1403 = vadd.xlane.f32.xlu0 %v1402
    %v1404 = vpop.xlane.xlu0 %1403
    %v1405 = vsel %vm178, %v1397, 0.0
    %1406 = vadd.xlane.f32.xlu0 %v1405
    %v1407 = vpop.xlane.xlu0 %1406
    %v1408 = vsel %vm178, %v1398, 0.0
    %1409 = vadd.xlane.f32.xlu0 %v1408
    %v1410 = vpop.xlane.xlu0 %1409
    %v1411 = vmul.f32 %v1401, %v191
    %v1412 = vmul.f32 %v1404, %v191
    %v1413 = vmul.f32 %v1407, %v191
    %v1414 = vmul.f32 %v1410, %v191
    %v1415 = vadd.f32 %v1411, 1e-12
    %v1416 = vadd.f32 %v1412, 1e-12
    %v1417 = vadd.f32 %v1413, 1e-12
    %v1418 = vadd.f32 %v1414, 1e-12
    %v1419 = vrsqrt.pop %v1415
    %v1420 = vrsqrt.pop %v1416
    %v1421 = vrsqrt.pop %v1417
    %v1422 = vrsqrt.pop %v1418
    %v1423 = vmul.f32 %v1391, %v1419
    %v1424 = vmul.f32 %v1392, %v1420
    %v1425 = vmul.f32 %v1393, %v1421
    %v1426 = vmul.f32 %v1394, %v1422
    %v1427 = vlaneseq
    %v1428 = vshrl.u32 %v1427, 7
    %v1429 = vsub.s32 6, %v1428
    %v1430 = vrot.slane %v260, %v1429
    %v1431 = vmul.f32 %v1423, %v1430
    %v1432 = vmul.f32 %v1424, %v1430
    %v1433 = vmul.f32 %v1425, %v1430
    %v1434 = vmul.f32 %v1426, %v1430
    %v1435 = vlaneseq
    %v1436 = vshrl.u32 %v1435, 7
    %v1437 = vsub.s32 7, %v1436
    %v1438 = vrot.slane %v260, %v1437
    %v1439 = vadd.f32 %v1431, %v1438
    %v1440 = vadd.f32 %v1432, %v1438
    %v1441 = vadd.f32 %v1433, %v1438
    %v1442 = vadd.f32 %v1434, %v1438
    %s1443 = scalar_lea.vmem %s3, 64
    %v1444 = vld [vmem:[%s1443] sm:$0xff]
    %v1445 = vld [vmem:[%s1443 + $0x8] sm:$0xff]
    %v1446 = vld [vmem:[%s1443 + $0x10] sm:$0xff]
    %v1447 = vld [vmem:[%s1443 + $0x18] sm:$0xff]
    %v1448 = vld [vmem:[%s1443 + $0x20] sm:$0xff]
    %v1449 = vld [vmem:[%s1443 + $0x28] sm:$0xff]
    %v1450 = vld [vmem:[%s1443 + $0x30] sm:$0xff]
    %v1451 = vld [vmem:[%s1443 + $0x38] sm:$0xff]
    %s1452 = scalar_lea.vmem %s5, 8
    %v1453 = vld [vmem:[%s1452] sm:$0xff]
    %v1454 = vlaneseq
    %v1455 = vshrl.u32 %v1454, 7
    %v1456 = vsub.s32 0, %v1455
    %v1457 = vrot.slane %v1453, %v1456
    %v1459 = vsel %vm178, %v1439, 0
    %v1462 = vsel %vm178, %v1440, 0
    %v1465 = vsel %vm178, %v1441, 0
    %v1468 = vsel %vm178, %v1442, 0
    %1470 = vmatprep.subr.mxu0 0.0
    %1471 = vmatpush1.msra.mxu0 %v1444
    %1472 = vmatprep.subr.mxu0 0.0
    %1473 = vmatpush1.msra.mxu0 %v1446
    %1474 = vmatprep.subr.mxu0 0.0
    %1475 = vmatpush1.msra.mxu0 %v1448
    %1476 = vmatprep.subr.mxu0 0.0
    %1477 = vmatpush1.msra.mxu0 %v1450
    %1478 = vmatprep.subr.mxu0 0.0
    %1479 = vmatpush1.msra.mxu0 0.0
    %1480 = vmatprep.subr.mxu0 0.0
    %1481 = vmatpush1.msra.mxu0 0.0
    %1482 = vmatprep.subr.mxu0 0.0
    %1483 = vmatpush1.msra.mxu0 0.0
    %1484 = vmatprep.subr.mxu0 0.0
    %1485 = vmatpush1.msra.mxu0 0.0
    %1486 = vmatprep.subr.mxu0 0.0
    %1487 = vmatpush1.msra.mxu0 0.0
    %1488 = vmatprep.subr.mxu0 0.0
    %1489 = vmatpush1.msra.mxu0 0.0
    %1490 = vmatprep.subr.mxu0 0.0
    %1491 = vmatpush1.msra.mxu0 0.0
    %1492 = vmatprep.subr.mxu0 0.0
    %1493 = vmatpush1.msra.mxu0 0.0
    %1494 = vmatprep.subr.mxu0 0.0
    %1495 = vmatpush1.msra.mxu0 0.0
    %1496 = vmatprep.subr.mxu0 0.0
    %1497 = vmatpush1.msra.mxu0 0.0
    %1498 = vmatprep.subr.mxu0 0.0
    %1499 = vmatpush1.msra.mxu0 0.0
    %1500 = vmatprep.subr.mxu0 0.0
    %1501 = vmatpush1.msra.mxu0 0.0
    %1502 = vmatprep.subr.mxu0 0.0
    %1503 = vmatpush1.msra.mxu0 0.0
    %1504 = vmatprep.subr.mxu0 0.0
    %1505 = vmatpush1.msra.mxu0 0.0
    %1506 = vmatprep.subr.mxu0 0.0
    %1507 = vmatpush1.msra.mxu0 0.0
    %1508 = vmatprep.subr.mxu0 0.0
    %1509 = vmatpush1.msra.mxu0 0.0
    %1510 = vmatprep.subr.mxu0 0.0
    %1511 = vmatpush1.msra.mxu0 0.0
    %1512 = vmatprep.subr.mxu0 0.0
    %1513 = vmatpush1.msra.mxu0 0.0
    %1514 = vmatprep.subr.mxu0 0.0
    %1515 = vmatpush1.msra.mxu0 0.0
    %1516 = vmatprep.subr.mxu0 0.0
    %1517 = vmatpush1.msra.mxu0 0.0
    %1518 = vmatprep.subr.mxu0 0.0
    %1519 = vmatpush1.msra.mxu0 0.0
    %1520 = vmatprep.subr.mxu0 0.0
    %1521 = vmatpush1.msra.mxu0 0.0
    %1522 = vmatprep.subr.mxu0 0.0
    %1523 = vmatpush1.msra.mxu0 0.0
    %1524 = vmatprep.subr.mxu0 0.0
    %1525 = vmatpush1.msra.mxu0 0.0
    %1526 = vmatprep.subr.mxu0 0.0
    %1527 = vmatpush1.msra.mxu0 0.0
    %1528 = vmatprep.subr.mxu0 0.0
    %1529 = vmatpush1.msra.mxu0 0.0
    %1530 = vmatprep.subr.mxu0 0.0
    %1531 = vmatpush1.msra.mxu0 0.0
    %1532 = vmatprep.subr.mxu0 0.0
    %1533 = vmatpush1.msra.mxu0 0.0
    %1534 = vmatprep.mubr.f32.mxu0 0.0
    %1535 = vmatmul.mubr.f32.gmra.mrb[0].mxu0 %v1459
    %v1536 = vpop.f32.mrb[0].mxu0
    %v1537 = vadd.f32 %v1457, %v1536
    %v1538 = vpop.f32.mrb[0].mxu0
    %1539 = vmatprep.mubr.f32.mxu0 0.0
    %1540 = vmatmul.mubr.f32.gmra.mrb[0].mxu0 %v1462
    %v1541 = vpop.f32.mrb[0].mxu0
    %v1542 = vadd.f32 %v1457, %v1541
    %v1543 = vpop.f32.mrb[0].mxu0
    %1544 = vmatprep.mubr.f32.mxu0 0.0
    %1545 = vmatmul.mubr.f32.gmra.mrb[0].mxu0 %v1465
    %v1546 = vpop.f32.mrb[0].mxu0
    %v1547 = vadd.f32 %v1457, %v1546
    %v1548 = vpop.f32.mrb[0].mxu0
    %1549 = vmatprep.mubr.f32.mxu0 0.0
    %1550 = vmatmul.mubr.f32.gmra.mrb[0].mxu0 %v1468
    %v1551 = vpop.f32.mrb[0].mxu0
    %v1552 = vadd.f32 %v1457, %v1551
    %v1553 = vpop.f32.mrb[0].mxu0
    %1554 = vdwg.mxu0
    %1559 = vrot.lane.b32.xlu0 %v1537, 96
    %v1560 = vpop.permute.xlu0 %1559
    %1561 = vrot.lane.b32.xlu0 %v1542, 96
    %v1562 = vpop.permute.xlu0 %1561
    %1563 = vrot.lane.b32.xlu0 %v1547, 96
    %v1564 = vpop.permute.xlu0 %1563
    %1565 = vrot.lane.b32.xlu0 %v1552, 96
    %v1566 = vpop.permute.xlu0 %1565
    %v1567 = vsel %vm374, %v1537, 0
    %v1569 = vsel %vm374, %v1542, 0
    %v1571 = vsel %vm374, %v1547, 0
    %v1573 = vsel %vm374, %v1552, 0
    %v1575 = vsel %vm374, %v1560, 0
    %v1577 = vsel %vm374, %v1562, 0
    %v1579 = vsel %vm374, %v1564, 0
    %v1581 = vsel %vm374, %v1566, 0
    %1583 = vmatprep.subr.mxu0 0.0
    %1584 = vmatpush1.xpose.msra.mxu0 %v1575
    %1585 = vmatprep.subr.mxu0 0.0
    %1586 = vmatpush1.xpose.msra.mxu0 %v1577
    %1587 = vmatprep.subr.mxu0 0.0
    %1588 = vmatpush1.xpose.msra.mxu0 %v1579
    %1589 = vmatprep.subr.mxu0 0.0
    %1590 = vmatpush1.xpose.msra.mxu0 %v1581
    %1591 = vmatprep.subr.mxu0 0.0
    %1592 = vmatpush1.xpose.msra.mxu0 0.0
    %1593 = vmatprep.subr.mxu0 0.0
    %1594 = vmatpush1.xpose.msra.mxu0 0.0
    %1595 = vmatprep.subr.mxu0 0.0
    %1596 = vmatpush1.xpose.msra.mxu0 0.0
    %1597 = vmatprep.subr.mxu0 0.0
    %1598 = vmatpush1.xpose.msra.mxu0 0.0
    %1599 = vmatprep.subr.mxu0 0.0
    %1600 = vmatpush1.xpose.msra.mxu0 0.0
    %1601 = vmatprep.subr.mxu0 0.0
    %1602 = vmatpush1.xpose.msra.mxu0 0.0
    %1603 = vmatprep.subr.mxu0 0.0
    %1604 = vmatpush1.xpose.msra.mxu0 0.0
    %1605 = vmatprep.subr.mxu0 0.0
    %1606 = vmatpush1.xpose.msra.mxu0 0.0
    %1607 = vmatprep.subr.mxu0 0.0
    %1608 = vmatpush1.xpose.msra.mxu0 0.0
    %1609 = vmatprep.subr.mxu0 0.0
    %1610 = vmatpush1.xpose.msra.mxu0 0.0
    %1611 = vmatprep.subr.mxu0 0.0
    %1612 = vmatpush1.xpose.msra.mxu0 0.0
    %1613 = vmatprep.subr.mxu0 0.0
    %1614 = vmatpush1.xpose.msra.mxu0 0.0
    %1615 = vmatprep.subr.mxu0 0.0
    %1616 = vmatpush1.xpose.msra.mxu0 0.0
    %1617 = vmatprep.subr.mxu0 0.0
    %1618 = vmatpush1.xpose.msra.mxu0 0.0
    %1619 = vmatprep.subr.mxu0 0.0
    %1620 = vmatpush1.xpose.msra.mxu0 0.0
    %1621 = vmatprep.subr.mxu0 0.0
    %1622 = vmatpush1.xpose.msra.mxu0 0.0
    %1623 = vmatprep.subr.mxu0 0.0
    %1624 = vmatpush1.xpose.msra.mxu0 0.0
    %1625 = vmatprep.subr.mxu0 0.0
    %1626 = vmatpush1.xpose.msra.mxu0 0.0
    %1627 = vmatprep.subr.mxu0 0.0
    %1628 = vmatpush1.xpose.msra.mxu0 0.0
    %1629 = vmatprep.subr.mxu0 0.0
    %1630 = vmatpush1.xpose.msra.mxu0 0.0
    %1631 = vmatprep.subr.mxu0 0.0
    %1632 = vmatpush1.xpose.msra.mxu0 0.0
    %1633 = vmatprep.subr.mxu0 0.0
    %1634 = vmatpush1.xpose.msra.mxu0 0.0
    %1635 = vmatprep.subr.mxu0 0.0
    %1636 = vmatpush1.xpose.msra.mxu0 0.0
    %1637 = vmatprep.subr.mxu0 0.0
    %1638 = vmatpush1.xpose.msra.mxu0 0.0
    %1639 = vmatprep.subr.mxu0 0.0
    %1640 = vmatpush1.xpose.msra.mxu0 0.0
    %1641 = vmatprep.subr.mxu0 0.0
    %1642 = vmatpush1.xpose.msra.mxu0 0.0
    %1643 = vmatprep.subr.mxu0 0.0
    %1644 = vmatpush1.xpose.msra.mxu0 0.0
    %1645 = vmatprep.subr.mxu0 0.0
    %1646 = vmatpush1.xpose.msra.mxu0 0.0
    %1647 = vmatprep.mubr.f32.mxu0 0.0
    %1648 = vmatmul.mubr.f32.gmra.mrb[0].mxu0 %v1567
    %v1649 = vpop.f32.mrb[0].mxu0
    %v1650 = vadd.f32 0.0, %v1649
    %v1651 = vpop.f32.mrb[0].mxu0
    %1652 = vmatprep.mubr.f32.mxu0 0.0
    %1653 = vmatmul.mubr.f32.gmra.mrb[0].mxu0 %v1569
    %v1654 = vpop.f32.mrb[0].mxu0
    %v1655 = vadd.f32 0.0, %v1654
    %v1656 = vpop.f32.mrb[0].mxu0
    %1657 = vmatprep.mubr.f32.mxu0 0.0
    %1658 = vmatmul.mubr.f32.gmra.mrb[0].mxu0 %v1571
    %v1659 = vpop.f32.mrb[0].mxu0
    %v1660 = vadd.f32 0.0, %v1659
    %v1661 = vpop.f32.mrb[0].mxu0
    %1662 = vmatprep.mubr.f32.mxu0 0.0
    %1663 = vmatmul.mubr.f32.gmra.mrb[0].mxu0 %v1573
    %v1664 = vpop.f32.mrb[0].mxu0
    %v1665 = vadd.f32 0.0, %v1664
    %v1666 = vpop.f32.mrb[0].mxu0
    %1667 = vdwg.mxu0
    %v1668 = vmul.f32 %v1650, 0.25
    %v1669 = vmul.f32 %v1655, 0.25
    %v1670 = vmul.f32 %v1660, 0.25
    %v1671 = vmul.f32 %v1665, 0.25
    %v1672 = vadd.f32 %v1668, %v248
    %v1673 = vadd.f32 %v1669, %v249
    %v1674 = vadd.f32 %v1670, %v250
    %v1675 = vadd.f32 %v1671, %v251
    %v1676 = vsel %vm178, %v1672, -inf
    %1677 = vmax.xlane.f32.xlu0 %v1676
    %v1678 = vpop.xlane.xlu0 %1677
    %v1679 = vsel %vm178, %v1673, -inf
    %1680 = vmax.xlane.f32.xlu0 %v1679
    %v1681 = vpop.xlane.xlu0 %1680
    %v1682 = vsel %vm178, %v1674, -inf
    %1683 = vmax.xlane.f32.xlu0 %v1682
    %v1684 = vpop.xlane.xlu0 %1683
    %v1685 = vsel %vm178, %v1675, -inf
    %1686 = vmax.xlane.f32.xlu0 %v1685
    %v1687 = vpop.xlane.xlu0 %1686
    %v1688 = vsub.f32 %v1672, %v1678
    %v1689 = vsub.f32 %v1673, %v1681
    %v1690 = vsub.f32 %v1674, %v1684
    %v1691 = vsub.f32 %v1675, %v1687
    %v1692 = vmul.f32 %v1688, 1.442695
    %v1693 = vpow.pop %v1692
    %v1694 = vmul.f32 %v1689, 1.442695
    %v1695 = vpow.pop %v1694
    %v1696 = vmul.f32 %v1690, 1.442695
    %v1697 = vpow.pop %v1696
    %v1698 = vmul.f32 %v1691, 1.442695
    %v1699 = vpow.pop %v1698
    %v1700 = vsel %vm178, %v1693, 0.0
    %1701 = vadd.xlane.f32.xlu0 %v1700
    %v1702 = vpop.xlane.xlu0 %1701
    %v1703 = vsel %vm178, %v1695, 0.0
    %1704 = vadd.xlane.f32.xlu0 %v1703
    %v1705 = vpop.xlane.xlu0 %1704
    %v1706 = vsel %vm178, %v1697, 0.0
    %1707 = vadd.xlane.f32.xlu0 %v1706
    %v1708 = vpop.xlane.xlu0 %1707
    %v1709 = vsel %vm178, %v1699, 0.0
    %1710 = vadd.xlane.f32.xlu0 %v1709
    %v1711 = vpop.xlane.xlu0 %1710
    %v1712 = vrcp.pop %v1702
    %v1713 = vrcp.pop %v1705
    %v1714 = vrcp.pop %v1708
    %v1715 = vrcp.pop %v1711
    %v1716 = vmul.f32 %v1693, %v1712
    %v1717 = vmul.f32 %v1695, %v1713
    %v1718 = vmul.f32 %v1697, %v1714
    %v1719 = vmul.f32 %v1699, %v1715
    %1720 = vrot.lane.b32.xlu0 %v1537, 64
    %v1721 = vpop.permute.xlu0 %1720
    %1722 = vrot.lane.b32.xlu0 %v1542, 64
    %v1723 = vpop.permute.xlu0 %1722
    %1724 = vrot.lane.b32.xlu0 %v1547, 64
    %v1725 = vpop.permute.xlu0 %1724
    %1726 = vrot.lane.b32.xlu0 %v1552, 64
    %v1727 = vpop.permute.xlu0 %1726
    %v1733 = vsel %vm178, %v1716, 0
    %v1736 = vsel %vm178, %v1717, 0
    %v1739 = vsel %vm178, %v1718, 0
    %v1742 = vsel %vm178, %v1719, 0
    %1744 = vmatprep.subr.mxu0 0.0
    %1745 = vmatpush1.msra.mxu0 %v1721
    %1746 = vmatprep.subr.mxu0 0.0
    %1747 = vmatpush1.msra.mxu0 %v1723
    %1748 = vmatprep.subr.mxu0 0.0
    %1749 = vmatpush1.msra.mxu0 %v1725
    %1750 = vmatprep.subr.mxu0 0.0
    %1751 = vmatpush1.msra.mxu0 %v1727
    %1752 = vmatprep.subr.mxu0 0.0
    %1753 = vmatpush1.msra.mxu0 0.0
    %1754 = vmatprep.subr.mxu0 0.0
    %1755 = vmatpush1.msra.mxu0 0.0
    %1756 = vmatprep.subr.mxu0 0.0
    %1757 = vmatpush1.msra.mxu0 0.0
    %1758 = vmatprep.subr.mxu0 0.0
    %1759 = vmatpush1.msra.mxu0 0.0
    %1760 = vmatprep.subr.mxu0 0.0
    %1761 = vmatpush1.msra.mxu0 0.0
    %1762 = vmatprep.subr.mxu0 0.0
    %1763 = vmatpush1.msra.mxu0 0.0
    %1764 = vmatprep.subr.mxu0 0.0
    %1765 = vmatpush1.msra.mxu0 0.0
    %1766 = vmatprep.subr.mxu0 0.0
    %1767 = vmatpush1.msra.mxu0 0.0
    %1768 = vmatprep.subr.mxu0 0.0
    %1769 = vmatpush1.msra.mxu0 0.0
    %1770 = vmatprep.subr.mxu0 0.0
    %1771 = vmatpush1.msra.mxu0 0.0
    %1772 = vmatprep.subr.mxu0 0.0
    %1773 = vmatpush1.msra.mxu0 0.0
    %1774 = vmatprep.subr.mxu0 0.0
    %1775 = vmatpush1.msra.mxu0 0.0
    %1776 = vmatprep.subr.mxu0 0.0
    %1777 = vmatpush1.msra.mxu0 0.0
    %1778 = vmatprep.subr.mxu0 0.0
    %1779 = vmatpush1.msra.mxu0 0.0
    %1780 = vmatprep.subr.mxu0 0.0
    %1781 = vmatpush1.msra.mxu0 0.0
    %1782 = vmatprep.subr.mxu0 0.0
    %1783 = vmatpush1.msra.mxu0 0.0
    %1784 = vmatprep.subr.mxu0 0.0
    %1785 = vmatpush1.msra.mxu0 0.0
    %1786 = vmatprep.subr.mxu0 0.0
    %1787 = vmatpush1.msra.mxu0 0.0
    %1788 = vmatprep.subr.mxu0 0.0
    %1789 = vmatpush1.msra.mxu0 0.0
    %1790 = vmatprep.subr.mxu0 0.0
    %1791 = vmatpush1.msra.mxu0 0.0
    %1792 = vmatprep.subr.mxu0 0.0
    %1793 = vmatpush1.msra.mxu0 0.0
    %1794 = vmatprep.subr.mxu0 0.0
    %1795 = vmatpush1.msra.mxu0 0.0
    %1796 = vmatprep.subr.mxu0 0.0
    %1797 = vmatpush1.msra.mxu0 0.0
    %1798 = vmatprep.subr.mxu0 0.0
    %1799 = vmatpush1.msra.mxu0 0.0
    %1800 = vmatprep.subr.mxu0 0.0
    %1801 = vmatpush1.msra.mxu0 0.0
    %1802 = vmatprep.subr.mxu0 0.0
    %1803 = vmatpush1.msra.mxu0 0.0
    %1804 = vmatprep.subr.mxu0 0.0
    %1805 = vmatpush1.msra.mxu0 0.0
    %1806 = vmatprep.subr.mxu0 0.0
    %1807 = vmatpush1.msra.mxu0 0.0
    %1808 = vmatprep.mubr.f32.mxu0 0.0
    %1809 = vmatmul.mubr.f32.gmra.mrb[0].mxu0 %v1733
    %v1810 = vpop.f32.mrb[0].mxu0
    %v1811 = vadd.f32 0.0, %v1810
    %v1812 = vpop.f32.mrb[0].mxu0
    %1813 = vmatprep.mubr.f32.mxu0 0.0
    %1814 = vmatmul.mubr.f32.gmra.mrb[0].mxu0 %v1736
    %v1815 = vpop.f32.mrb[0].mxu0
    %v1816 = vadd.f32 0.0, %v1815
    %v1817 = vpop.f32.mrb[0].mxu0
    %1818 = vmatprep.mubr.f32.mxu0 0.0
    %1819 = vmatmul.mubr.f32.gmra.mrb[0].mxu0 %v1739
    %v1820 = vpop.f32.mrb[0].mxu0
    %v1821 = vadd.f32 0.0, %v1820
    %v1822 = vpop.f32.mrb[0].mxu0
    %1823 = vmatprep.mubr.f32.mxu0 0.0
    %1824 = vmatmul.mubr.f32.gmra.mrb[0].mxu0 %v1742
    %v1825 = vpop.f32.mrb[0].mxu0
    %v1826 = vadd.f32 0.0, %v1825
    %v1827 = vpop.f32.mrb[0].mxu0
    %1828 = vdwg.mxu0
    %1829 = vrot.lane.b32.xlu0 %v1537, 112
    %v1830 = vpop.permute.xlu0 %1829
    %1831 = vrot.lane.b32.xlu0 %v1542, 112
    %v1832 = vpop.permute.xlu0 %1831
    %1833 = vrot.lane.b32.xlu0 %v1547, 112
    %v1834 = vpop.permute.xlu0 %1833
    %1835 = vrot.lane.b32.xlu0 %v1552, 112
    %v1836 = vpop.permute.xlu0 %1835
    %1837 = vrot.lane.b32.xlu0 %v1537, 80
    %v1838 = vpop.permute.xlu0 %1837
    %1839 = vrot.lane.b32.xlu0 %v1542, 80
    %v1840 = vpop.permute.xlu0 %1839
    %1841 = vrot.lane.b32.xlu0 %v1547, 80
    %v1842 = vpop.permute.xlu0 %1841
    %1843 = vrot.lane.b32.xlu0 %v1552, 80
    %v1844 = vpop.permute.xlu0 %1843
    %v1845 = vsel %vm374, %v1830, 0
    %v1847 = vsel %vm374, %v1832, 0
    %v1849 = vsel %vm374, %v1834, 0
    %v1851 = vsel %vm374, %v1836, 0
    %v1853 = vsel %vm374, %v1838, 0
    %v1855 = vsel %vm374, %v1840, 0
    %v1857 = vsel %vm374, %v1842, 0
    %v1859 = vsel %vm374, %v1844, 0
    %1861 = vmatprep.subr.mxu0 0.0
    %1862 = vmatpush1.xpose.msra.mxu0 %v1853
    %1863 = vmatprep.subr.mxu0 0.0
    %1864 = vmatpush1.xpose.msra.mxu0 %v1855
    %1865 = vmatprep.subr.mxu0 0.0
    %1866 = vmatpush1.xpose.msra.mxu0 %v1857
    %1867 = vmatprep.subr.mxu0 0.0
    %1868 = vmatpush1.xpose.msra.mxu0 %v1859
    %1869 = vmatprep.subr.mxu0 0.0
    %1870 = vmatpush1.xpose.msra.mxu0 0.0
    %1871 = vmatprep.subr.mxu0 0.0
    %1872 = vmatpush1.xpose.msra.mxu0 0.0
    %1873 = vmatprep.subr.mxu0 0.0
    %1874 = vmatpush1.xpose.msra.mxu0 0.0
    %1875 = vmatprep.subr.mxu0 0.0
    %1876 = vmatpush1.xpose.msra.mxu0 0.0
    %1877 = vmatprep.subr.mxu0 0.0
    %1878 = vmatpush1.xpose.msra.mxu0 0.0
    %1879 = vmatprep.subr.mxu0 0.0
    %1880 = vmatpush1.xpose.msra.mxu0 0.0
    %1881 = vmatprep.subr.mxu0 0.0
    %1882 = vmatpush1.xpose.msra.mxu0 0.0
    %1883 = vmatprep.subr.mxu0 0.0
    %1884 = vmatpush1.xpose.msra.mxu0 0.0
    %1885 = vmatprep.subr.mxu0 0.0
    %1886 = vmatpush1.xpose.msra.mxu0 0.0
    %1887 = vmatprep.subr.mxu0 0.0
    %1888 = vmatpush1.xpose.msra.mxu0 0.0
    %1889 = vmatprep.subr.mxu0 0.0
    %1890 = vmatpush1.xpose.msra.mxu0 0.0
    %1891 = vmatprep.subr.mxu0 0.0
    %1892 = vmatpush1.xpose.msra.mxu0 0.0
    %1893 = vmatprep.subr.mxu0 0.0
    %1894 = vmatpush1.xpose.msra.mxu0 0.0
    %1895 = vmatprep.subr.mxu0 0.0
    %1896 = vmatpush1.xpose.msra.mxu0 0.0
    %1897 = vmatprep.subr.mxu0 0.0
    %1898 = vmatpush1.xpose.msra.mxu0 0.0
    %1899 = vmatprep.subr.mxu0 0.0
    %1900 = vmatpush1.xpose.msra.mxu0 0.0
    %1901 = vmatprep.subr.mxu0 0.0
    %1902 = vmatpush1.xpose.msra.mxu0 0.0
    %1903 = vmatprep.subr.mxu0 0.0
    %1904 = vmatpush1.xpose.msra.mxu0 0.0
    %1905 = vmatprep.subr.mxu0 0.0
    %1906 = vmatpush1.xpose.msra.mxu0 0.0
    %1907 = vmatprep.subr.mxu0 0.0
    %1908 = vmatpush1.xpose.msra.mxu0 0.0
    %1909 = vmatprep.subr.mxu0 0.0
    %1910 = vmatpush1.xpose.msra.mxu0 0.0
    %1911 = vmatprep.subr.mxu0 0.0
    %1912 = vmatpush1.xpose.msra.mxu0 0.0
    %1913 = vmatprep.subr.mxu0 0.0
    %1914 = vmatpush1.xpose.msra.mxu0 0.0
    %1915 = vmatprep.subr.mxu0 0.0
    %1916 = vmatpush1.xpose.msra.mxu0 0.0
    %1917 = vmatprep.subr.mxu0 0.0
    %1918 = vmatpush1.xpose.msra.mxu0 0.0
    %1919 = vmatprep.subr.mxu0 0.0
    %1920 = vmatpush1.xpose.msra.mxu0 0.0
    %1921 = vmatprep.subr.mxu0 0.0
    %1922 = vmatpush1.xpose.msra.mxu0 0.0
    %1923 = vmatprep.subr.mxu0 0.0
    %1924 = vmatpush1.xpose.msra.mxu0 0.0
    %1925 = vmatprep.mubr.f32.mxu0 0.0
    %1926 = vmatmul.mubr.f32.gmra.mrb[0].mxu0 %v1845
    %v1927 = vpop.f32.mrb[0].mxu0
    %v1928 = vadd.f32 0.0, %v1927
    %v1929 = vpop.f32.mrb[0].mxu0
    %1930 = vmatprep.mubr.f32.mxu0 0.0
    %1931 = vmatmul.mubr.f32.gmra.mrb[0].mxu0 %v1847
    %v1932 = vpop.f32.mrb[0].mxu0
    %v1933 = vadd.f32 0.0, %v1932
    %v1934 = vpop.f32.mrb[0].mxu0
    %1935 = vmatprep.mubr.f32.mxu0 0.0
    %1936 = vmatmul.mubr.f32.gmra.mrb[0].mxu0 %v1849
    %v1937 = vpop.f32.mrb[0].mxu0
    %v1938 = vadd.f32 0.0, %v1937
    %v1939 = vpop.f32.mrb[0].mxu0
    %1940 = vmatprep.mubr.f32.mxu0 0.0
    %1941 = vmatmul.mubr.f32.gmra.mrb[0].mxu0 %v1851
    %v1942 = vpop.f32.mrb[0].mxu0
    %v1943 = vadd.f32 0.0, %v1942
    %v1944 = vpop.f32.mrb[0].mxu0
    %1945 = vdwg.mxu0
    %v1946 = vmul.f32 %v1928, 0.25
    %v1947 = vmul.f32 %v1933, 0.25
    %v1948 = vmul.f32 %v1938, 0.25
    %v1949 = vmul.f32 %v1943, 0.25
    %v1950 = vadd.f32 %v1946, %v248
    %v1951 = vadd.f32 %v1947, %v249
    %v1952 = vadd.f32 %v1948, %v250
    %v1953 = vadd.f32 %v1949, %v251
    %v1954 = vsel %vm178, %v1950, -inf
    %1955 = vmax.xlane.f32.xlu0 %v1954
    %v1956 = vpop.xlane.xlu0 %1955
    %v1957 = vsel %vm178, %v1951, -inf
    %1958 = vmax.xlane.f32.xlu0 %v1957
    %v1959 = vpop.xlane.xlu0 %1958
    %v1960 = vsel %vm178, %v1952, -inf
    %1961 = vmax.xlane.f32.xlu0 %v1960
    %v1962 = vpop.xlane.xlu0 %1961
    %v1963 = vsel %vm178, %v1953, -inf
    %1964 = vmax.xlane.f32.xlu0 %v1963
    %v1965 = vpop.xlane.xlu0 %1964
    %v1966 = vsub.f32 %v1950, %v1956
    %v1967 = vsub.f32 %v1951, %v1959
    %v1968 = vsub.f32 %v1952, %v1962
    %v1969 = vsub.f32 %v1953, %v1965
    %v1970 = vmul.f32 %v1966, 1.442695
    %v1971 = vpow.pop %v1970
    %v1972 = vmul.f32 %v1967, 1.442695
    %v1973 = vpow.pop %v1972
    %v1974 = vmul.f32 %v1968, 1.442695
    %v1975 = vpow.pop %v1974
    %v1976 = vmul.f32 %v1969, 1.442695
    %v1977 = vpow.pop %v1976
    %v1978 = vsel %vm178, %v1971, 0.0
    %1979 = vadd.xlane.f32.xlu0 %v1978
    %v1980 = vpop.xlane.xlu0 %1979
    %v1981 = vsel %vm178, %v1973, 0.0
    %1982 = vadd.xlane.f32.xlu0 %v1981
    %v1983 = vpop.xlane.xlu0 %1982
    %v1984 = vsel %vm178, %v1975, 0.0
    %1985 = vadd.xlane.f32.xlu0 %v1984
    %v1986 = vpop.xlane.xlu0 %1985
    %v1987 = vsel %vm178, %v1977, 0.0
    %1988 = vadd.xlane.f32.xlu0 %v1987
    %v1989 = vpop.xlane.xlu0 %1988
    %v1990 = vrcp.pop %v1980
    %v1991 = vrcp.pop %v1983
    %v1992 = vrcp.pop %v1986
    %v1993 = vrcp.pop %v1989
    %v1994 = vmul.f32 %v1971, %v1990
    %v1995 = vmul.f32 %v1973, %v1991
    %v1996 = vmul.f32 %v1975, %v1992
    %v1997 = vmul.f32 %v1977, %v1993
    %1998 = vrot.lane.b32.xlu0 %v1537, 48
    %v1999 = vpop.permute.xlu0 %1998
    %2000 = vrot.lane.b32.xlu0 %v1542, 48
    %v2001 = vpop.permute.xlu0 %2000
    %2002 = vrot.lane.b32.xlu0 %v1547, 48
    %v2003 = vpop.permute.xlu0 %2002
    %2004 = vrot.lane.b32.xlu0 %v1552, 48
    %v2005 = vpop.permute.xlu0 %2004
    %v2011 = vsel %vm178, %v1994, 0
    %v2014 = vsel %vm178, %v1995, 0
    %v2017 = vsel %vm178, %v1996, 0
    %v2020 = vsel %vm178, %v1997, 0
    %2022 = vmatprep.subr.mxu0 0.0
    %2023 = vmatpush1.msra.mxu0 %v1999
    %2024 = vmatprep.subr.mxu0 0.0
    %2025 = vmatpush1.msra.mxu0 %v2001
    %2026 = vmatprep.subr.mxu0 0.0
    %2027 = vmatpush1.msra.mxu0 %v2003
    %2028 = vmatprep.subr.mxu0 0.0
    %2029 = vmatpush1.msra.mxu0 %v2005
    %2030 = vmatprep.subr.mxu0 0.0
    %2031 = vmatpush1.msra.mxu0 0.0
    %2032 = vmatprep.subr.mxu0 0.0
    %2033 = vmatpush1.msra.mxu0 0.0
    %2034 = vmatprep.subr.mxu0 0.0
    %2035 = vmatpush1.msra.mxu0 0.0
    %2036 = vmatprep.subr.mxu0 0.0
    %2037 = vmatpush1.msra.mxu0 0.0
    %2038 = vmatprep.subr.mxu0 0.0
    %2039 = vmatpush1.msra.mxu0 0.0
    %2040 = vmatprep.subr.mxu0 0.0
    %2041 = vmatpush1.msra.mxu0 0.0
    %2042 = vmatprep.subr.mxu0 0.0
    %2043 = vmatpush1.msra.mxu0 0.0
    %2044 = vmatprep.subr.mxu0 0.0
    %2045 = vmatpush1.msra.mxu0 0.0
    %2046 = vmatprep.subr.mxu0 0.0
    %2047 = vmatpush1.msra.mxu0 0.0
    %2048 = vmatprep.subr.mxu0 0.0
    %2049 = vmatpush1.msra.mxu0 0.0
    %2050 = vmatprep.subr.mxu0 0.0
    %2051 = vmatpush1.msra.mxu0 0.0
    %2052 = vmatprep.subr.mxu0 0.0
    %2053 = vmatpush1.msra.mxu0 0.0
    %2054 = vmatprep.subr.mxu0 0.0
    %2055 = vmatpush1.msra.mxu0 0.0
    %2056 = vmatprep.subr.mxu0 0.0
    %2057 = vmatpush1.msra.mxu0 0.0
    %2058 = vmatprep.subr.mxu0 0.0
    %2059 = vmatpush1.msra.mxu0 0.0
    %2060 = vmatprep.subr.mxu0 0.0
    %2061 = vmatpush1.msra.mxu0 0.0
    %2062 = vmatprep.subr.mxu0 0.0
    %2063 = vmatpush1.msra.mxu0 0.0
    %2064 = vmatprep.subr.mxu0 0.0
    %2065 = vmatpush1.msra.mxu0 0.0
    %2066 = vmatprep.subr.mxu0 0.0
    %2067 = vmatpush1.msra.mxu0 0.0
    %2068 = vmatprep.subr.mxu0 0.0
    %2069 = vmatpush1.msra.mxu0 0.0
    %2070 = vmatprep.subr.mxu0 0.0
    %2071 = vmatpush1.msra.mxu0 0.0
    %2072 = vmatprep.subr.mxu0 0.0
    %2073 = vmatpush1.msra.mxu0 0.0
    %2074 = vmatprep.subr.mxu0 0.0
    %2075 = vmatpush1.msra.mxu0 0.0
    %2076 = vmatprep.subr.mxu0 0.0
    %2077 = vmatpush1.msra.mxu0 0.0
    %2078 = vmatprep.subr.mxu0 0.0
    %2079 = vmatpush1.msra.mxu0 0.0
    %2080 = vmatprep.subr.mxu0 0.0
    %2081 = vmatpush1.msra.mxu0 0.0
    %2082 = vmatprep.subr.mxu0 0.0
    %2083 = vmatpush1.msra.mxu0 0.0
    %2084 = vmatprep.subr.mxu0 0.0
    %2085 = vmatpush1.msra.mxu0 0.0
    %2086 = vmatprep.mubr.f32.mxu0 0.0
    %2087 = vmatmul.mubr.f32.gmra.mrb[0].mxu0 %v2011
    %v2088 = vpop.f32.mrb[0].mxu0
    %v2089 = vadd.f32 0.0, %v2088
    %v2090 = vpop.f32.mrb[0].mxu0
    %2091 = vmatprep.mubr.f32.mxu0 0.0
    %2092 = vmatmul.mubr.f32.gmra.mrb[0].mxu0 %v2014
    %v2093 = vpop.f32.mrb[0].mxu0
    %v2094 = vadd.f32 0.0, %v2093
    %v2095 = vpop.f32.mrb[0].mxu0
    %2096 = vmatprep.mubr.f32.mxu0 0.0
    %2097 = vmatmul.mubr.f32.gmra.mrb[0].mxu0 %v2017
    %v2098 = vpop.f32.mrb[0].mxu0
    %v2099 = vadd.f32 0.0, %v2098
    %v2100 = vpop.f32.mrb[0].mxu0
    %2101 = vmatprep.mubr.f32.mxu0 0.0
    %2102 = vmatmul.mubr.f32.gmra.mrb[0].mxu0 %v2020
    %v2103 = vpop.f32.mrb[0].mxu0
    %v2104 = vadd.f32 0.0, %v2103
    %v2105 = vpop.f32.mrb[0].mxu0
    %2106 = vdwg.mxu0
    %2111 = vrot.lane.b32.xlu0 %v2089, 16
    %v2112 = vpop.permute.xlu0 %2111
    %2113 = vrot.lane.b32.xlu0 %v2094, 16
    %v2114 = vpop.permute.xlu0 %2113
    %2115 = vrot.lane.b32.xlu0 %v2099, 16
    %v2116 = vpop.permute.xlu0 %2115
    %2117 = vrot.lane.b32.xlu0 %v2104, 16
    %v2118 = vpop.permute.xlu0 %2117
    %v2123 = vsel %vm374, %v1811, %v2112
    %v2124 = vsel %vm374, %v1816, %v2114
    %v2125 = vsel %vm374, %v1821, %v2116
    %v2126 = vsel %vm374, %v1826, %v2118
    %v2127 = vlaneseq
    %v2128 = vshrl.u32 %v2127, 7
    %v2129 = vsub.s32 1, %v2128
    %v2130 = vrot.slane %v1453, %v2129
    %2135 = vrot.lane.b32.xlu0 %v1444, 32
    %v2136 = vpop.permute.xlu0 %2135
    %2137 = vrot.lane.b32.xlu0 %v1446, 32
    %v2138 = vpop.permute.xlu0 %2137
    %2139 = vrot.lane.b32.xlu0 %v1448, 32
    %v2140 = vpop.permute.xlu0 %2139
    %2141 = vrot.lane.b32.xlu0 %v1450, 32
    %v2142 = vpop.permute.xlu0 %2141
    %v2148 = vsel %vm178, %v2123, 0
    %v2151 = vsel %vm178, %v2124, 0
    %v2154 = vsel %vm178, %v2125, 0
    %v2157 = vsel %vm178, %v2126, 0
    %2159 = vmatprep.subr.mxu0 0.0
    %2160 = vmatpush1.msra.mxu0 %v2136
    %2161 = vmatprep.subr.mxu0 0.0
    %2162 = vmatpush1.msra.mxu0 %v2138
    %2163 = vmatprep.subr.mxu0 0.0
    %2164 = vmatpush1.msra.mxu0 %v2140
    %2165 = vmatprep.subr.mxu0 0.0
    %2166 = vmatpush1.msra.mxu0 %v2142
    %2167 = vmatprep.subr.mxu0 0.0
    %2168 = vmatpush1.msra.mxu0 0.0
    %2169 = vmatprep.subr.mxu0 0.0
    %2170 = vmatpush1.msra.mxu0 0.0
    %2171 = vmatprep.subr.mxu0 0.0
    %2172 = vmatpush1.msra.mxu0 0.0
    %2173 = vmatprep.subr.mxu0 0.0
    %2174 = vmatpush1.msra.mxu0 0.0
    %2175 = vmatprep.subr.mxu0 0.0
    %2176 = vmatpush1.msra.mxu0 0.0
    %2177 = vmatprep.subr.mxu0 0.0
    %2178 = vmatpush1.msra.mxu0 0.0
    %2179 = vmatprep.subr.mxu0 0.0
    %2180 = vmatpush1.msra.mxu0 0.0
    %2181 = vmatprep.subr.mxu0 0.0
    %2182 = vmatpush1.msra.mxu0 0.0
    %2183 = vmatprep.subr.mxu0 0.0
    %2184 = vmatpush1.msra.mxu0 0.0
    %2185 = vmatprep.subr.mxu0 0.0
    %2186 = vmatpush1.msra.mxu0 0.0
    %2187 = vmatprep.subr.mxu0 0.0
    %2188 = vmatpush1.msra.mxu0 0.0
    %2189 = vmatprep.subr.mxu0 0.0
    %2190 = vmatpush1.msra.mxu0 0.0
    %2191 = vmatprep.subr.mxu0 0.0
    %2192 = vmatpush1.msra.mxu0 0.0
    %2193 = vmatprep.subr.mxu0 0.0
    %2194 = vmatpush1.msra.mxu0 0.0
    %2195 = vmatprep.subr.mxu0 0.0
    %2196 = vmatpush1.msra.mxu0 0.0
    %2197 = vmatprep.subr.mxu0 0.0
    %2198 = vmatpush1.msra.mxu0 0.0
    %2199 = vmatprep.subr.mxu0 0.0
    %2200 = vmatpush1.msra.mxu0 0.0
    %2201 = vmatprep.subr.mxu0 0.0
    %2202 = vmatpush1.msra.mxu0 0.0
    %2203 = vmatprep.subr.mxu0 0.0
    %2204 = vmatpush1.msra.mxu0 0.0
    %2205 = vmatprep.subr.mxu0 0.0
    %2206 = vmatpush1.msra.mxu0 0.0
    %2207 = vmatprep.subr.mxu0 0.0
    %2208 = vmatpush1.msra.mxu0 0.0
    %2209 = vmatprep.subr.mxu0 0.0
    %2210 = vmatpush1.msra.mxu0 0.0
    %2211 = vmatprep.subr.mxu0 0.0
    %2212 = vmatpush1.msra.mxu0 0.0
    %2213 = vmatprep.subr.mxu0 0.0
    %2214 = vmatpush1.msra.mxu0 0.0
    %2215 = vmatprep.subr.mxu0 0.0
    %2216 = vmatpush1.msra.mxu0 0.0
    %2217 = vmatprep.subr.mxu0 0.0
    %2218 = vmatpush1.msra.mxu0 0.0
    %2219 = vmatprep.subr.mxu0 0.0
    %2220 = vmatpush1.msra.mxu0 0.0
    %2221 = vmatprep.subr.mxu0 0.0
    %2222 = vmatpush1.msra.mxu0 0.0
    %2223 = vmatprep.mubr.f32.mxu0 0.0
    %2224 = vmatmul.mubr.f32.gmra.mrb[0].mxu0 %v2148
    %v2225 = vpop.f32.mrb[0].mxu0
    %v2226 = vadd.f32 %v2130, %v2225
    %v2227 = vpop.f32.mrb[0].mxu0
    %2228 = vmatprep.mubr.f32.mxu0 0.0
    %2229 = vmatmul.mubr.f32.gmra.mrb[0].mxu0 %v2151
    %v2230 = vpop.f32.mrb[0].mxu0
    %v2231 = vadd.f32 %v2130, %v2230
    %v2232 = vpop.f32.mrb[0].mxu0
    %2233 = vmatprep.mubr.f32.mxu0 0.0
    %2234 = vmatmul.mubr.f32.gmra.mrb[0].mxu0 %v2154
    %v2235 = vpop.f32.mrb[0].mxu0
    %v2236 = vadd.f32 %v2130, %v2235
    %v2237 = vpop.f32.mrb[0].mxu0
    %2238 = vmatprep.mubr.f32.mxu0 0.0
    %2239 = vmatmul.mubr.f32.gmra.mrb[0].mxu0 %v2157
    %v2240 = vpop.f32.mrb[0].mxu0
    %v2241 = vadd.f32 %v2130, %v2240
    %v2242 = vpop.f32.mrb[0].mxu0
    %2243 = vdwg.mxu0
    %v2244 = vadd.f32 %v2226, %v1439
    %v2245 = vadd.f32 %v2231, %v1440
    %v2246 = vadd.f32 %v2236, %v1441
    %v2247 = vadd.f32 %v2241, %v1442
    %v2248 = vsel %vm178, %v2244, 0.0
    %2249 = vadd.xlane.f32.xlu0 %v2248
    %v2250 = vpop.xlane.xlu0 %2249
    %v2251 = vsel %vm178, %v2245, 0.0
    %2252 = vadd.xlane.f32.xlu0 %v2251
    %v2253 = vpop.xlane.xlu0 %2252
    %v2254 = vsel %vm178, %v2246, 0.0
    %2255 = vadd.xlane.f32.xlu0 %v2254
    %v2256 = vpop.xlane.xlu0 %2255
    %v2257 = vsel %vm178, %v2247, 0.0
    %2258 = vadd.xlane.f32.xlu0 %v2257
    %v2259 = vpop.xlane.xlu0 %2258
    %v2260 = vmul.f32 %v2250, %v191
    %v2261 = vmul.f32 %v2253, %v191
    %v2262 = vmul.f32 %v2256, %v191
    %v2263 = vmul.f32 %v2259, %v191
    %v2264 = vsub.f32 %v2244, %v2260
    %v2265 = vsub.f32 %v2245, %v2261
    %v2266 = vsub.f32 %v2246, %v2262
    %v2267 = vsub.f32 %v2247, %v2263
    %v2268 = vmul.f32 %v2264, %v2264
    %v2269 = vmul.f32 %v2265, %v2265
    %v2270 = vmul.f32 %v2266, %v2266
    %v2271 = vmul.f32 %v2267, %v2267
    %v2272 = vsel %vm178, %v2268, 0.0
    %2273 = vadd.xlane.f32.xlu0 %v2272
    %v2274 = vpop.xlane.xlu0 %2273
    %v2275 = vsel %vm178, %v2269, 0.0
    %2276 = vadd.xlane.f32.xlu0 %v2275
    %v2277 = vpop.xlane.xlu0 %2276
    %v2278 = vsel %vm178, %v2270, 0.0
    %2279 = vadd.xlane.f32.xlu0 %v2278
    %v2280 = vpop.xlane.xlu0 %2279
    %v2281 = vsel %vm178, %v2271, 0.0
    %2282 = vadd.xlane.f32.xlu0 %v2281
    %v2283 = vpop.xlane.xlu0 %2282
    %v2284 = vmul.f32 %v2274, %v191
    %v2285 = vmul.f32 %v2277, %v191
    %v2286 = vmul.f32 %v2280, %v191
    %v2287 = vmul.f32 %v2283, %v191
    %v2288 = vadd.f32 %v2284, 1e-12
    %v2289 = vadd.f32 %v2285, 1e-12
    %v2290 = vadd.f32 %v2286, 1e-12
    %v2291 = vadd.f32 %v2287, 1e-12
    %v2292 = vrsqrt.pop %v2288
    %v2293 = vrsqrt.pop %v2289
    %v2294 = vrsqrt.pop %v2290
    %v2295 = vrsqrt.pop %v2291
    %v2296 = vmul.f32 %v2264, %v2292
    %v2297 = vmul.f32 %v2265, %v2293
    %v2298 = vmul.f32 %v2266, %v2294
    %v2299 = vmul.f32 %v2267, %v2295
    %v2300 = vlaneseq
    %v2301 = vshrl.u32 %v2300, 7
    %v2302 = vsub.s32 2, %v2301
    %v2303 = vrot.slane %v1453, %v2302
    %v2304 = vmul.f32 %v2296, %v2303
    %v2305 = vmul.f32 %v2297, %v2303
    %v2306 = vmul.f32 %v2298, %v2303
    %v2307 = vmul.f32 %v2299, %v2303
    %v2308 = vlaneseq
    %v2309 = vshrl.u32 %v2308, 7
    %v2310 = vsub.s32 3, %v2309
    %v2311 = vrot.slane %v1453, %v2310
    %v2312 = vadd.f32 %v2304, %v2311
    %v2313 = vadd.f32 %v2305, %v2311
    %v2314 = vadd.f32 %v2306, %v2311
    %v2315 = vadd.f32 %v2307, %v2311
    %v2316 = vlaneseq
    %v2317 = vshrl.u32 %v2316, 7
    %v2318 = vsub.s32 4, %v2317
    %v2319 = vrot.slane %v1453, %v2318
    %v2321 = vsel %vm178, %v2312, 0
    %v2324 = vsel %vm178, %v2313, 0
    %v2327 = vsel %vm178, %v2314, 0
    %v2330 = vsel %vm178, %v2315, 0
    %2332 = vmatprep.subr.mxu0 0.0
    %2333 = vmatpush1.msra.mxu0 %v1445
    %2334 = vmatprep.subr.mxu0 0.0
    %2335 = vmatpush1.msra.mxu0 %v1447
    %2336 = vmatprep.subr.mxu0 0.0
    %2337 = vmatpush1.msra.mxu0 %v1449
    %2338 = vmatprep.subr.mxu0 0.0
    %2339 = vmatpush1.msra.mxu0 %v1451
    %2340 = vmatprep.subr.mxu0 0.0
    %2341 = vmatpush1.msra.mxu0 0.0
    %2342 = vmatprep.subr.mxu0 0.0
    %2343 = vmatpush1.msra.mxu0 0.0
    %2344 = vmatprep.subr.mxu0 0.0
    %2345 = vmatpush1.msra.mxu0 0.0
    %2346 = vmatprep.subr.mxu0 0.0
    %2347 = vmatpush1.msra.mxu0 0.0
    %2348 = vmatprep.subr.mxu0 0.0
    %2349 = vmatpush1.msra.mxu0 0.0
    %2350 = vmatprep.subr.mxu0 0.0
    %2351 = vmatpush1.msra.mxu0 0.0
    %2352 = vmatprep.subr.mxu0 0.0
    %2353 = vmatpush1.msra.mxu0 0.0
    %2354 = vmatprep.subr.mxu0 0.0
    %2355 = vmatpush1.msra.mxu0 0.0
    %2356 = vmatprep.subr.mxu0 0.0
    %2357 = vmatpush1.msra.mxu0 0.0
    %2358 = vmatprep.subr.mxu0 0.0
    %2359 = vmatpush1.msra.mxu0 0.0
    %2360 = vmatprep.subr.mxu0 0.0
    %2361 = vmatpush1.msra.mxu0 0.0
    %2362 = vmatprep.subr.mxu0 0.0
    %2363 = vmatpush1.msra.mxu0 0.0
    %2364 = vmatprep.subr.mxu0 0.0
    %2365 = vmatpush1.msra.mxu0 0.0
    %2366 = vmatprep.subr.mxu0 0.0
    %2367 = vmatpush1.msra.mxu0 0.0
    %2368 = vmatprep.subr.mxu0 0.0
    %2369 = vmatpush1.msra.mxu0 0.0
    %2370 = vmatprep.subr.mxu0 0.0
    %2371 = vmatpush1.msra.mxu0 0.0
    %2372 = vmatprep.subr.mxu0 0.0
    %2373 = vmatpush1.msra.mxu0 0.0
    %2374 = vmatprep.subr.mxu0 0.0
    %2375 = vmatpush1.msra.mxu0 0.0
    %2376 = vmatprep.subr.mxu0 0.0
    %2377 = vmatpush1.msra.mxu0 0.0
    %2378 = vmatprep.subr.mxu0 0.0
    %2379 = vmatpush1.msra.mxu0 0.0
    %2380 = vmatprep.subr.mxu0 0.0
    %2381 = vmatpush1.msra.mxu0 0.0
    %2382 = vmatprep.subr.mxu0 0.0
    %2383 = vmatpush1.msra.mxu0 0.0
    %2384 = vmatprep.subr.mxu0 0.0
    %2385 = vmatpush1.msra.mxu0 0.0
    %2386 = vmatprep.subr.mxu0 0.0
    %2387 = vmatpush1.msra.mxu0 0.0
    %2388 = vmatprep.subr.mxu0 0.0
    %2389 = vmatpush1.msra.mxu0 0.0
    %2390 = vmatprep.subr.mxu0 0.0
    %2391 = vmatpush1.msra.mxu0 0.0
    %2392 = vmatprep.subr.mxu0 0.0
    %2393 = vmatpush1.msra.mxu0 0.0
    %2394 = vmatprep.subr.mxu0 0.0
    %2395 = vmatpush1.msra.mxu0 0.0
    %2396 = vmatprep.mubr.f32.mxu0 0.0
    %2397 = vmatmul.mubr.f32.gmra.mrb[0].mxu0 %v2321
    %v2398 = vpop.f32.mrb[0].mxu0
    %v2399 = vadd.f32 %v2319, %v2398
    %v2400 = vpop.f32.mrb[0].mxu0
    %2401 = vmatprep.mubr.f32.mxu0 0.0
    %2402 = vmatmul.mubr.f32.gmra.mrb[0].mxu0 %v2324
    %v2403 = vpop.f32.mrb[0].mxu0
    %v2404 = vadd.f32 %v2319, %v2403
    %v2405 = vpop.f32.mrb[0].mxu0
    %2406 = vmatprep.mubr.f32.mxu0 0.0
    %2407 = vmatmul.mubr.f32.gmra.mrb[0].mxu0 %v2327
    %v2408 = vpop.f32.mrb[0].mxu0
    %v2409 = vadd.f32 %v2319, %v2408
    %v2410 = vpop.f32.mrb[0].mxu0
    %2411 = vmatprep.mubr.f32.mxu0 0.0
    %2412 = vmatmul.mubr.f32.gmra.mrb[0].mxu0 %v2330
    %v2413 = vpop.f32.mrb[0].mxu0
    %v2414 = vadd.f32 %v2319, %v2413
    %v2415 = vpop.f32.mrb[0].mxu0
    %2416 = vdwg.mxu0
    %v2417 = vmul.f32 %v2399, %v2399
    %v2418 = vmul.f32 %v2404, %v2404
    %v2419 = vmul.f32 %v2409, %v2409
    %v2420 = vmul.f32 %v2414, %v2414
    %v2421 = vmul.f32 %v2399, %v2417
    %v2422 = vmul.f32 %v2404, %v2418
    %v2423 = vmul.f32 %v2409, %v2419
    %v2424 = vmul.f32 %v2414, %v2420
    %v2425 = vmul.f32 %v2421, 0.044715
    %v2426 = vmul.f32 %v2422, 0.044715
    %v2427 = vmul.f32 %v2423, 0.044715
    %v2428 = vmul.f32 %v2424, 0.044715
    %v2429 = vadd.f32 %v2399, %v2425
    %v2430 = vadd.f32 %v2404, %v2426
    %v2431 = vadd.f32 %v2409, %v2427
    %v2432 = vadd.f32 %v2414, %v2428
    %v2433 = vmul.f32 %v2429, 0.7978846
    %v2434 = vmul.f32 %v2430, 0.7978846
    %v2435 = vmul.f32 %v2431, 0.7978846
    %v2436 = vmul.f32 %v2432, 0.7978846
    %v2437 = vtanh.pop %v2433
    %v2438 = vtanh.pop %v2434
    %v2439 = vtanh.pop %v2435
    %v2440 = vtanh.pop %v2436
    %v2441 = vadd.f32 %v2437, 1.0
    %v2442 = vadd.f32 %v2438, 1.0
    %v2443 = vadd.f32 %v2439, 1.0
    %v2444 = vadd.f32 %v2440, 1.0
    %v2445 = vmul.f32 %v2441, 0.5
    %v2446 = vmul.f32 %v2442, 0.5
    %v2447 = vmul.f32 %v2443, 0.5
    %v2448 = vmul.f32 %v2444, 0.5
    %v2449 = vmul.f32 %v2399, %v2445
    %v2450 = vmul.f32 %v2404, %v2446
    %v2451 = vmul.f32 %v2409, %v2447
    %v2452 = vmul.f32 %v2414, %v2448
    %s2453 = scalar_lea.vmem %s4, 64
    %v2454 = vld [vmem:[%s2453] sm:$0xff]
    %v2455 = vld [vmem:[%s2453 + $0x8] sm:$0xff]
    %v2456 = vld [vmem:[%s2453 + $0x10] sm:$0xff]
    %v2457 = vld [vmem:[%s2453 + $0x18] sm:$0xff]
    %v2458 = vld [vmem:[%s2453 + $0x20] sm:$0xff]
    %v2459 = vld [vmem:[%s2453 + $0x28] sm:$0xff]
    %v2460 = vld [vmem:[%s2453 + $0x30] sm:$0xff]
    %v2461 = vld [vmem:[%s2453 + $0x38] sm:$0xff]
    %v2462 = vlaneseq
    %v2463 = vshrl.u32 %v2462, 7
    %v2464 = vsub.s32 5, %v2463
    %v2465 = vrot.slane %v1453, %v2464
    %v2467 = vsel %vm1273, %v2449, 0
    %v2470 = vsel %vm1273, %v2450, 0
    %v2473 = vsel %vm1273, %v2451, 0
    %v2476 = vsel %vm1273, %v2452, 0
    %2478 = vmatprep.subr.mxu0 0.0
    %2479 = vmatpush1.msra.mxu0 %v2454
    %2480 = vmatprep.subr.mxu0 0.0
    %2481 = vmatpush1.msra.mxu0 %v2455
    %2482 = vmatprep.subr.mxu0 0.0
    %2483 = vmatpush1.msra.mxu0 %v2456
    %2484 = vmatprep.subr.mxu0 0.0
    %2485 = vmatpush1.msra.mxu0 %v2457
    %2486 = vmatprep.subr.mxu0 0.0
    %2487 = vmatpush1.msra.mxu0 %v2458
    %2488 = vmatprep.subr.mxu0 0.0
    %2489 = vmatpush1.msra.mxu0 %v2459
    %2490 = vmatprep.subr.mxu0 0.0
    %2491 = vmatpush1.msra.mxu0 %v2460
    %2492 = vmatprep.subr.mxu0 0.0
    %2493 = vmatpush1.msra.mxu0 %v2461
    %2494 = vmatprep.subr.mxu0 0.0
    %2495 = vmatpush1.msra.mxu0 0.0
    %2496 = vmatprep.subr.mxu0 0.0
    %2497 = vmatpush1.msra.mxu0 0.0
    %2498 = vmatprep.subr.mxu0 0.0
    %2499 = vmatpush1.msra.mxu0 0.0
    %2500 = vmatprep.subr.mxu0 0.0
    %2501 = vmatpush1.msra.mxu0 0.0
    %2502 = vmatprep.subr.mxu0 0.0
    %2503 = vmatpush1.msra.mxu0 0.0
    %2504 = vmatprep.subr.mxu0 0.0
    %2505 = vmatpush1.msra.mxu0 0.0
    %2506 = vmatprep.subr.mxu0 0.0
    %2507 = vmatpush1.msra.mxu0 0.0
    %2508 = vmatprep.subr.mxu0 0.0
    %2509 = vmatpush1.msra.mxu0 0.0
    %2510 = vmatprep.subr.mxu0 0.0
    %2511 = vmatpush1.msra.mxu0 0.0
    %2512 = vmatprep.subr.mxu0 0.0
    %2513 = vmatpush1.msra.mxu0 0.0
    %2514 = vmatprep.subr.mxu0 0.0
    %2515 = vmatpush1.msra.mxu0 0.0
    %2516 = vmatprep.subr.mxu0 0.0
    %2517 = vmatpush1.msra.mxu0 0.0
    %2518 = vmatprep.subr.mxu0 0.0
    %2519 = vmatpush1.msra.mxu0 0.0
    %2520 = vmatprep.subr.mxu0 0.0
    %2521 = vmatpush1.msra.mxu0 0.0
    %2522 = vmatprep.subr.mxu0 0.0
    %2523 = vmatpush1.msra.mxu0 0.0
    %2524 = vmatprep.subr.mxu0 0.0
    %2525 = vmatpush1.msra.mxu0 0.0
    %2526 = vmatprep.subr.mxu0 0.0
    %2527 = vmatpush1.msra.mxu0 0.0
    %2528 = vmatprep.subr.mxu0 0.0
    %2529 = vmatpush1.msra.mxu0 0.0
    %2530 = vmatprep.subr.mxu0 0.0
    %2531 = vmatpush1.msra.mxu0 0.0
    %2532 = vmatprep.subr.mxu0 0.0
    %2533 = vmatpush1.msra.mxu0 0.0
    %2534 = vmatprep.subr.mxu0 0.0
    %2535 = vmatpush1.msra.mxu0 0.0
    %2536 = vmatprep.subr.mxu0 0.0
    %2537 = vmatpush1.msra.mxu0 0.0
    %2538 = vmatprep.subr.mxu0 0.0
    %2539 = vmatpush1.msra.mxu0 0.0
    %2540 = vmatprep.subr.mxu0 0.0
    %2541 = vmatpush1.msra.mxu0 0.0
    %2542 = vmatprep.mubr.f32.mxu0 0.0
    %2543 = vmatmul.mubr.f32.gmra.mrb[0].mxu0 %v2467
    %v2544 = vpop.f32.mrb[0].mxu0
    %v2545 = vadd.f32 %v2465, %v2544
    %v2546 = vpop.f32.mrb[0].mxu0
    %2547 = vmatprep.mubr.f32.mxu0 0.0
    %2548 = vmatmul.mubr.f32.gmra.mrb[0].mxu0 %v2470
    %v2549 = vpop.f32.mrb[0].mxu0
    %v2550 = vadd.f32 %v2465, %v2549
    %v2551 = vpop.f32.mrb[0].mxu0
    %2552 = vmatprep.mubr.f32.mxu0 0.0
    %2553 = vmatmul.mubr.f32.gmra.mrb[0].mxu0 %v2473
    %v2554 = vpop.f32.mrb[0].mxu0
    %v2555 = vadd.f32 %v2465, %v2554
    %v2556 = vpop.f32.mrb[0].mxu0
    %2557 = vmatprep.mubr.f32.mxu0 0.0
    %2558 = vmatmul.mubr.f32.gmra.mrb[0].mxu0 %v2476
    %v2559 = vpop.f32.mrb[0].mxu0
    %v2560 = vadd.f32 %v2465, %v2559
    %v2561 = vpop.f32.mrb[0].mxu0
    %2562 = vdwg.mxu0
    %v2563 = vadd.f32 %v2545, %v2312
    %v2564 = vadd.f32 %v2550, %v2313
    %v2565 = vadd.f32 %v2555, %v2314
    %v2566 = vadd.f32 %v2560, %v2315
    %v2567 = vsel %vm178, %v2563, 0.0
    %2568 = vadd.xlane.f32.xlu0 %v2567
    %v2569 = vpop.xlane.xlu0 %2568
    %v2570 = vsel %vm178, %v2564, 0.0
    %2571 = vadd.xlane.f32.xlu0 %v2570
    %v2572 = vpop.xlane.xlu0 %2571
    %v2573 = vsel %vm178, %v2565, 0.0
    %2574 = vadd.xlane.f32.xlu0 %v2573
    %v2575 = vpop.xlane.xlu0 %2574
    %v2576 = vsel %vm178, %v2566, 0.0
    %2577 = vadd.xlane.f32.xlu0 %v2576
    %v2578 = vpop.xlane.xlu0 %2577
    %v2579 = vmul.f32 %v2569, %v191
    %v2580 = vmul.f32 %v2572, %v191
    %v2581 = vmul.f32 %v2575, %v191
    %v2582 = vmul.f32 %v2578, %v191
    %v2583 = vsub.f32 %v2563, %v2579
    %v2584 = vsub.f32 %v2564, %v2580
    %v2585 = vsub.f32 %v2565, %v2581
    %v2586 = vsub.f32 %v2566, %v2582
    %v2587 = vmul.f32 %v2583, %v2583
    %v2588 = vmul.f32 %v2584, %v2584
    %v2589 = vmul.f32 %v2585, %v2585
    %v2590 = vmul.f32 %v2586, %v2586
    %v2591 = vsel %vm178, %v2587, 0.0
    %2592 = vadd.xlane.f32.xlu0 %v2591
    %v2593 = vpop.xlane.xlu0 %2592
    %v2594 = vsel %vm178, %v2588, 0.0
    %2595 = vadd.xlane.f32.xlu0 %v2594
    %v2596 = vpop.xlane.xlu0 %2595
    %v2597 = vsel %vm178, %v2589, 0.0
    %2598 = vadd.xlane.f32.xlu0 %v2597
    %v2599 = vpop.xlane.xlu0 %2598
    %v2600 = vsel %vm178, %v2590, 0.0
    %2601 = vadd.xlane.f32.xlu0 %v2600
    %v2602 = vpop.xlane.xlu0 %2601
    %v2603 = vmul.f32 %v2593, %v191
    %v2604 = vmul.f32 %v2596, %v191
    %v2605 = vmul.f32 %v2599, %v191
    %v2606 = vmul.f32 %v2602, %v191
    %v2607 = vadd.f32 %v2603, 1e-12
    %v2608 = vadd.f32 %v2604, 1e-12
    %v2609 = vadd.f32 %v2605, 1e-12
    %v2610 = vadd.f32 %v2606, 1e-12
    %v2611 = vrsqrt.pop %v2607
    %v2612 = vrsqrt.pop %v2608
    %v2613 = vrsqrt.pop %v2609
    %v2614 = vrsqrt.pop %v2610
    %v2615 = vmul.f32 %v2583, %v2611
    %v2616 = vmul.f32 %v2584, %v2612
    %v2617 = vmul.f32 %v2585, %v2613
    %v2618 = vmul.f32 %v2586, %v2614
    %v2619 = vlaneseq
    %v2620 = vshrl.u32 %v2619, 7
    %v2621 = vsub.s32 6, %v2620
    %v2622 = vrot.slane %v1453, %v2621
    %v2623 = vmul.f32 %v2615, %v2622
    %v2624 = vmul.f32 %v2616, %v2622
    %v2625 = vmul.f32 %v2617, %v2622
    %v2626 = vmul.f32 %v2618, %v2622
    %v2627 = vlaneseq
    %v2628 = vshrl.u32 %v2627, 7
    %v2629 = vsub.s32 7, %v2628
    %v2630 = vrot.slane %v1453, %v2629
    %v2631 = vadd.f32 %v2623, %v2630
    %v2632 = vadd.f32 %v2624, %v2630
    %v2633 = vadd.f32 %v2625, %v2630
    %v2634 = vadd.f32 %v2626, %v2630
    %v2635 = vld [vmem:[%s1 + $0x20] sm:$0xf]
    %v2637 = vsel %vm178, %v2635, 0
    %2639 = vmatprep.subr.mxu0 0.0
    %2640 = vmatpush1.msra.mxu0 %v2631
    %2641 = vmatprep.subr.mxu0 0.0
    %2642 = vmatpush1.msra.mxu0 %v2632
    %2643 = vmatprep.subr.mxu0 0.0
    %2644 = vmatpush1.msra.mxu0 %v2633
    %2645 = vmatprep.subr.mxu0 0.0
    %2646 = vmatpush1.msra.mxu0 %v2634
    %2647 = vmatprep.subr.mxu0 0.0
    %2648 = vmatpush1.msra.mxu0 0.0
    %2649 = vmatprep.subr.mxu0 0.0
    %2650 = vmatpush1.msra.mxu0 0.0
    %2651 = vmatprep.subr.mxu0 0.0
    %2652 = vmatpush1.msra.mxu0 0.0
    %2653 = vmatprep.subr.mxu0 0.0
    %2654 = vmatpush1.msra.mxu0 0.0
    %2655 = vmatprep.subr.mxu0 0.0
    %2656 = vmatpush1.msra.mxu0 0.0
    %2657 = vmatprep.subr.mxu0 0.0
    %2658 = vmatpush1.msra.mxu0 0.0
    %2659 = vmatprep.subr.mxu0 0.0
    %2660 = vmatpush1.msra.mxu0 0.0
    %2661 = vmatprep.subr.mxu0 0.0
    %2662 = vmatpush1.msra.mxu0 0.0
    %2663 = vmatprep.subr.mxu0 0.0
    %2664 = vmatpush1.msra.mxu0 0.0
    %2665 = vmatprep.subr.mxu0 0.0
    %2666 = vmatpush1.msra.mxu0 0.0
    %2667 = vmatprep.subr.mxu0 0.0
    %2668 = vmatpush1.msra.mxu0 0.0
    %2669 = vmatprep.subr.mxu0 0.0
    %2670 = vmatpush1.msra.mxu0 0.0
    %2671 = vmatprep.subr.mxu0 0.0
    %2672 = vmatpush1.msra.mxu0 0.0
    %2673 = vmatprep.subr.mxu0 0.0
    %2674 = vmatpush1.msra.mxu0 0.0
    %2675 = vmatprep.subr.mxu0 0.0
    %2676 = vmatpush1.msra.mxu0 0.0
    %2677 = vmatprep.subr.mxu0 0.0
    %2678 = vmatpush1.msra.mxu0 0.0
    %2679 = vmatprep.subr.mxu0 0.0
    %2680 = vmatpush1.msra.mxu0 0.0
    %2681 = vmatprep.subr.mxu0 0.0
    %2682 = vmatpush1.msra.mxu0 0.0
    %2683 = vmatprep.subr.mxu0 0.0
    %2684 = vmatpush1.msra.mxu0 0.0
    %2685 = vmatprep.subr.mxu0 0.0
    %2686 = vmatpush1.msra.mxu0 0.0
    %2687 = vmatprep.subr.mxu0 0.0
    %2688 = vmatpush1.msra.mxu0 0.0
    %2689 = vmatprep.subr.mxu0 0.0
    %2690 = vmatpush1.msra.mxu0 0.0
    %2691 = vmatprep.subr.mxu0 0.0
    %2692 = vmatpush1.msra.mxu0 0.0
    %2693 = vmatprep.subr.mxu0 0.0
    %2694 = vmatpush1.msra.mxu0 0.0
    %2695 = vmatprep.subr.mxu0 0.0
    %2696 = vmatpush1.msra.mxu0 0.0
    %2697 = vmatprep.subr.mxu0 0.0
    %2698 = vmatpush1.msra.mxu0 0.0
    %2699 = vmatprep.subr.mxu0 0.0
    %2700 = vmatpush1.msra.mxu0 0.0
    %2701 = vmatprep.subr.mxu0 0.0
    %2702 = vmatpush1.msra.mxu0 0.0
    %2703 = vmatprep.mubr.f32.mxu0 0.0
    %2704 = vmatmul.mubr.f32.gmra.mrb[0].mxu0 %v2637
    %v2705 = vpop.f32.mrb[0].mxu0
    %v2706 = vadd.f32 0.0, %v2705
    %v2707 = vpop.f32.mrb[0].mxu0
    %2708 = vdwg.mxu0
    %v2710 = vrot.slane %v2706, 2
    %2711 = vrot.lane.b32.xlu0 %v2710, 32
    %v2712 = vpop.permute.xlu0 %2711
    %v2714 = vsel %vm178, %v2706, %v2712
    %v2715 = vld [vmem:[%s6] sm:$0xff]
    %v2716 = vld [vmem:[%s6 + $0x8] sm:$0xff]
    %v2717 = vld [vmem:[%s6 + $0x10] sm:$0xff]
    %v2718 = vld [vmem:[%s6 + $0x18] sm:$0xff]
    %v2719 = vld [vmem:[%s6 + $0x20] sm:$0xff]
    %v2720 = vld [vmem:[%s6 + $0x28] sm:$0xff]
    %v2721 = vld [vmem:[%s6 + $0x30] sm:$0xff]
    %v2722 = vld [vmem:[%s6 + $0x38] sm:$0xff]
    %v2723 = vld [vmem:[%s6 + $0x40] sm:$0x1]
    %v2724 = vlaneseq
    %v2725 = vshrl.u32 %v2724, 7
    %v2726 = vsub.s32 0, %v2725
    %v2727 = vrot.slane %v2723, %v2726
    %v2729 = vsel %vm1273, %v2714, 0
    %2731 = vmatprep.subr.mxu0 0.0
    %2732 = vmatpush1.msra.mxu0 %v2715
    %2733 = vmatprep.subr.mxu0 0.0
    %2734 = vmatpush1.msra.mxu0 %v2716
    %2735 = vmatprep.subr.mxu0 0.0
    %2736 = vmatpush1.msra.mxu0 %v2717
    %2737 = vmatprep.subr.mxu0 0.0
    %2738 = vmatpush1.msra.mxu0 %v2718
    %2739 = vmatprep.subr.mxu0 0.0
    %2740 = vmatpush1.msra.mxu0 %v2719
    %2741 = vmatprep.subr.mxu0 0.0
    %2742 = vmatpush1.msra.mxu0 %v2720
    %2743 = vmatprep.subr.mxu0 0.0
    %2744 = vmatpush1.msra.mxu0 %v2721
    %2745 = vmatprep.subr.mxu0 0.0
    %2746 = vmatpush1.msra.mxu0 %v2722
    %2747 = vmatprep.subr.mxu0 0.0
    %2748 = vmatpush1.msra.mxu0 0.0
    %2749 = vmatprep.subr.mxu0 0.0
    %2750 = vmatpush1.msra.mxu0 0.0
    %2751 = vmatprep.subr.mxu0 0.0
    %2752 = vmatpush1.msra.mxu0 0.0
    %2753 = vmatprep.subr.mxu0 0.0
    %2754 = vmatpush1.msra.mxu0 0.0
    %2755 = vmatprep.subr.mxu0 0.0
    %2756 = vmatpush1.msra.mxu0 0.0
    %2757 = vmatprep.subr.mxu0 0.0
    %2758 = vmatpush1.msra.mxu0 0.0
    %2759 = vmatprep.subr.mxu0 0.0
    %2760 = vmatpush1.msra.mxu0 0.0
    %2761 = vmatprep.subr.mxu0 0.0
    %2762 = vmatpush1.msra.mxu0 0.0
    %2763 = vmatprep.subr.mxu0 0.0
    %2764 = vmatpush1.msra.mxu0 0.0
    %2765 = vmatprep.subr.mxu0 0.0
    %2766 = vmatpush1.msra.mxu0 0.0
    %2767 = vmatprep.subr.mxu0 0.0
    %2768 = vmatpush1.msra.mxu0 0.0
    %2769 = vmatprep.subr.mxu0 0.0
    %2770 = vmatpush1.msra.mxu0 0.0
    %2771 = vmatprep.subr.mxu0 0.0
    %2772 = vmatpush1.msra.mxu0 0.0
    %2773 = vmatprep.subr.mxu0 0.0
    %2774 = vmatpush1.msra.mxu0 0.0
    %2775 = vmatprep.subr.mxu0 0.0
    %2776 = vmatpush1.msra.mxu0 0.0
    %2777 = vmatprep.subr.mxu0 0.0
    %2778 = vmatpush1.msra.mxu0 0.0
    %2779 = vmatprep.subr.mxu0 0.0
    %2780 = vmatpush1.msra.mxu0 0.0
    %2781 = vmatprep.subr.mxu0 0.0
    %2782 = vmatpush1.msra.mxu0 0.0
    %2783 = vmatprep.subr.mxu0 0.0
    %2784 = vmatpush1.msra.mxu0 0.0
    %2785 = vmatprep.subr.mxu0 0.0
    %2786 = vmatpush1.msra.mxu0 0.0
    %2787 = vmatprep.subr.mxu0 0.0
    %2788 = vmatpush1.msra.mxu0 0.0
    %2789 = vmatprep.subr.mxu0 0.0
    %2790 = vmatpush1.msra.mxu0 0.0
    %2791 = vmatprep.subr.mxu0 0.0
    %2792 = vmatpush1.msra.mxu0 0.0
    %2793 = vmatprep.subr.mxu0 0.0
    %2794 = vmatpush1.msra.mxu0 0.0
    %2795 = vmatprep.mubr.f32.mxu0 0.0
    %2796 = vmatmul.mubr.f32.gmra.mrb[0].mxu0 %v2729
    %v2797 = vpop.f32.mrb[0].mxu0
    %v2798 = vadd.f32 %v2727, %v2797
    %v2799 = vpop.f32.mrb[0].mxu0
    %2800 = vdwg.mxu0
    %vm2801 = vcmask 17408
    %2802 = vst.msk [vmem:[#allocation2] sm:$0x3] %vm2801, %v2798
    // Predicated region
    $region30: #{bert_corefl_forward.1} parent=1 // pred_check
      _
    $region31: #{bert_corefl_forward.1} parent=1 // pred_check_branch
      %2804 = sbr.rel (0) target = $region33
    $region32: #{bert_corefl_forward.1} parent=1 // pred_region
      %s2806 = ssub.s32 32, 32
      %2807 = vsyncadd [#allocation3], %s2806
      %s2809 = sshll.u32 [#allocation2], 4
      %s2810 = int_to_ptr.vmem [resolvable:$true] %s2809
      %2812 = dma.vmem_to_hbm [thread:$0]  %s2810, 32, %s7, [#allocation3]
    $region33: #{bert_corefl_forward.1} parent=1 // pred_fallthru
      _
    // Predicated region
    $region34: #{bert_corefl_forward.1} parent=1 // pred_check
      _
    $region35: #{bert_corefl_forward.1} parent=1 // pred_check_branch
      %2814 = sbr.rel (0) target = $region37
    $region36: #{bert_corefl_forward.1} parent=1 // pred_region
      %2815 = dma.done [#allocation3], 32
    $region37: #{bert_corefl_forward.1} parent=1 // pred_fallthru
      _
    %2816 = vsyncpa [#allocation3], 1

</llo_original>
